<compile_context>
chip_gen: v6e
topology: v6e:2x2x1
jax: 0.10.0
libtpu: 0.0.40
codegen_flags: <defaults>
</compile_context>

<pallas_src>
import math
import functools

import jax
import jax.numpy as jnp
from jax.experimental import pallas as pl
from jax.experimental.pallas import tpu as pltpu


# ---------------------------------------------------------------------------
# Fused forward kernel (contour projection + all ResidualAttentionBlocks)
# ---------------------------------------------------------------------------

def _fused_forward_kernel(xf_ref, pts_ref, wc_ref, bc_ref, bias_ref, prior_ref,
                          ln1g_ref, ln1b_ref, wqkv_ref, bqkv_ref, wpr_ref, bpr_ref,
                          ln2g_ref, ln2b_ref, wfc_ref, bfc_ref, wfp_ref, bfp_ref,
                          o_ref, *, num_layers, n_heads, attn_ch, hidden):
    eps = 1e-5
    H, C, D = n_heads, attn_ch, hidden

    # ---- stand-in contour encoder folded into the fused kernel -------------
    # TODO(synk): TransformerEncoder (obj_contour_embedding) source is not
    # provided; replaced by a deterministic linear-projection stand-in.
    x = (xf_ref[...]
         + jnp.dot(pts_ref[...], wc_ref[...], preferred_element_type=jnp.float32)
         + bc_ref[...])                                            # (N, D) fp32, N = B*T

    bias = bias_ref[...]           # (N, N) additive: key-padding + cross-batch (-1e30 / 0)

    for l in range(num_layers):
        # ---- LayerNorm 1 (fp32, matches LayerNorm.forward(x.float())) ------
        mu = jnp.mean(x, axis=-1, keepdims=True)
        xc = x - mu
        var = jnp.mean(xc * xc, axis=-1, keepdims=True)
        h1 = xc * jax.lax.rsqrt(var + eps) * ln1g_ref[l] + ln1b_ref[l]

        # ---- fused QKV projection, bf16 MXU, fp32 accumulation --------------
        # Column layout [Q_all | K_all | V_all] (head-major); qk scale folded
        # into the Q columns at init.
        qkv = (jnp.dot(h1.astype(jnp.bfloat16), wqkv_ref[l],
                       preferred_element_type=jnp.float32) + bqkv_ref[l])   # (N, 3D)

        # ---- multi-head attention, batched over batch via cross-batch mask --
        head_outs = []
        for hh in range(H):
            q = qkv[:, hh * C:(hh + 1) * C]                 # (N, C), scale pre-folded
            k = qkv[:, D + hh * C:D + (hh + 1) * C]
            v = qkv[:, 2 * D + hh * C:2 * D + (hh + 1) * C]

            s = jax.lax.dot_general(q.astype(jnp.bfloat16), k.astype(jnp.bfloat16),
                                    (((1,), (1,)), ((), ())),
                                    preferred_element_type=jnp.float32)    # (N, N)
            # additive bias masks both padded keys and cross-batch keys
            # TODO(synk): fully-masked query rows get uniform attention over
            # their own batch block here; PyTorch MHA with -inf mask gives NaN.
            s = s + bias
            w = jnp.exp(s - jnp.max(s, axis=-1, keepdims=True))
            # first softmax normalization elided: it cancels with the
            # renormalization after the prior multiply.
            # prior_ref[hh] is block-diagonal over batches (zeros off-block),
            # with the torch repeat/reshape scramble already applied.
            # TODO(synk): original casts `w` to float16 here; kept fp32 on TPU.
            w = w * prior_ref[hh]
            w = w * pl.reciprocal(jnp.sum(w, axis=-1, keepdims=True), approx=False)
            head_outs.append(
                jnp.dot(w.astype(jnp.bfloat16), v.astype(jnp.bfloat16),
                        preferred_element_type=jnp.float32))               # (N, C)

        attn_heads = jnp.concatenate(head_outs, axis=-1)                   # (N, D)

        attn = (jnp.dot(attn_heads.astype(jnp.bfloat16), wpr_ref[l],
                        preferred_element_type=jnp.float32) + bpr_ref[l])
        x = x + attn

        # ---- LayerNorm 2 + MLP (fp32 like the reference nn.Linear modules) --
        mu2 = jnp.mean(x, axis=-1, keepdims=True)
        xc2 = x - mu2
        var2 = jnp.mean(xc2 * xc2, axis=-1, keepdims=True)
        h2 = xc2 * jax.lax.rsqrt(var2 + eps) * ln2g_ref[l] + ln2b_ref[l]

        f = jnp.dot(h2, wfc_ref[l], preferred_element_type=jnp.float32) + bfc_ref[l]
        # TODO(synk): nn.GELU() default is exact-erf; using tanh approximation here.
        f = 0.5 * f * (1.0 + jnp.tanh(0.7978845608028654 * (f + 0.044715 * f * f * f)))
        f = jnp.dot(f, wfp_ref[l], preferred_element_type=jnp.float32) + bfp_ref[l]
        x = x + f

    o_ref[...] = x


def _full_spec(shape):
    nd = len(shape)
    return pl.BlockSpec(shape, lambda i, _nd=nd: (0,) * _nd)


# ---------------------------------------------------------------------------
# Plain-JAX glue (attention prior from bbox distance + cosine similarity)
# ---------------------------------------------------------------------------

def compute_attention_prior(class_emb, is_valid_obj, obj_bbox):
    """Vectorized reproduction of the python double loop in the PyTorch forward."""
    o = 2.414213562373095
    B, N10, _ = class_emb.shape
    num_obj = jnp.sum((is_valid_obj == 1).astype(jnp.int32), axis=1)        # (B,)

    cx = obj_bbox[..., 0] + 0.5 * obj_bbox[..., 2]                          # (B,10)
    cy = obj_bbox[..., 1] + 0.5 * obj_bbox[..., 3]
    dx = cx[:, :, None] - cx[:, None, :]
    dy = cy[:, :, None] - cy[:, None, :]
    dis = jnp.sqrt(dx * dx + dy * dy)                                       # (B,10,10)

    nrm = jnp.maximum(jnp.linalg.norm(class_emb, axis=-1), 1e-8)            # (B,10)
    dots = jnp.einsum('bmd,bnd->bmn', class_emb, class_emb)
    sim = dots / (nrm[:, :, None] * nrm[:, None, :]) / 2.0 + 0.5            # (B,10,10)

    idx = jnp.arange(N10)
    m = idx[None, :, None]
    n = idx[None, None, :]
    no = num_obj[:, None, None]
    valid = (m >= 1) & (m < no) & (n >= 1) & (n < no) & (m != n)
    aw = jnp.where(valid, (o - dis) / 2.0 + sim / 2.0, 0.0)
    return aw.astype(jnp.float32)


# ---------------------------------------------------------------------------
# Module
# ---------------------------------------------------------------------------

class SingDiffusionEncoderPallas:
    CONTOUR_POINT_NUM = 97
    NUM_CLASSES = 185
    PARAM_ORDER = ("ln1g", "ln1b", "wqkv", "bqkv", "wpr", "bpr",
                   "ln2g", "ln2b", "wfc", "bfc", "wfp", "bfp")

    def __init__(self, contour_length=10, num_layers=2, num_heads=4,
                 hidden_dim=32, use_positional_embedding=True, seed=0):
        assert hidden_dim % num_heads == 0
        self.T = contour_length            # n_ctx; the module hardcodes 10 in forward
        self.D = hidden_dim
        self.H = num_heads
        self.C = hidden_dim // num_heads
        self.num_layers = num_layers
        self.use_positional_embedding = use_positional_embedding

        key = jax.random.PRNGKey(seed)

        def nrm(k, shape, s=0.02):
            return (s * jax.random.normal(k, shape)).astype(jnp.float32)

        key, k1, k2, k3 = jax.random.split(key, 4)
        self.pos_emb = nrm(k1, (self.T, self.D), 0.01)
        self.class_embedding = nrm(k2, (self.NUM_CLASSES, self.D))
        # TODO(synk): TransformerEncoder (obj_contour_embedding) source is not
        # provided; replaced by a deterministic linear-projection stand-in.
        self.w_contour = nrm(k3, (self.CONTOUR_POINT_NUM * 2, self.D))
        self.b_contour = jnp.zeros((1, self.D), jnp.float32)

        D = self.D
        # overall q.k scale: (1/sqrt(sqrt(C)))**2 — folded into Q columns/bias
        qk_scale = 1.0 / math.sqrt(self.C)

        per_layer = []
        for _ in range(num_layers):
            key, kq, kp, kf1, kf2 = jax.random.split(key, 5)
            # wqkv columns laid out [Q_all | K_all | V_all], head-major inside
            # each D-wide block.  (Loading torch weights would require the
            # column permutation torch[h*3C + {0..3C-1}] -> ours Q/K/V blocks.)
            wqkv = nrm(kq, (D, 3 * D))
            wqkv = wqkv.at[:, :D].multiply(qk_scale)
            bqkv = jnp.zeros((1, 3 * D), jnp.float32)
            bqkv = bqkv.at[:, :D].multiply(qk_scale)
            per_layer.append({
                "ln1g": jnp.ones((1, D), jnp.float32),
                "ln1b": jnp.zeros((1, D), jnp.float32),
                "wqkv": wqkv.astype(jnp.bfloat16),           # fp16 module in reference
                "bqkv": bqkv,
                "wpr":  nrm(kp, (D, D)).astype(jnp.bfloat16),
                "bpr":  jnp.zeros((1, D), jnp.float32),
                "ln2g": jnp.ones((1, D), jnp.float32),
                "ln2b": jnp.zeros((1, D), jnp.float32),
                "wfc":  nrm(kf1, (D, 4 * D)),                # fp32 nn.Linear in reference
                "bfc":  jnp.zeros((1, 4 * D), jnp.float32),
                "wfp":  nrm(kf2, (4 * D, D)),
                "bfp":  jnp.zeros((1, D), jnp.float32),
            })
        # stack per-layer weights to (L, ...) so the single fused kernel can
        # loop over layers with static indices
        self.params = {k: jnp.stack([lyr[k] for lyr in per_layer])
                       for k in self.PARAM_ORDER}

    def __call__(self, obj_description, obj_contour, is_valid_obj, obj_bbox):
        B = obj_contour.shape[0]
        T, D, H = self.T, self.D, self.H
        N = B * T

        cls_ids = obj_description.astype(jnp.int32)                   # (B, 10)
        cls_emb = jnp.take(self.class_embedding, cls_ids, axis=0)     # (B, 10, D)

        # attention prior; pre-fold as 1 + 0.2*a and pre-apply the torch
        # repeat(H,1,1).reshape(B,H,10,10) scramble: layer-independent, so it is
        # built once here and scattered into a block-diagonal (H, N, N) tensor.
        aw = compute_attention_prior(cls_emb, is_valid_obj, obj_bbox)       # (B,10,10)
        prior = (1.0 + 0.2 * aw).astype(jnp.float32)                        # (B, T, T)
        src = (jnp.arange(B)[:, None] * H + jnp.arange(H)[None, :]) % B     # (B, H)
        prior_bh = prior[src]                                               # (B, H, T, T)
        prior_h = jnp.zeros((H, N, N), jnp.float32)
        for b in range(B):
            prior_h = prior_h.at[:, b * T:(b + 1) * T, b * T:(b + 1) * T].set(prior_bh[b])

        # combined additive bias: padded keys AND cross-batch keys -> -1e30
        batch_idx = jnp.repeat(jnp.arange(B), T)                             # (N,)
        key_valid = (is_valid_obj != 0).reshape(N)                           # (N,)
        allowed = (batch_idx[:, None] == batch_idx[None, :]) & key_valid[None, :]
        bias_full = jnp.where(allowed, 0.0, -1e30).astype(jnp.float32)       # (N, N)

        base = cls_emb
        if self.use_positional_embedding:
            base = base + self.pos_emb[None]
        # the stand-in contour encoder adds the class embedding again
        xf_base = (base + cls_emb).reshape(N, D).astype(jnp.float32)

        pts = obj_contour.reshape(N, self.CONTOUR_POINT_NUM * 2).astype(jnp.float32)

        param_arrays = [self.params[k] for k in self.PARAM_ORDER]
        inputs = [xf_base, pts, self.w_contour, self.b_contour,
                  bias_full, prior_h] + param_arrays

        kernel = functools.partial(
            _fused_forward_kernel,
            num_layers=self.num_layers, n_heads=H, attn_ch=self.C, hidden=D)

        # grid=(1,): single TC, whole activation slab resident per step.
        # TODO(synk): on v7x (2 TensorCores) a batch-parallel grid axis would
        # roughly halve wall time; kept single-step for v5e/v6e simplicity.
        out = pl.pallas_call(
            kernel,
            grid=(1,),
            in_specs=[_full_spec(a.shape) for a in inputs],
            out_specs=_full_spec((N, D)),
            out_shape=jax.ShapeDtypeStruct((N, D), jnp.float32),
            compiler_params=pltpu.CompilerParams(
                dimension_semantics=("arbitrary",)),
        )(*inputs)

        return out.reshape(B, T, D).astype(jnp.float32)


# ---------------------------------------------------------------------------
# main
# ---------------------------------------------------------------------------

if __name__ == "__main__":
    B, T, D, H, L = 2, 10, 32, 4, 2
    enc = SingDiffusionEncoderPallas(contour_length=T, num_layers=L,
                                     num_heads=H, hidden_dim=D)

    key = jax.random.PRNGKey(0)
    kd, kc, kb = jax.random.split(key, 3)
    obj_description = jax.random.randint(kd, (B, T), 0, 185)
    obj_contour = jax.random.uniform(kc, (B, T, 97, 2), dtype=jnp.float32)
    is_valid_obj = jnp.array([[1, 1, 1, 1, 0, 0, 0, 0, 0, 0],
                              [1, 1, 1, 1, 1, 1, 0, 0, 0, 0]], dtype=jnp.float32)
    obj_bbox = jax.random.uniform(kb, (B, T, 4), dtype=jnp.float32) * 0.5

    out = enc(obj_description, obj_contour, is_valid_obj, obj_bbox)
    out = jax.block_until_ready(out)

    assert out.shape == (B, T, D), out.shape
    assert out.dtype == jnp.float32
    assert bool(jnp.all(jnp.isfinite(out)))
    print("KERNEL_OK")
</pallas_src>

<mosaic_0001>
module attributes {stable_mosaic.version = 11 : i64} {
  func.func @_fused_forward_kernel(%arg0: i32, %arg1: memref<20x32xf32, #tpu.memory_space<vmem>>, %arg2: memref<20x194xf32, #tpu.memory_space<vmem>>, %arg3: memref<194x32xf32, #tpu.memory_space<vmem>>, %arg4: memref<1x32xf32, #tpu.memory_space<vmem>>, %arg5: memref<20x20xf32, #tpu.memory_space<vmem>>, %arg6: memref<4x20x20xf32, #tpu.memory_space<vmem>>, %arg7: memref<2x1x32xf32, #tpu.memory_space<vmem>>, %arg8: memref<2x1x32xf32, #tpu.memory_space<vmem>>, %arg9: memref<2x32x96xbf16, #tpu.memory_space<vmem>>, %arg10: memref<2x1x96xf32, #tpu.memory_space<vmem>>, %arg11: memref<2x32x32xbf16, #tpu.memory_space<vmem>>, %arg12: memref<2x1x32xf32, #tpu.memory_space<vmem>>, %arg13: memref<2x1x32xf32, #tpu.memory_space<vmem>>, %arg14: memref<2x1x32xf32, #tpu.memory_space<vmem>>, %arg15: memref<2x32x128xf32, #tpu.memory_space<vmem>>, %arg16: memref<2x1x128xf32, #tpu.memory_space<vmem>>, %arg17: memref<2x128x32xf32, #tpu.memory_space<vmem>>, %arg18: memref<2x1x32xf32, #tpu.memory_space<vmem>>, %arg19: memref<20x32xf32, #tpu.memory_space<vmem>>) attributes {dimension_semantics = [#tpu.dimension_semantics<arbitrary>], iteration_bounds = array<i64: 1>, scalar_prefetch = 0 : i64, scratch_operands = 0 : i64, tpu.core_type = #tpu.core_type<tc>, window_params = [{pipeline_mode = #tpu.pipeline_mode<synchronous>, transform_indices = @transform_0, window_bounds = array<i64: 20, 32>}, {pipeline_mode = #tpu.pipeline_mode<synchronous>, transform_indices = @transform_1, window_bounds = array<i64: 20, 194>}, {pipeline_mode = #tpu.pipeline_mode<synchronous>, transform_indices = @transform_2, window_bounds = array<i64: 194, 32>}, {pipeline_mode = #tpu.pipeline_mode<synchronous>, transform_indices = @transform_3, window_bounds = array<i64: 1, 32>}, {pipeline_mode = #tpu.pipeline_mode<synchronous>, transform_indices = @transform_4, window_bounds = array<i64: 20, 20>}, {pipeline_mode = #tpu.pipeline_mode<synchronous>, transform_indices = @transform_5, window_bounds = array<i64: 4, 20, 20>}, {pipeline_mode = #tpu.pipeline_mode<synchronous>, transform_indices = @transform_6, window_bounds = array<i64: 2, 1, 32>}, {pipeline_mode = #tpu.pipeline_mode<synchronous>, transform_indices = @transform_7, window_bounds = array<i64: 2, 1, 32>}, {pipeline_mode = #tpu.pipeline_mode<synchronous>, transform_indices = @transform_8, window_bounds = array<i64: 2, 32, 96>}, {pipeline_mode = #tpu.pipeline_mode<synchronous>, transform_indices = @transform_9, window_bounds = array<i64: 2, 1, 96>}, {pipeline_mode = #tpu.pipeline_mode<synchronous>, transform_indices = @transform_10, window_bounds = array<i64: 2, 32, 32>}, {pipeline_mode = #tpu.pipeline_mode<synchronous>, transform_indices = @transform_11, window_bounds = array<i64: 2, 1, 32>}, {pipeline_mode = #tpu.pipeline_mode<synchronous>, transform_indices = @transform_12, window_bounds = array<i64: 2, 1, 32>}, {pipeline_mode = #tpu.pipeline_mode<synchronous>, transform_indices = @transform_13, window_bounds = array<i64: 2, 1, 32>}, {pipeline_mode = #tpu.pipeline_mode<synchronous>, transform_indices = @transform_14, window_bounds = array<i64: 2, 32, 128>}, {pipeline_mode = #tpu.pipeline_mode<synchronous>, transform_indices = @transform_15, window_bounds = array<i64: 2, 1, 128>}, {pipeline_mode = #tpu.pipeline_mode<synchronous>, transform_indices = @transform_16, window_bounds = array<i64: 2, 128, 32>}, {pipeline_mode = #tpu.pipeline_mode<synchronous>, transform_indices = @transform_17, window_bounds = array<i64: 2, 1, 32>}, {pipeline_mode = #tpu.pipeline_mode<synchronous>, transform_indices = @transform_18, window_bounds = array<i64: 20, 32>}]} {
    %c0 = arith.constant 0 : index
    %c0_0 = arith.constant 0 : index
    %0 = vector.load %arg1[%c0, %c0_0] : memref<20x32xf32, #tpu.memory_space<vmem>>, vector<20x32xf32>
    %c0_1 = arith.constant 0 : index
    %c0_2 = arith.constant 0 : index
    %1 = vector.load %arg2[%c0_1, %c0_2] : memref<20x194xf32, #tpu.memory_space<vmem>>, vector<20x194xf32>
    %c0_3 = arith.constant 0 : index
    %c0_4 = arith.constant 0 : index
    %2 = vector.load %arg3[%c0_3, %c0_4] : memref<194x32xf32, #tpu.memory_space<vmem>>, vector<194x32xf32>
    %cst = arith.constant dense<0.000000e+00> : vector<20x32xf32>
    %3 = tpu.matmul %1, %2, %cst {dimension_numbers = #tpu.dot_dimension_numbers<[1], [0], [0], [1], [0, 0, 1, 1], [], []>} : vector<20x194xf32>, vector<194x32xf32>, vector<20x32xf32> -> vector<20x32xf32>
    %4 = arith.addf %0, %3 : vector<20x32xf32>
    %c0_5 = arith.constant 0 : index
    %c0_6 = arith.constant 0 : index
    %5 = vector.load %arg4[%c0_5, %c0_6] : memref<1x32xf32, #tpu.memory_space<vmem>>, vector<1x32xf32>
    %6 = vector.broadcast %5 : vector<1x32xf32> to vector<20x32xf32>
    %7 = arith.addf %4, %6 : vector<20x32xf32>
    %c0_7 = arith.constant 0 : index
    %c0_8 = arith.constant 0 : index
    %8 = vector.load %arg5[%c0_7, %c0_8] : memref<20x20xf32, #tpu.memory_space<vmem>>, vector<20x20xf32>
    %cst_9 = arith.constant dense<0.000000e+00> : vector<20xf32>
    %9 = vector.multi_reduction <add>, %7, %cst_9 [1] : vector<20x32xf32> to vector<20xf32>
    %10 = vector.shape_cast %9 : vector<20xf32> to vector<20x1xf32>
    %cst_10 = arith.constant 3.200000e+01 : f32
    %11 = vector.broadcast %cst_10 : f32 to vector<20x1xf32>
    %12 = arith.divf %10, %11 : vector<20x1xf32>
    %13 = vector.broadcast %12 : vector<20x1xf32> to vector<20x32xf32>
    %14 = arith.subf %7, %13 : vector<20x32xf32>
    %15 = arith.mulf %14, %14 : vector<20x32xf32>
    %cst_11 = arith.constant dense<0.000000e+00> : vector<20xf32>
    %16 = vector.multi_reduction <add>, %15, %cst_11 [1] : vector<20x32xf32> to vector<20xf32>
    %17 = vector.shape_cast %16 : vector<20xf32> to vector<20x1xf32>
    %cst_12 = arith.constant 3.200000e+01 : f32
    %18 = vector.broadcast %cst_12 : f32 to vector<20x1xf32>
    %19 = arith.divf %17, %18 : vector<20x1xf32>
    %cst_13 = arith.constant 9.99999974E-6 : f32
    %20 = vector.broadcast %cst_13 : f32 to vector<20x1xf32>
    %21 = arith.addf %19, %20 : vector<20x1xf32>
    %22 = math.rsqrt %21 : vector<20x1xf32>
    %23 = vector.broadcast %22 : vector<20x1xf32> to vector<20x32xf32>
    %24 = arith.mulf %14, %23 : vector<20x32xf32>
    %c0_14 = arith.constant 0 : index
    %c0_15 = arith.constant 0 : index
    %c0_16 = arith.constant 0 : index
    %25 = vector.load %arg7[%c0_14, %c0_15, %c0_16] : memref<2x1x32xf32, #tpu.memory_space<vmem>>, vector<1x1x32xf32>
    %26 = vector.shape_cast %25 : vector<1x1x32xf32> to vector<1x32xf32>
    %27 = vector.broadcast %26 : vector<1x32xf32> to vector<20x32xf32>
    %28 = arith.mulf %24, %27 : vector<20x32xf32>
    %c0_17 = arith.constant 0 : index
    %c0_18 = arith.constant 0 : index
    %c0_19 = arith.constant 0 : index
    %29 = vector.load %arg8[%c0_17, %c0_18, %c0_19] : memref<2x1x32xf32, #tpu.memory_space<vmem>>, vector<1x1x32xf32>
    %30 = vector.shape_cast %29 : vector<1x1x32xf32> to vector<1x32xf32>
    %31 = vector.broadcast %30 : vector<1x32xf32> to vector<20x32xf32>
    %32 = arith.addf %28, %31 : vector<20x32xf32>
    %33 = arith.truncf %32 : vector<20x32xf32> to vector<20x32xbf16>
    %c0_20 = arith.constant 0 : index
    %c0_21 = arith.constant 0 : index
    %c0_22 = arith.constant 0 : index
    %34 = vector.load %arg9[%c0_20, %c0_21, %c0_22] : memref<2x32x96xbf16, #tpu.memory_space<vmem>>, vector<1x32x96xbf16>
    %35 = vector.shape_cast %34 : vector<1x32x96xbf16> to vector<32x96xbf16>
    %cst_23 = arith.constant dense<0.000000e+00> : vector<20x96xf32>
    %36 = tpu.matmul %33, %35, %cst_23 {dimension_numbers = #tpu.dot_dimension_numbers<[1], [0], [0], [1], [0, 0, 1, 1], [], []>} : vector<20x32xbf16>, vector<32x96xbf16>, vector<20x96xf32> -> vector<20x96xf32>
    %c0_24 = arith.constant 0 : index
    %c0_25 = arith.constant 0 : index
    %c0_26 = arith.constant 0 : index
    %37 = vector.load %arg10[%c0_24, %c0_25, %c0_26] : memref<2x1x96xf32, #tpu.memory_space<vmem>>, vector<1x1x96xf32>
    %38 = vector.shape_cast %37 : vector<1x1x96xf32> to vector<1x96xf32>
    %39 = vector.broadcast %38 : vector<1x96xf32> to vector<20x96xf32>
    %40 = arith.addf %36, %39 : vector<20x96xf32>
    %41 = vector.extract_strided_slice %40 {offsets = [0, 0], sizes = [20, 8], strides = [1, 1]} : vector<20x96xf32> to vector<20x8xf32>
    %42 = vector.extract_strided_slice %40 {offsets = [0, 32], sizes = [20, 8], strides = [1, 1]} : vector<20x96xf32> to vector<20x8xf32>
    %43 = vector.extract_strided_slice %40 {offsets = [0, 64], sizes = [20, 8], strides = [1, 1]} : vector<20x96xf32> to vector<20x8xf32>
    %44 = arith.truncf %41 : vector<20x8xf32> to vector<20x8xbf16>
    %45 = arith.truncf %42 : vector<20x8xf32> to vector<20x8xbf16>
    %cst_27 = arith.constant dense<0.000000e+00> : vector<20x20xf32>
    %46 = tpu.matmul %44, %45, %cst_27 {dimension_numbers = #tpu.dot_dimension_numbers<[1], [1], [0], [0], [0, 0, 1, 0], [], []>} : vector<20x8xbf16>, vector<20x8xbf16>, vector<20x20xf32> -> vector<20x20xf32>
    %47 = arith.addf %46, %8 : vector<20x20xf32>
    %cst_28 = arith.constant dense<0xFF800000> : vector<20xf32>
    %48 = vector.multi_reduction <maximumf>, %47, %cst_28 [1] : vector<20x20xf32> to vector<20xf32>
    %49 = vector.shape_cast %48 : vector<20xf32> to vector<20x1xf32>
    %50 = vector.broadcast %49 : vector<20x1xf32> to vector<20x20xf32>
    %51 = arith.subf %47, %50 : vector<20x20xf32>
    %52 = math.exp %51 : vector<20x20xf32>
    %c0_29 = arith.constant 0 : index
    %c0_30 = arith.constant 0 : index
    %c0_31 = arith.constant 0 : index
    %53 = vector.load %arg6[%c0_29, %c0_30, %c0_31] : memref<4x20x20xf32, #tpu.memory_space<vmem>>, vector<1x20x20xf32>
    %54 = vector.shape_cast %53 : vector<1x20x20xf32> to vector<20x20xf32>
    %55 = arith.mulf %52, %54 : vector<20x20xf32>
    %cst_32 = arith.constant dense<0.000000e+00> : vector<20xf32>
    %56 = vector.multi_reduction <add>, %55, %cst_32 [1] : vector<20x20xf32> to vector<20xf32>
    %57 = vector.shape_cast %56 : vector<20xf32> to vector<20x1xf32>
    %58 = tpu.reciprocal %57 : vector<20x1xf32> -> vector<20x1xf32>
    %59 = vector.broadcast %58 : vector<20x1xf32> to vector<20x20xf32>
    %60 = arith.mulf %55, %59 : vector<20x20xf32>
    %61 = arith.truncf %60 : vector<20x20xf32> to vector<20x20xbf16>
    %62 = arith.truncf %43 : vector<20x8xf32> to vector<20x8xbf16>
    %cst_33 = arith.constant dense<0.000000e+00> : vector<20x8xf32>
    %63 = tpu.matmul %61, %62, %cst_33 {dimension_numbers = #tpu.dot_dimension_numbers<[1], [0], [0], [1], [0, 0, 1, 1], [], []>} : vector<20x20xbf16>, vector<20x8xbf16>, vector<20x8xf32> -> vector<20x8xf32>
    %64 = vector.extract_strided_slice %40 {offsets = [0, 8], sizes = [20, 8], strides = [1, 1]} : vector<20x96xf32> to vector<20x8xf32>
    %65 = vector.extract_strided_slice %40 {offsets = [0, 40], sizes = [20, 8], strides = [1, 1]} : vector<20x96xf32> to vector<20x8xf32>
    %66 = vector.extract_strided_slice %40 {offsets = [0, 72], sizes = [20, 8], strides = [1, 1]} : vector<20x96xf32> to vector<20x8xf32>
    %67 = arith.truncf %64 : vector<20x8xf32> to vector<20x8xbf16>
    %68 = arith.truncf %65 : vector<20x8xf32> to vector<20x8xbf16>
    %cst_34 = arith.constant dense<0.000000e+00> : vector<20x20xf32>
    %69 = tpu.matmul %67, %68, %cst_34 {dimension_numbers = #tpu.dot_dimension_numbers<[1], [1], [0], [0], [0, 0, 1, 0], [], []>} : vector<20x8xbf16>, vector<20x8xbf16>, vector<20x20xf32> -> vector<20x20xf32>
    %70 = arith.addf %69, %8 : vector<20x20xf32>
    %cst_35 = arith.constant dense<0xFF800000> : vector<20xf32>
    %71 = vector.multi_reduction <maximumf>, %70, %cst_35 [1] : vector<20x20xf32> to vector<20xf32>
    %72 = vector.shape_cast %71 : vector<20xf32> to vector<20x1xf32>
    %73 = vector.broadcast %72 : vector<20x1xf32> to vector<20x20xf32>
    %74 = arith.subf %70, %73 : vector<20x20xf32>
    %75 = math.exp %74 : vector<20x20xf32>
    %c1 = arith.constant 1 : index
    %c0_36 = arith.constant 0 : index
    %c0_37 = arith.constant 0 : index
    %76 = vector.load %arg6[%c1, %c0_36, %c0_37] : memref<4x20x20xf32, #tpu.memory_space<vmem>>, vector<1x20x20xf32>
    %77 = vector.shape_cast %76 : vector<1x20x20xf32> to vector<20x20xf32>
    %78 = arith.mulf %75, %77 : vector<20x20xf32>
    %cst_38 = arith.constant dense<0.000000e+00> : vector<20xf32>
    %79 = vector.multi_reduction <add>, %78, %cst_38 [1] : vector<20x20xf32> to vector<20xf32>
    %80 = vector.shape_cast %79 : vector<20xf32> to vector<20x1xf32>
    %81 = tpu.reciprocal %80 : vector<20x1xf32> -> vector<20x1xf32>
    %82 = vector.broadcast %81 : vector<20x1xf32> to vector<20x20xf32>
    %83 = arith.mulf %78, %82 : vector<20x20xf32>
    %84 = arith.truncf %83 : vector<20x20xf32> to vector<20x20xbf16>
    %85 = arith.truncf %66 : vector<20x8xf32> to vector<20x8xbf16>
    %cst_39 = arith.constant dense<0.000000e+00> : vector<20x8xf32>
    %86 = tpu.matmul %84, %85, %cst_39 {dimension_numbers = #tpu.dot_dimension_numbers<[1], [0], [0], [1], [0, 0, 1, 1], [], []>} : vector<20x20xbf16>, vector<20x8xbf16>, vector<20x8xf32> -> vector<20x8xf32>
    %87 = vector.extract_strided_slice %40 {offsets = [0, 16], sizes = [20, 8], strides = [1, 1]} : vector<20x96xf32> to vector<20x8xf32>
    %88 = vector.extract_strided_slice %40 {offsets = [0, 48], sizes = [20, 8], strides = [1, 1]} : vector<20x96xf32> to vector<20x8xf32>
    %89 = vector.extract_strided_slice %40 {offsets = [0, 80], sizes = [20, 8], strides = [1, 1]} : vector<20x96xf32> to vector<20x8xf32>
    %90 = arith.truncf %87 : vector<20x8xf32> to vector<20x8xbf16>
    %91 = arith.truncf %88 : vector<20x8xf32> to vector<20x8xbf16>
    %cst_40 = arith.constant dense<0.000000e+00> : vector<20x20xf32>
    %92 = tpu.matmul %90, %91, %cst_40 {dimension_numbers = #tpu.dot_dimension_numbers<[1], [1], [0], [0], [0, 0, 1, 0], [], []>} : vector<20x8xbf16>, vector<20x8xbf16>, vector<20x20xf32> -> vector<20x20xf32>
    %93 = arith.addf %92, %8 : vector<20x20xf32>
    %cst_41 = arith.constant dense<0xFF800000> : vector<20xf32>
    %94 = vector.multi_reduction <maximumf>, %93, %cst_41 [1] : vector<20x20xf32> to vector<20xf32>
    %95 = vector.shape_cast %94 : vector<20xf32> to vector<20x1xf32>
    %96 = vector.broadcast %95 : vector<20x1xf32> to vector<20x20xf32>
    %97 = arith.subf %93, %96 : vector<20x20xf32>
    %98 = math.exp %97 : vector<20x20xf32>
    %c2 = arith.constant 2 : index
    %c0_42 = arith.constant 0 : index
    %c0_43 = arith.constant 0 : index
    %99 = vector.load %arg6[%c2, %c0_42, %c0_43] : memref<4x20x20xf32, #tpu.memory_space<vmem>>, vector<1x20x20xf32>
    %100 = vector.shape_cast %99 : vector<1x20x20xf32> to vector<20x20xf32>
    %101 = arith.mulf %98, %100 : vector<20x20xf32>
    %cst_44 = arith.constant dense<0.000000e+00> : vector<20xf32>
    %102 = vector.multi_reduction <add>, %101, %cst_44 [1] : vector<20x20xf32> to vector<20xf32>
    %103 = vector.shape_cast %102 : vector<20xf32> to vector<20x1xf32>
    %104 = tpu.reciprocal %103 : vector<20x1xf32> -> vector<20x1xf32>
    %105 = vector.broadcast %104 : vector<20x1xf32> to vector<20x20xf32>
    %106 = arith.mulf %101, %105 : vector<20x20xf32>
    %107 = arith.truncf %106 : vector<20x20xf32> to vector<20x20xbf16>
    %108 = arith.truncf %89 : vector<20x8xf32> to vector<20x8xbf16>
    %cst_45 = arith.constant dense<0.000000e+00> : vector<20x8xf32>
    %109 = tpu.matmul %107, %108, %cst_45 {dimension_numbers = #tpu.dot_dimension_numbers<[1], [0], [0], [1], [0, 0, 1, 1], [], []>} : vector<20x20xbf16>, vector<20x8xbf16>, vector<20x8xf32> -> vector<20x8xf32>
    %110 = vector.extract_strided_slice %40 {offsets = [0, 24], sizes = [20, 8], strides = [1, 1]} : vector<20x96xf32> to vector<20x8xf32>
    %111 = vector.extract_strided_slice %40 {offsets = [0, 56], sizes = [20, 8], strides = [1, 1]} : vector<20x96xf32> to vector<20x8xf32>
    %112 = vector.extract_strided_slice %40 {offsets = [0, 88], sizes = [20, 8], strides = [1, 1]} : vector<20x96xf32> to vector<20x8xf32>
    %113 = arith.truncf %110 : vector<20x8xf32> to vector<20x8xbf16>
    %114 = arith.truncf %111 : vector<20x8xf32> to vector<20x8xbf16>
    %cst_46 = arith.constant dense<0.000000e+00> : vector<20x20xf32>
    %115 = tpu.matmul %113, %114, %cst_46 {dimension_numbers = #tpu.dot_dimension_numbers<[1], [1], [0], [0], [0, 0, 1, 0], [], []>} : vector<20x8xbf16>, vector<20x8xbf16>, vector<20x20xf32> -> vector<20x20xf32>
    %116 = arith.addf %115, %8 : vector<20x20xf32>
    %cst_47 = arith.constant dense<0xFF800000> : vector<20xf32>
    %117 = vector.multi_reduction <maximumf>, %116, %cst_47 [1] : vector<20x20xf32> to vector<20xf32>
    %118 = vector.shape_cast %117 : vector<20xf32> to vector<20x1xf32>
    %119 = vector.broadcast %118 : vector<20x1xf32> to vector<20x20xf32>
    %120 = arith.subf %116, %119 : vector<20x20xf32>
    %121 = math.exp %120 : vector<20x20xf32>
    %c3 = arith.constant 3 : index
    %c0_48 = arith.constant 0 : index
    %c0_49 = arith.constant 0 : index
    %122 = vector.load %arg6[%c3, %c0_48, %c0_49] : memref<4x20x20xf32, #tpu.memory_space<vmem>>, vector<1x20x20xf32>
    %123 = vector.shape_cast %122 : vector<1x20x20xf32> to vector<20x20xf32>
    %124 = arith.mulf %121, %123 : vector<20x20xf32>
    %cst_50 = arith.constant dense<0.000000e+00> : vector<20xf32>
    %125 = vector.multi_reduction <add>, %124, %cst_50 [1] : vector<20x20xf32> to vector<20xf32>
    %126 = vector.shape_cast %125 : vector<20xf32> to vector<20x1xf32>
    %127 = tpu.reciprocal %126 : vector<20x1xf32> -> vector<20x1xf32>
    %128 = vector.broadcast %127 : vector<20x1xf32> to vector<20x20xf32>
    %129 = arith.mulf %124, %128 : vector<20x20xf32>
    %130 = arith.truncf %129 : vector<20x20xf32> to vector<20x20xbf16>
    %131 = arith.truncf %112 : vector<20x8xf32> to vector<20x8xbf16>
    %cst_51 = arith.constant dense<0.000000e+00> : vector<20x8xf32>
    %132 = tpu.matmul %130, %131, %cst_51 {dimension_numbers = #tpu.dot_dimension_numbers<[1], [0], [0], [1], [0, 0, 1, 1], [], []>} : vector<20x20xbf16>, vector<20x8xbf16>, vector<20x8xf32> -> vector<20x8xf32>
    %133 = tpu.concatenate %63, %86, %109, %132 in 1 : vector<20x8xf32>, vector<20x8xf32>, vector<20x8xf32>, vector<20x8xf32> -> vector<20x32xf32>
    %134 = arith.truncf %133 : vector<20x32xf32> to vector<20x32xbf16>
    %c0_52 = arith.constant 0 : index
    %c0_53 = arith.constant 0 : index
    %c0_54 = arith.constant 0 : index
    %135 = vector.load %arg11[%c0_52, %c0_53, %c0_54] : memref<2x32x32xbf16, #tpu.memory_space<vmem>>, vector<1x32x32xbf16>
    %136 = vector.shape_cast %135 : vector<1x32x32xbf16> to vector<32x32xbf16>
    %cst_55 = arith.constant dense<0.000000e+00> : vector<20x32xf32>
    %137 = tpu.matmul %134, %136, %cst_55 {dimension_numbers = #tpu.dot_dimension_numbers<[1], [0], [0], [1], [0, 0, 1, 1], [], []>} : vector<20x32xbf16>, vector<32x32xbf16>, vector<20x32xf32> -> vector<20x32xf32>
    %c0_56 = arith.constant 0 : index
    %c0_57 = arith.constant 0 : index
    %c0_58 = arith.constant 0 : index
    %138 = vector.load %arg12[%c0_56, %c0_57, %c0_58] : memref<2x1x32xf32, #tpu.memory_space<vmem>>, vector<1x1x32xf32>
    %139 = vector.shape_cast %138 : vector<1x1x32xf32> to vector<1x32xf32>
    %140 = vector.broadcast %139 : vector<1x32xf32> to vector<20x32xf32>
    %141 = arith.addf %137, %140 : vector<20x32xf32>
    %142 = arith.addf %7, %141 : vector<20x32xf32>
    %cst_59 = arith.constant dense<0.000000e+00> : vector<20xf32>
    %143 = vector.multi_reduction <add>, %142, %cst_59 [1] : vector<20x32xf32> to vector<20xf32>
    %144 = vector.shape_cast %143 : vector<20xf32> to vector<20x1xf32>
    %cst_60 = arith.constant 3.200000e+01 : f32
    %145 = vector.broadcast %cst_60 : f32 to vector<20x1xf32>
    %146 = arith.divf %144, %145 : vector<20x1xf32>
    %147 = vector.broadcast %146 : vector<20x1xf32> to vector<20x32xf32>
    %148 = arith.subf %142, %147 : vector<20x32xf32>
    %149 = arith.mulf %148, %148 : vector<20x32xf32>
    %cst_61 = arith.constant dense<0.000000e+00> : vector<20xf32>
    %150 = vector.multi_reduction <add>, %149, %cst_61 [1] : vector<20x32xf32> to vector<20xf32>
    %151 = vector.shape_cast %150 : vector<20xf32> to vector<20x1xf32>
    %cst_62 = arith.constant 3.200000e+01 : f32
    %152 = vector.broadcast %cst_62 : f32 to vector<20x1xf32>
    %153 = arith.divf %151, %152 : vector<20x1xf32>
    %cst_63 = arith.constant 9.99999974E-6 : f32
    %154 = vector.broadcast %cst_63 : f32 to vector<20x1xf32>
    %155 = arith.addf %153, %154 : vector<20x1xf32>
    %156 = math.rsqrt %155 : vector<20x1xf32>
    %157 = vector.broadcast %156 : vector<20x1xf32> to vector<20x32xf32>
    %158 = arith.mulf %148, %157 : vector<20x32xf32>
    %c0_64 = arith.constant 0 : index
    %c0_65 = arith.constant 0 : index
    %c0_66 = arith.constant 0 : index
    %159 = vector.load %arg13[%c0_64, %c0_65, %c0_66] : memref<2x1x32xf32, #tpu.memory_space<vmem>>, vector<1x1x32xf32>
    %160 = vector.shape_cast %159 : vector<1x1x32xf32> to vector<1x32xf32>
    %161 = vector.broadcast %160 : vector<1x32xf32> to vector<20x32xf32>
    %162 = arith.mulf %158, %161 : vector<20x32xf32>
    %c0_67 = arith.constant 0 : index
    %c0_68 = arith.constant 0 : index
    %c0_69 = arith.constant 0 : index
    %163 = vector.load %arg14[%c0_67, %c0_68, %c0_69] : memref<2x1x32xf32, #tpu.memory_space<vmem>>, vector<1x1x32xf32>
    %164 = vector.shape_cast %163 : vector<1x1x32xf32> to vector<1x32xf32>
    %165 = vector.broadcast %164 : vector<1x32xf32> to vector<20x32xf32>
    %166 = arith.addf %162, %165 : vector<20x32xf32>
    %c0_70 = arith.constant 0 : index
    %c0_71 = arith.constant 0 : index
    %c0_72 = arith.constant 0 : index
    %167 = vector.load %arg15[%c0_70, %c0_71, %c0_72] : memref<2x32x128xf32, #tpu.memory_space<vmem>>, vector<1x32x128xf32>
    %168 = vector.shape_cast %167 : vector<1x32x128xf32> to vector<32x128xf32>
    %cst_73 = arith.constant dense<0.000000e+00> : vector<20x128xf32>
    %169 = tpu.matmul %166, %168, %cst_73 {dimension_numbers = #tpu.dot_dimension_numbers<[1], [0], [0], [1], [0, 0, 1, 1], [], []>} : vector<20x32xf32>, vector<32x128xf32>, vector<20x128xf32> -> vector<20x128xf32>
    %c0_74 = arith.constant 0 : index
    %c0_75 = arith.constant 0 : index
    %c0_76 = arith.constant 0 : index
    %170 = vector.load %arg16[%c0_74, %c0_75, %c0_76] : memref<2x1x128xf32, #tpu.memory_space<vmem>>, vector<1x1x128xf32>
    %171 = vector.shape_cast %170 : vector<1x1x128xf32> to vector<1x128xf32>
    %172 = vector.broadcast %171 : vector<1x128xf32> to vector<20x128xf32>
    %173 = arith.addf %169, %172 : vector<20x128xf32>
    %cst_77 = arith.constant 5.000000e-01 : f32
    %174 = vector.broadcast %cst_77 : f32 to vector<20x128xf32>
    %175 = arith.mulf %174, %173 : vector<20x128xf32>
    %cst_78 = arith.constant 4.471500e-02 : f32
    %176 = vector.broadcast %cst_78 : f32 to vector<20x128xf32>
    %177 = arith.mulf %176, %173 : vector<20x128xf32>
    %178 = arith.mulf %177, %173 : vector<20x128xf32>
    %179 = arith.mulf %178, %173 : vector<20x128xf32>
    %180 = arith.addf %173, %179 : vector<20x128xf32>
    %cst_79 = arith.constant 0.797884583 : f32
    %181 = vector.broadcast %cst_79 : f32 to vector<20x128xf32>
    %182 = arith.mulf %181, %180 : vector<20x128xf32>
    %183 = math.tanh %182 : vector<20x128xf32>
    %cst_80 = arith.constant 1.000000e+00 : f32
    %184 = vector.broadcast %cst_80 : f32 to vector<20x128xf32>
    %185 = arith.addf %184, %183 : vector<20x128xf32>
    %186 = arith.mulf %175, %185 : vector<20x128xf32>
    %c0_81 = arith.constant 0 : index
    %c0_82 = arith.constant 0 : index
    %c0_83 = arith.constant 0 : index
    %187 = vector.load %arg17[%c0_81, %c0_82, %c0_83] : memref<2x128x32xf32, #tpu.memory_space<vmem>>, vector<1x128x32xf32>
    %188 = vector.shape_cast %187 : vector<1x128x32xf32> to vector<128x32xf32>
    %cst_84 = arith.constant dense<0.000000e+00> : vector<20x32xf32>
    %189 = tpu.matmul %186, %188, %cst_84 {dimension_numbers = #tpu.dot_dimension_numbers<[1], [0], [0], [1], [0, 0, 1, 1], [], []>} : vector<20x128xf32>, vector<128x32xf32>, vector<20x32xf32> -> vector<20x32xf32>
    %c0_85 = arith.constant 0 : index
    %c0_86 = arith.constant 0 : index
    %c0_87 = arith.constant 0 : index
    %190 = vector.load %arg18[%c0_85, %c0_86, %c0_87] : memref<2x1x32xf32, #tpu.memory_space<vmem>>, vector<1x1x32xf32>
    %191 = vector.shape_cast %190 : vector<1x1x32xf32> to vector<1x32xf32>
    %192 = vector.broadcast %191 : vector<1x32xf32> to vector<20x32xf32>
    %193 = arith.addf %189, %192 : vector<20x32xf32>
    %194 = arith.addf %142, %193 : vector<20x32xf32>
    %cst_88 = arith.constant dense<0.000000e+00> : vector<20xf32>
    %195 = vector.multi_reduction <add>, %194, %cst_88 [1] : vector<20x32xf32> to vector<20xf32>
    %196 = vector.shape_cast %195 : vector<20xf32> to vector<20x1xf32>
    %cst_89 = arith.constant 3.200000e+01 : f32
    %197 = vector.broadcast %cst_89 : f32 to vector<20x1xf32>
    %198 = arith.divf %196, %197 : vector<20x1xf32>
    %199 = vector.broadcast %198 : vector<20x1xf32> to vector<20x32xf32>
    %200 = arith.subf %194, %199 : vector<20x32xf32>
    %201 = arith.mulf %200, %200 : vector<20x32xf32>
    %cst_90 = arith.constant dense<0.000000e+00> : vector<20xf32>
    %202 = vector.multi_reduction <add>, %201, %cst_90 [1] : vector<20x32xf32> to vector<20xf32>
    %203 = vector.shape_cast %202 : vector<20xf32> to vector<20x1xf32>
    %cst_91 = arith.constant 3.200000e+01 : f32
    %204 = vector.broadcast %cst_91 : f32 to vector<20x1xf32>
    %205 = arith.divf %203, %204 : vector<20x1xf32>
    %cst_92 = arith.constant 9.99999974E-6 : f32
    %206 = vector.broadcast %cst_92 : f32 to vector<20x1xf32>
    %207 = arith.addf %205, %206 : vector<20x1xf32>
    %208 = math.rsqrt %207 : vector<20x1xf32>
    %209 = vector.broadcast %208 : vector<20x1xf32> to vector<20x32xf32>
    %210 = arith.mulf %200, %209 : vector<20x32xf32>
    %c1_93 = arith.constant 1 : index
    %c0_94 = arith.constant 0 : index
    %c0_95 = arith.constant 0 : index
    %211 = vector.load %arg7[%c1_93, %c0_94, %c0_95] : memref<2x1x32xf32, #tpu.memory_space<vmem>>, vector<1x1x32xf32>
    %212 = vector.shape_cast %211 : vector<1x1x32xf32> to vector<1x32xf32>
    %213 = vector.broadcast %212 : vector<1x32xf32> to vector<20x32xf32>
    %214 = arith.mulf %210, %213 : vector<20x32xf32>
    %c1_96 = arith.constant 1 : index
    %c0_97 = arith.constant 0 : index
    %c0_98 = arith.constant 0 : index
    %215 = vector.load %arg8[%c1_96, %c0_97, %c0_98] : memref<2x1x32xf32, #tpu.memory_space<vmem>>, vector<1x1x32xf32>
    %216 = vector.shape_cast %215 : vector<1x1x32xf32> to vector<1x32xf32>
    %217 = vector.broadcast %216 : vector<1x32xf32> to vector<20x32xf32>
    %218 = arith.addf %214, %217 : vector<20x32xf32>
    %219 = arith.truncf %218 : vector<20x32xf32> to vector<20x32xbf16>
    %c1_99 = arith.constant 1 : index
    %c0_100 = arith.constant 0 : index
    %c0_101 = arith.constant 0 : index
    %220 = vector.load %arg9[%c1_99, %c0_100, %c0_101] : memref<2x32x96xbf16, #tpu.memory_space<vmem>>, vector<1x32x96xbf16>
    %221 = vector.shape_cast %220 : vector<1x32x96xbf16> to vector<32x96xbf16>
    %cst_102 = arith.constant dense<0.000000e+00> : vector<20x96xf32>
    %222 = tpu.matmul %219, %221, %cst_102 {dimension_numbers = #tpu.dot_dimension_numbers<[1], [0], [0], [1], [0, 0, 1, 1], [], []>} : vector<20x32xbf16>, vector<32x96xbf16>, vector<20x96xf32> -> vector<20x96xf32>
    %c1_103 = arith.constant 1 : index
    %c0_104 = arith.constant 0 : index
    %c0_105 = arith.constant 0 : index
    %223 = vector.load %arg10[%c1_103, %c0_104, %c0_105] : memref<2x1x96xf32, #tpu.memory_space<vmem>>, vector<1x1x96xf32>
    %224 = vector.shape_cast %223 : vector<1x1x96xf32> to vector<1x96xf32>
    %225 = vector.broadcast %224 : vector<1x96xf32> to vector<20x96xf32>
    %226 = arith.addf %222, %225 : vector<20x96xf32>
    %227 = vector.extract_strided_slice %226 {offsets = [0, 0], sizes = [20, 8], strides = [1, 1]} : vector<20x96xf32> to vector<20x8xf32>
    %228 = vector.extract_strided_slice %226 {offsets = [0, 32], sizes = [20, 8], strides = [1, 1]} : vector<20x96xf32> to vector<20x8xf32>
    %229 = vector.extract_strided_slice %226 {offsets = [0, 64], sizes = [20, 8], strides = [1, 1]} : vector<20x96xf32> to vector<20x8xf32>
    %230 = arith.truncf %227 : vector<20x8xf32> to vector<20x8xbf16>
    %231 = arith.truncf %228 : vector<20x8xf32> to vector<20x8xbf16>
    %cst_106 = arith.constant dense<0.000000e+00> : vector<20x20xf32>
    %232 = tpu.matmul %230, %231, %cst_106 {dimension_numbers = #tpu.dot_dimension_numbers<[1], [1], [0], [0], [0, 0, 1, 0], [], []>} : vector<20x8xbf16>, vector<20x8xbf16>, vector<20x20xf32> -> vector<20x20xf32>
    %233 = arith.addf %232, %8 : vector<20x20xf32>
    %cst_107 = arith.constant dense<0xFF800000> : vector<20xf32>
    %234 = vector.multi_reduction <maximumf>, %233, %cst_107 [1] : vector<20x20xf32> to vector<20xf32>
    %235 = vector.shape_cast %234 : vector<20xf32> to vector<20x1xf32>
    %236 = vector.broadcast %235 : vector<20x1xf32> to vector<20x20xf32>
    %237 = arith.subf %233, %236 : vector<20x20xf32>
    %238 = math.exp %237 : vector<20x20xf32>
    %c0_108 = arith.constant 0 : index
    %c0_109 = arith.constant 0 : index
    %c0_110 = arith.constant 0 : index
    %239 = vector.load %arg6[%c0_108, %c0_109, %c0_110] : memref<4x20x20xf32, #tpu.memory_space<vmem>>, vector<1x20x20xf32>
    %240 = vector.shape_cast %239 : vector<1x20x20xf32> to vector<20x20xf32>
    %241 = arith.mulf %238, %240 : vector<20x20xf32>
    %cst_111 = arith.constant dense<0.000000e+00> : vector<20xf32>
    %242 = vector.multi_reduction <add>, %241, %cst_111 [1] : vector<20x20xf32> to vector<20xf32>
    %243 = vector.shape_cast %242 : vector<20xf32> to vector<20x1xf32>
    %244 = tpu.reciprocal %243 : vector<20x1xf32> -> vector<20x1xf32>
    %245 = vector.broadcast %244 : vector<20x1xf32> to vector<20x20xf32>
    %246 = arith.mulf %241, %245 : vector<20x20xf32>
    %247 = arith.truncf %246 : vector<20x20xf32> to vector<20x20xbf16>
    %248 = arith.truncf %229 : vector<20x8xf32> to vector<20x8xbf16>
    %cst_112 = arith.constant dense<0.000000e+00> : vector<20x8xf32>
    %249 = tpu.matmul %247, %248, %cst_112 {dimension_numbers = #tpu.dot_dimension_numbers<[1], [0], [0], [1], [0, 0, 1, 1], [], []>} : vector<20x20xbf16>, vector<20x8xbf16>, vector<20x8xf32> -> vector<20x8xf32>
    %250 = vector.extract_strided_slice %226 {offsets = [0, 8], sizes = [20, 8], strides = [1, 1]} : vector<20x96xf32> to vector<20x8xf32>
    %251 = vector.extract_strided_slice %226 {offsets = [0, 40], sizes = [20, 8], strides = [1, 1]} : vector<20x96xf32> to vector<20x8xf32>
    %252 = vector.extract_strided_slice %226 {offsets = [0, 72], sizes = [20, 8], strides = [1, 1]} : vector<20x96xf32> to vector<20x8xf32>
    %253 = arith.truncf %250 : vector<20x8xf32> to vector<20x8xbf16>
    %254 = arith.truncf %251 : vector<20x8xf32> to vector<20x8xbf16>
    %cst_113 = arith.constant dense<0.000000e+00> : vector<20x20xf32>
    %255 = tpu.matmul %253, %254, %cst_113 {dimension_numbers = #tpu.dot_dimension_numbers<[1], [1], [0], [0], [0, 0, 1, 0], [], []>} : vector<20x8xbf16>, vector<20x8xbf16>, vector<20x20xf32> -> vector<20x20xf32>
    %256 = arith.addf %255, %8 : vector<20x20xf32>
    %cst_114 = arith.constant dense<0xFF800000> : vector<20xf32>
    %257 = vector.multi_reduction <maximumf>, %256, %cst_114 [1] : vector<20x20xf32> to vector<20xf32>
    %258 = vector.shape_cast %257 : vector<20xf32> to vector<20x1xf32>
    %259 = vector.broadcast %258 : vector<20x1xf32> to vector<20x20xf32>
    %260 = arith.subf %256, %259 : vector<20x20xf32>
    %261 = math.exp %260 : vector<20x20xf32>
    %c1_115 = arith.constant 1 : index
    %c0_116 = arith.constant 0 : index
    %c0_117 = arith.constant 0 : index
    %262 = vector.load %arg6[%c1_115, %c0_116, %c0_117] : memref<4x20x20xf32, #tpu.memory_space<vmem>>, vector<1x20x20xf32>
    %263 = vector.shape_cast %262 : vector<1x20x20xf32> to vector<20x20xf32>
    %264 = arith.mulf %261, %263 : vector<20x20xf32>
    %cst_118 = arith.constant dense<0.000000e+00> : vector<20xf32>
    %265 = vector.multi_reduction <add>, %264, %cst_118 [1] : vector<20x20xf32> to vector<20xf32>
    %266 = vector.shape_cast %265 : vector<20xf32> to vector<20x1xf32>
    %267 = tpu.reciprocal %266 : vector<20x1xf32> -> vector<20x1xf32>
    %268 = vector.broadcast %267 : vector<20x1xf32> to vector<20x20xf32>
    %269 = arith.mulf %264, %268 : vector<20x20xf32>
    %270 = arith.truncf %269 : vector<20x20xf32> to vector<20x20xbf16>
    %271 = arith.truncf %252 : vector<20x8xf32> to vector<20x8xbf16>
    %cst_119 = arith.constant dense<0.000000e+00> : vector<20x8xf32>
    %272 = tpu.matmul %270, %271, %cst_119 {dimension_numbers = #tpu.dot_dimension_numbers<[1], [0], [0], [1], [0, 0, 1, 1], [], []>} : vector<20x20xbf16>, vector<20x8xbf16>, vector<20x8xf32> -> vector<20x8xf32>
    %273 = vector.extract_strided_slice %226 {offsets = [0, 16], sizes = [20, 8], strides = [1, 1]} : vector<20x96xf32> to vector<20x8xf32>
    %274 = vector.extract_strided_slice %226 {offsets = [0, 48], sizes = [20, 8], strides = [1, 1]} : vector<20x96xf32> to vector<20x8xf32>
    %275 = vector.extract_strided_slice %226 {offsets = [0, 80], sizes = [20, 8], strides = [1, 1]} : vector<20x96xf32> to vector<20x8xf32>
    %276 = arith.truncf %273 : vector<20x8xf32> to vector<20x8xbf16>
    %277 = arith.truncf %274 : vector<20x8xf32> to vector<20x8xbf16>
    %cst_120 = arith.constant dense<0.000000e+00> : vector<20x20xf32>
    %278 = tpu.matmul %276, %277, %cst_120 {dimension_numbers = #tpu.dot_dimension_numbers<[1], [1], [0], [0], [0, 0, 1, 0], [], []>} : vector<20x8xbf16>, vector<20x8xbf16>, vector<20x20xf32> -> vector<20x20xf32>
    %279 = arith.addf %278, %8 : vector<20x20xf32>
    %cst_121 = arith.constant dense<0xFF800000> : vector<20xf32>
    %280 = vector.multi_reduction <maximumf>, %279, %cst_121 [1] : vector<20x20xf32> to vector<20xf32>
    %281 = vector.shape_cast %280 : vector<20xf32> to vector<20x1xf32>
    %282 = vector.broadcast %281 : vector<20x1xf32> to vector<20x20xf32>
    %283 = arith.subf %279, %282 : vector<20x20xf32>
    %284 = math.exp %283 : vector<20x20xf32>
    %c2_122 = arith.constant 2 : index
    %c0_123 = arith.constant 0 : index
    %c0_124 = arith.constant 0 : index
    %285 = vector.load %arg6[%c2_122, %c0_123, %c0_124] : memref<4x20x20xf32, #tpu.memory_space<vmem>>, vector<1x20x20xf32>
    %286 = vector.shape_cast %285 : vector<1x20x20xf32> to vector<20x20xf32>
    %287 = arith.mulf %284, %286 : vector<20x20xf32>
    %cst_125 = arith.constant dense<0.000000e+00> : vector<20xf32>
    %288 = vector.multi_reduction <add>, %287, %cst_125 [1] : vector<20x20xf32> to vector<20xf32>
    %289 = vector.shape_cast %288 : vector<20xf32> to vector<20x1xf32>
    %290 = tpu.reciprocal %289 : vector<20x1xf32> -> vector<20x1xf32>
    %291 = vector.broadcast %290 : vector<20x1xf32> to vector<20x20xf32>
    %292 = arith.mulf %287, %291 : vector<20x20xf32>
    %293 = arith.truncf %292 : vector<20x20xf32> to vector<20x20xbf16>
    %294 = arith.truncf %275 : vector<20x8xf32> to vector<20x8xbf16>
    %cst_126 = arith.constant dense<0.000000e+00> : vector<20x8xf32>
    %295 = tpu.matmul %293, %294, %cst_126 {dimension_numbers = #tpu.dot_dimension_numbers<[1], [0], [0], [1], [0, 0, 1, 1], [], []>} : vector<20x20xbf16>, vector<20x8xbf16>, vector<20x8xf32> -> vector<20x8xf32>
    %296 = vector.extract_strided_slice %226 {offsets = [0, 24], sizes = [20, 8], strides = [1, 1]} : vector<20x96xf32> to vector<20x8xf32>
    %297 = vector.extract_strided_slice %226 {offsets = [0, 56], sizes = [20, 8], strides = [1, 1]} : vector<20x96xf32> to vector<20x8xf32>
    %298 = vector.extract_strided_slice %226 {offsets = [0, 88], sizes = [20, 8], strides = [1, 1]} : vector<20x96xf32> to vector<20x8xf32>
    %299 = arith.truncf %296 : vector<20x8xf32> to vector<20x8xbf16>
    %300 = arith.truncf %297 : vector<20x8xf32> to vector<20x8xbf16>
    %cst_127 = arith.constant dense<0.000000e+00> : vector<20x20xf32>
    %301 = tpu.matmul %299, %300, %cst_127 {dimension_numbers = #tpu.dot_dimension_numbers<[1], [1], [0], [0], [0, 0, 1, 0], [], []>} : vector<20x8xbf16>, vector<20x8xbf16>, vector<20x20xf32> -> vector<20x20xf32>
    %302 = arith.addf %301, %8 : vector<20x20xf32>
    %cst_128 = arith.constant dense<0xFF800000> : vector<20xf32>
    %303 = vector.multi_reduction <maximumf>, %302, %cst_128 [1] : vector<20x20xf32> to vector<20xf32>
    %304 = vector.shape_cast %303 : vector<20xf32> to vector<20x1xf32>
    %305 = vector.broadcast %304 : vector<20x1xf32> to vector<20x20xf32>
    %306 = arith.subf %302, %305 : vector<20x20xf32>
    %307 = math.exp %306 : vector<20x20xf32>
    %c3_129 = arith.constant 3 : index
    %c0_130 = arith.constant 0 : index
    %c0_131 = arith.constant 0 : index
    %308 = vector.load %arg6[%c3_129, %c0_130, %c0_131] : memref<4x20x20xf32, #tpu.memory_space<vmem>>, vector<1x20x20xf32>
    %309 = vector.shape_cast %308 : vector<1x20x20xf32> to vector<20x20xf32>
    %310 = arith.mulf %307, %309 : vector<20x20xf32>
    %cst_132 = arith.constant dense<0.000000e+00> : vector<20xf32>
    %311 = vector.multi_reduction <add>, %310, %cst_132 [1] : vector<20x20xf32> to vector<20xf32>
    %312 = vector.shape_cast %311 : vector<20xf32> to vector<20x1xf32>
    %313 = tpu.reciprocal %312 : vector<20x1xf32> -> vector<20x1xf32>
    %314 = vector.broadcast %313 : vector<20x1xf32> to vector<20x20xf32>
    %315 = arith.mulf %310, %314 : vector<20x20xf32>
    %316 = arith.truncf %315 : vector<20x20xf32> to vector<20x20xbf16>
    %317 = arith.truncf %298 : vector<20x8xf32> to vector<20x8xbf16>
    %cst_133 = arith.constant dense<0.000000e+00> : vector<20x8xf32>
    %318 = tpu.matmul %316, %317, %cst_133 {dimension_numbers = #tpu.dot_dimension_numbers<[1], [0], [0], [1], [0, 0, 1, 1], [], []>} : vector<20x20xbf16>, vector<20x8xbf16>, vector<20x8xf32> -> vector<20x8xf32>
    %319 = tpu.concatenate %249, %272, %295, %318 in 1 : vector<20x8xf32>, vector<20x8xf32>, vector<20x8xf32>, vector<20x8xf32> -> vector<20x32xf32>
    %320 = arith.truncf %319 : vector<20x32xf32> to vector<20x32xbf16>
    %c1_134 = arith.constant 1 : index
    %c0_135 = arith.constant 0 : index
    %c0_136 = arith.constant 0 : index
    %321 = vector.load %arg11[%c1_134, %c0_135, %c0_136] : memref<2x32x32xbf16, #tpu.memory_space<vmem>>, vector<1x32x32xbf16>
    %322 = vector.shape_cast %321 : vector<1x32x32xbf16> to vector<32x32xbf16>
    %cst_137 = arith.constant dense<0.000000e+00> : vector<20x32xf32>
    %323 = tpu.matmul %320, %322, %cst_137 {dimension_numbers = #tpu.dot_dimension_numbers<[1], [0], [0], [1], [0, 0, 1, 1], [], []>} : vector<20x32xbf16>, vector<32x32xbf16>, vector<20x32xf32> -> vector<20x32xf32>
    %c1_138 = arith.constant 1 : index
    %c0_139 = arith.constant 0 : index
    %c0_140 = arith.constant 0 : index
    %324 = vector.load %arg12[%c1_138, %c0_139, %c0_140] : memref<2x1x32xf32, #tpu.memory_space<vmem>>, vector<1x1x32xf32>
    %325 = vector.shape_cast %324 : vector<1x1x32xf32> to vector<1x32xf32>
    %326 = vector.broadcast %325 : vector<1x32xf32> to vector<20x32xf32>
    %327 = arith.addf %323, %326 : vector<20x32xf32>
    %328 = arith.addf %194, %327 : vector<20x32xf32>
    %cst_141 = arith.constant dense<0.000000e+00> : vector<20xf32>
    %329 = vector.multi_reduction <add>, %328, %cst_141 [1] : vector<20x32xf32> to vector<20xf32>
    %330 = vector.shape_cast %329 : vector<20xf32> to vector<20x1xf32>
    %cst_142 = arith.constant 3.200000e+01 : f32
    %331 = vector.broadcast %cst_142 : f32 to vector<20x1xf32>
    %332 = arith.divf %330, %331 : vector<20x1xf32>
    %333 = vector.broadcast %332 : vector<20x1xf32> to vector<20x32xf32>
    %334 = arith.subf %328, %333 : vector<20x32xf32>
    %335 = arith.mulf %334, %334 : vector<20x32xf32>
    %cst_143 = arith.constant dense<0.000000e+00> : vector<20xf32>
    %336 = vector.multi_reduction <add>, %335, %cst_143 [1] : vector<20x32xf32> to vector<20xf32>
    %337 = vector.shape_cast %336 : vector<20xf32> to vector<20x1xf32>
    %cst_144 = arith.constant 3.200000e+01 : f32
    %338 = vector.broadcast %cst_144 : f32 to vector<20x1xf32>
    %339 = arith.divf %337, %338 : vector<20x1xf32>
    %cst_145 = arith.constant 9.99999974E-6 : f32
    %340 = vector.broadcast %cst_145 : f32 to vector<20x1xf32>
    %341 = arith.addf %339, %340 : vector<20x1xf32>
    %342 = math.rsqrt %341 : vector<20x1xf32>
    %343 = vector.broadcast %342 : vector<20x1xf32> to vector<20x32xf32>
    %344 = arith.mulf %334, %343 : vector<20x32xf32>
    %c1_146 = arith.constant 1 : index
    %c0_147 = arith.constant 0 : index
    %c0_148 = arith.constant 0 : index
    %345 = vector.load %arg13[%c1_146, %c0_147, %c0_148] : memref<2x1x32xf32, #tpu.memory_space<vmem>>, vector<1x1x32xf32>
    %346 = vector.shape_cast %345 : vector<1x1x32xf32> to vector<1x32xf32>
    %347 = vector.broadcast %346 : vector<1x32xf32> to vector<20x32xf32>
    %348 = arith.mulf %344, %347 : vector<20x32xf32>
    %c1_149 = arith.constant 1 : index
    %c0_150 = arith.constant 0 : index
    %c0_151 = arith.constant 0 : index
    %349 = vector.load %arg14[%c1_149, %c0_150, %c0_151] : memref<2x1x32xf32, #tpu.memory_space<vmem>>, vector<1x1x32xf32>
    %350 = vector.shape_cast %349 : vector<1x1x32xf32> to vector<1x32xf32>
    %351 = vector.broadcast %350 : vector<1x32xf32> to vector<20x32xf32>
    %352 = arith.addf %348, %351 : vector<20x32xf32>
    %c1_152 = arith.constant 1 : index
    %c0_153 = arith.constant 0 : index
    %c0_154 = arith.constant 0 : index
    %353 = vector.load %arg15[%c1_152, %c0_153, %c0_154] : memref<2x32x128xf32, #tpu.memory_space<vmem>>, vector<1x32x128xf32>
    %354 = vector.shape_cast %353 : vector<1x32x128xf32> to vector<32x128xf32>
    %cst_155 = arith.constant dense<0.000000e+00> : vector<20x128xf32>
    %355 = tpu.matmul %352, %354, %cst_155 {dimension_numbers = #tpu.dot_dimension_numbers<[1], [0], [0], [1], [0, 0, 1, 1], [], []>} : vector<20x32xf32>, vector<32x128xf32>, vector<20x128xf32> -> vector<20x128xf32>
    %c1_156 = arith.constant 1 : index
    %c0_157 = arith.constant 0 : index
    %c0_158 = arith.constant 0 : index
    %356 = vector.load %arg16[%c1_156, %c0_157, %c0_158] : memref<2x1x128xf32, #tpu.memory_space<vmem>>, vector<1x1x128xf32>
    %357 = vector.shape_cast %356 : vector<1x1x128xf32> to vector<1x128xf32>
    %358 = vector.broadcast %357 : vector<1x128xf32> to vector<20x128xf32>
    %359 = arith.addf %355, %358 : vector<20x128xf32>
    %cst_159 = arith.constant 5.000000e-01 : f32
    %360 = vector.broadcast %cst_159 : f32 to vector<20x128xf32>
    %361 = arith.mulf %360, %359 : vector<20x128xf32>
    %cst_160 = arith.constant 4.471500e-02 : f32
    %362 = vector.broadcast %cst_160 : f32 to vector<20x128xf32>
    %363 = arith.mulf %362, %359 : vector<20x128xf32>
    %364 = arith.mulf %363, %359 : vector<20x128xf32>
    %365 = arith.mulf %364, %359 : vector<20x128xf32>
    %366 = arith.addf %359, %365 : vector<20x128xf32>
    %cst_161 = arith.constant 0.797884583 : f32
    %367 = vector.broadcast %cst_161 : f32 to vector<20x128xf32>
    %368 = arith.mulf %367, %366 : vector<20x128xf32>
    %369 = math.tanh %368 : vector<20x128xf32>
    %cst_162 = arith.constant 1.000000e+00 : f32
    %370 = vector.broadcast %cst_162 : f32 to vector<20x128xf32>
    %371 = arith.addf %370, %369 : vector<20x128xf32>
    %372 = arith.mulf %361, %371 : vector<20x128xf32>
    %c1_163 = arith.constant 1 : index
    %c0_164 = arith.constant 0 : index
    %c0_165 = arith.constant 0 : index
    %373 = vector.load %arg17[%c1_163, %c0_164, %c0_165] : memref<2x128x32xf32, #tpu.memory_space<vmem>>, vector<1x128x32xf32>
    %374 = vector.shape_cast %373 : vector<1x128x32xf32> to vector<128x32xf32>
    %cst_166 = arith.constant dense<0.000000e+00> : vector<20x32xf32>
    %375 = tpu.matmul %372, %374, %cst_166 {dimension_numbers = #tpu.dot_dimension_numbers<[1], [0], [0], [1], [0, 0, 1, 1], [], []>} : vector<20x128xf32>, vector<128x32xf32>, vector<20x32xf32> -> vector<20x32xf32>
    %c1_167 = arith.constant 1 : index
    %c0_168 = arith.constant 0 : index
    %c0_169 = arith.constant 0 : index
    %376 = vector.load %arg18[%c1_167, %c0_168, %c0_169] : memref<2x1x32xf32, #tpu.memory_space<vmem>>, vector<1x1x32xf32>
    %377 = vector.shape_cast %376 : vector<1x1x32xf32> to vector<1x32xf32>
    %378 = vector.broadcast %377 : vector<1x32xf32> to vector<20x32xf32>
    %379 = arith.addf %375, %378 : vector<20x32xf32>
    %380 = arith.addf %328, %379 : vector<20x32xf32>
    %c0_170 = arith.constant 0 : index
    %c0_171 = arith.constant 0 : index
    %381 = vector.load %arg19[%c0_170, %c0_171] : memref<20x32xf32, #tpu.memory_space<vmem>>, vector<20x32xf32>
    tpu.vector_store %arg19[%c0_170, %c0_171], %380 {strides = array<i32>} : memref<20x32xf32, #tpu.memory_space<vmem>>, vector<20x32xf32>,
    return
  }
  func.func @transform_0(%arg0: i32) -> (i32, i32) {
    %c0_i32 = arith.constant 0 : i32
    %c0_i32_0 = arith.constant 0 : i32
    %c0_i32_1 = arith.constant 0 : i32
    return %c0_i32, %c0_i32_0 : i32, i32
  }
  func.func @transform_1(%arg0: i32) -> (i32, i32) {
    %c0_i32 = arith.constant 0 : i32
    %c0_i32_0 = arith.constant 0 : i32
    %c0_i32_1 = arith.constant 0 : i32
    return %c0_i32, %c0_i32_0 : i32, i32
  }
  func.func @transform_2(%arg0: i32) -> (i32, i32) {
    %c0_i32 = arith.constant 0 : i32
    %c0_i32_0 = arith.constant 0 : i32
    %c0_i32_1 = arith.constant 0 : i32
    return %c0_i32, %c0_i32_0 : i32, i32
  }
  func.func @transform_3(%arg0: i32) -> (i32, i32) {
    %c0_i32 = arith.constant 0 : i32
    %c0_i32_0 = arith.constant 0 : i32
    %c0_i32_1 = arith.constant 0 : i32
    return %c0_i32, %c0_i32_0 : i32, i32
  }
  func.func @transform_4(%arg0: i32) -> (i32, i32) {
    %c0_i32 = arith.constant 0 : i32
    %c0_i32_0 = arith.constant 0 : i32
    %c0_i32_1 = arith.constant 0 : i32
    return %c0_i32, %c0_i32_0 : i32, i32
  }
  func.func @transform_5(%arg0: i32) -> (i32, i32, i32) {
    %c0_i32 = arith.constant 0 : i32
    %c0_i32_0 = arith.constant 0 : i32
    %c0_i32_1 = arith.constant 0 : i32
    %c0_i32_2 = arith.constant 0 : i32
    return %c0_i32, %c0_i32_0, %c0_i32_1 : i32, i32, i32
  }
  func.func @transform_6(%arg0: i32) -> (i32, i32, i32) {
    %c0_i32 = arith.constant 0 : i32
    %c0_i32_0 = arith.constant 0 : i32
    %c0_i32_1 = arith.constant 0 : i32
    %c0_i32_2 = arith.constant 0 : i32
    return %c0_i32, %c0_i32_0, %c0_i32_1 : i32, i32, i32
  }
  func.func @transform_7(%arg0: i32) -> (i32, i32, i32) {
    %c0_i32 = arith.constant 0 : i32
    %c0_i32_0 = arith.constant 0 : i32
    %c0_i32_1 = arith.constant 0 : i32
    %c0_i32_2 = arith.constant 0 : i32
    return %c0_i32, %c0_i32_0, %c0_i32_1 : i32, i32, i32
  }
  func.func @transform_8(%arg0: i32) -> (i32, i32, i32) {
    %c0_i32 = arith.constant 0 : i32
    %c0_i32_0 = arith.constant 0 : i32
    %c0_i32_1 = arith.constant 0 : i32
    %c0_i32_2 = arith.constant 0 : i32
    return %c0_i32, %c0_i32_0, %c0_i32_1 : i32, i32, i32
  }
  func.func @transform_9(%arg0: i32) -> (i32, i32, i32) {
    %c0_i32 = arith.constant 0 : i32
    %c0_i32_0 = arith.constant 0 : i32
    %c0_i32_1 = arith.constant 0 : i32
    %c0_i32_2 = arith.constant 0 : i32
    return %c0_i32, %c0_i32_0, %c0_i32_1 : i32, i32, i32
  }
  func.func @transform_10(%arg0: i32) -> (i32, i32, i32) {
    %c0_i32 = arith.constant 0 : i32
    %c0_i32_0 = arith.constant 0 : i32
    %c0_i32_1 = arith.constant 0 : i32
    %c0_i32_2 = arith.constant 0 : i32
    return %c0_i32, %c0_i32_0, %c0_i32_1 : i32, i32, i32
  }
  func.func @transform_11(%arg0: i32) -> (i32, i32, i32) {
    %c0_i32 = arith.constant 0 : i32
    %c0_i32_0 = arith.constant 0 : i32
    %c0_i32_1 = arith.constant 0 : i32
    %c0_i32_2 = arith.constant 0 : i32
    return %c0_i32, %c0_i32_0, %c0_i32_1 : i32, i32, i32
  }
  func.func @transform_12(%arg0: i32) -> (i32, i32, i32) {
    %c0_i32 = arith.constant 0 : i32
    %c0_i32_0 = arith.constant 0 : i32
    %c0_i32_1 = arith.constant 0 : i32
    %c0_i32_2 = arith.constant 0 : i32
    return %c0_i32, %c0_i32_0, %c0_i32_1 : i32, i32, i32
  }
  func.func @transform_13(%arg0: i32) -> (i32, i32, i32) {
    %c0_i32 = arith.constant 0 : i32
    %c0_i32_0 = arith.constant 0 : i32
    %c0_i32_1 = arith.constant 0 : i32
    %c0_i32_2 = arith.constant 0 : i32
    return %c0_i32, %c0_i32_0, %c0_i32_1 : i32, i32, i32
  }
  func.func @transform_14(%arg0: i32) -> (i32, i32, i32) {
    %c0_i32 = arith.constant 0 : i32
    %c0_i32_0 = arith.constant 0 : i32
    %c0_i32_1 = arith.constant 0 : i32
    %c0_i32_2 = arith.constant 0 : i32
    return %c0_i32, %c0_i32_0, %c0_i32_1 : i32, i32, i32
  }
  func.func @transform_15(%arg0: i32) -> (i32, i32, i32) {
    %c0_i32 = arith.constant 0 : i32
    %c0_i32_0 = arith.constant 0 : i32
    %c0_i32_1 = arith.constant 0 : i32
    %c0_i32_2 = arith.constant 0 : i32
    return %c0_i32, %c0_i32_0, %c0_i32_1 : i32, i32, i32
  }
  func.func @transform_16(%arg0: i32) -> (i32, i32, i32) {
    %c0_i32 = arith.constant 0 : i32
    %c0_i32_0 = arith.constant 0 : i32
    %c0_i32_1 = arith.constant 0 : i32
    %c0_i32_2 = arith.constant 0 : i32
    return %c0_i32, %c0_i32_0, %c0_i32_1 : i32, i32, i32
  }
  func.func @transform_17(%arg0: i32) -> (i32, i32, i32) {
    %c0_i32 = arith.constant 0 : i32
    %c0_i32_0 = arith.constant 0 : i32
    %c0_i32_1 = arith.constant 0 : i32
    %c0_i32_2 = arith.constant 0 : i32
    return %c0_i32, %c0_i32_0, %c0_i32_1 : i32, i32, i32
  }
  func.func @transform_18(%arg0: i32) -> (i32, i32) {
    %c0_i32 = arith.constant 0 : i32
    %c0_i32_0 = arith.constant 0 : i32
    %c0_i32_1 = arith.constant 0 : i32
    return %c0_i32, %c0_i32_0 : i32, i32
  }
}

</mosaic_0001>

<llo_original>
// kernel: tpu_custom_call.1
$region0: #{tpu_custom_call.1}
  #allocation0 [shape = 'u32[]', space=smem, size = 0x4, offset = 0x4, fixed_abs, tag = 'smem constant byte address 0x4 - core index']
  #allocation1 [shape = 'u32[144,128]{1,0:T(1,128)}', space=vmem, size = 0x12000, scoped, tag = 'internal scratch']
  %s0 = inlined_call_operand.vmem [shape: f32[20,32], index: 0, kind: input, shape index: {}]
  %s1 = inlined_call_operand.vmem [shape: f32[20,194], index: 1, kind: input, shape index: {}]
  %s2 = inlined_call_operand.vmem [shape: f32[194,32], index: 2, kind: input, shape index: {}]
  %s3 = inlined_call_operand.vmem [shape: f32[1,32], index: 3, kind: input, shape index: {}]
  %s4 = inlined_call_operand.vmem [shape: f32[20,20], index: 4, kind: input, shape index: {}]
  %s5 = inlined_call_operand.vmem [shape: f32[4,20,20], index: 5, kind: input, shape index: {}]
  %s6 = inlined_call_operand.vmem [shape: f32[2,1,32], index: 6, kind: input, shape index: {}]
  %s7 = inlined_call_operand.vmem [shape: f32[2,1,32], index: 7, kind: input, shape index: {}]
  %s8 = inlined_call_operand.vmem [shape: bf16[2,32,96], index: 8, kind: input, shape index: {}]
  %s9 = inlined_call_operand.vmem [shape: f32[2,1,96], index: 9, kind: input, shape index: {}]
  %s10 = inlined_call_operand.vmem [shape: bf16[2,32,32], index: 10, kind: input, shape index: {}]
  %s11 = inlined_call_operand.vmem [shape: f32[2,1,32], index: 11, kind: input, shape index: {}]
  %s12 = inlined_call_operand.vmem [shape: f32[2,1,32], index: 12, kind: input, shape index: {}]
  %s13 = inlined_call_operand.vmem [shape: f32[2,1,32], index: 13, kind: input, shape index: {}]
  %s14 = inlined_call_operand.vmem [shape: f32[2,32,128], index: 14, kind: input, shape index: {}]
  %s15 = inlined_call_operand.vmem [shape: f32[2,1,128], index: 15, kind: input, shape index: {}]
  %s16 = inlined_call_operand.vmem [shape: f32[2,128,32], index: 16, kind: input, shape index: {}]
  %s17 = inlined_call_operand.vmem [shape: f32[2,1,32], index: 17, kind: input, shape index: {}]
  %s18 = inlined_call_operand.hbm [shape: f32[20,32], index: 18, kind: output, shape index: {}]
  %s19 = sld [smem:[#allocation0]]
  $region82: #{tpu_custom_call.1} parent=0
    _
  %s21 = ssub.s32 1, %s19
  %s22 = scalar_select 0, %s21, %s19
  $region1: #{tpu_custom_call.1} parent=0
    #allocation2 [shape = 'u8[12288]{0}', space=vmem, size = 0x3000, scoped, tag = 'output window, operand 0, single buffered']
    #allocation3 [shape = 's32[1]{0}', space=sflag, size = 0x4, scoped, tag = 'scoped memory for tpu_custom_call.1']
    %23 = vsyncpa [#allocation3], 0
    // Predicated region
    $region2: #{tpu_custom_call.1} parent=1 // pred_check
      _
    $region3: #{tpu_custom_call.1} parent=1 // pred_check_branch
      %25 = sbr.rel (0) target = $region5
    $region4: #{tpu_custom_call.1} parent=1 // pred_region
      _
    $region5: #{tpu_custom_call.1} parent=1 // pred_fallthru
      _
    // Predicated region
    $region6: #{tpu_custom_call.1} parent=1 // pred_check
      _
    $region7: #{tpu_custom_call.1} parent=1 // pred_check_branch
      %27 = sbr.rel (0) target = $region9
    $region8: #{tpu_custom_call.1} parent=1 // pred_region
      _
    $region9: #{tpu_custom_call.1} parent=1 // pred_fallthru
      _
    // Predicated region
    $region10: #{tpu_custom_call.1} parent=1 // pred_check
      _
    $region11: #{tpu_custom_call.1} parent=1 // pred_check_branch
      %29 = sbr.rel (0) target = $region13
    $region12: #{tpu_custom_call.1} parent=1 // pred_region
      _
    $region13: #{tpu_custom_call.1} parent=1 // pred_fallthru
      _
    // Predicated region
    $region14: #{tpu_custom_call.1} parent=1 // pred_check
      _
    $region15: #{tpu_custom_call.1} parent=1 // pred_check_branch
      %31 = sbr.rel (0) target = $region17
    $region16: #{tpu_custom_call.1} parent=1 // pred_region
      _
    $region17: #{tpu_custom_call.1} parent=1 // pred_fallthru
      _
    // Predicated region
    $region18: #{tpu_custom_call.1} parent=1 // pred_check
      _
    $region19: #{tpu_custom_call.1} parent=1 // pred_check_branch
      %33 = sbr.rel (0) target = $region21
    $region20: #{tpu_custom_call.1} parent=1 // pred_region
      _
    $region21: #{tpu_custom_call.1} parent=1 // pred_fallthru
      _
    // Predicated region
    $region22: #{tpu_custom_call.1} parent=1 // pred_check
      _
    $region23: #{tpu_custom_call.1} parent=1 // pred_check_branch
      %35 = sbr.rel (0) target = $region25
    $region24: #{tpu_custom_call.1} parent=1 // pred_region
      _
    $region25: #{tpu_custom_call.1} parent=1 // pred_fallthru
      _
    // Predicated region
    $region26: #{tpu_custom_call.1} parent=1 // pred_check
      _
    $region27: #{tpu_custom_call.1} parent=1 // pred_check_branch
      %37 = sbr.rel (0) target = $region29
    $region28: #{tpu_custom_call.1} parent=1 // pred_region
      _
    $region29: #{tpu_custom_call.1} parent=1 // pred_fallthru
      _
    // Predicated region
    $region30: #{tpu_custom_call.1} parent=1 // pred_check
      _
    $region31: #{tpu_custom_call.1} parent=1 // pred_check_branch
      %39 = sbr.rel (0) target = $region33
    $region32: #{tpu_custom_call.1} parent=1 // pred_region
      _
    $region33: #{tpu_custom_call.1} parent=1 // pred_fallthru
      _
    // Predicated region
    $region34: #{tpu_custom_call.1} parent=1 // pred_check
      _
    $region35: #{tpu_custom_call.1} parent=1 // pred_check_branch
      %41 = sbr.rel (0) target = $region37
    $region36: #{tpu_custom_call.1} parent=1 // pred_region
      _
    $region37: #{tpu_custom_call.1} parent=1 // pred_fallthru
      _
    // Predicated region
    $region38: #{tpu_custom_call.1} parent=1 // pred_check
      _
    $region39: #{tpu_custom_call.1} parent=1 // pred_check_branch
      %43 = sbr.rel (0) target = $region41
    $region40: #{tpu_custom_call.1} parent=1 // pred_region
      _
    $region41: #{tpu_custom_call.1} parent=1 // pred_fallthru
      _
    // Predicated region
    $region42: #{tpu_custom_call.1} parent=1 // pred_check
      _
    $region43: #{tpu_custom_call.1} parent=1 // pred_check_branch
      %45 = sbr.rel (0) target = $region45
    $region44: #{tpu_custom_call.1} parent=1 // pred_region
      _
    $region45: #{tpu_custom_call.1} parent=1 // pred_fallthru
      _
    // Predicated region
    $region46: #{tpu_custom_call.1} parent=1 // pred_check
      _
    $region47: #{tpu_custom_call.1} parent=1 // pred_check_branch
      %47 = sbr.rel (0) target = $region49
    $region48: #{tpu_custom_call.1} parent=1 // pred_region
      _
    $region49: #{tpu_custom_call.1} parent=1 // pred_fallthru
      _
    // Predicated region
    $region50: #{tpu_custom_call.1} parent=1 // pred_check
      _
    $region51: #{tpu_custom_call.1} parent=1 // pred_check_branch
      %49 = sbr.rel (0) target = $region53
    $region52: #{tpu_custom_call.1} parent=1 // pred_region
      _
    $region53: #{tpu_custom_call.1} parent=1 // pred_fallthru
      _
    // Predicated region
    $region54: #{tpu_custom_call.1} parent=1 // pred_check
      _
    $region55: #{tpu_custom_call.1} parent=1 // pred_check_branch
      %51 = sbr.rel (0) target = $region57
    $region56: #{tpu_custom_call.1} parent=1 // pred_region
      _
    $region57: #{tpu_custom_call.1} parent=1 // pred_fallthru
      _
    // Predicated region
    $region58: #{tpu_custom_call.1} parent=1 // pred_check
      _
    $region59: #{tpu_custom_call.1} parent=1 // pred_check_branch
      %53 = sbr.rel (0) target = $region61
    $region60: #{tpu_custom_call.1} parent=1 // pred_region
      _
    $region61: #{tpu_custom_call.1} parent=1 // pred_fallthru
      _
    // Predicated region
    $region62: #{tpu_custom_call.1} parent=1 // pred_check
      _
    $region63: #{tpu_custom_call.1} parent=1 // pred_check_branch
      %55 = sbr.rel (0) target = $region65
    $region64: #{tpu_custom_call.1} parent=1 // pred_region
      _
    $region65: #{tpu_custom_call.1} parent=1 // pred_fallthru
      _
    // Predicated region
    $region66: #{tpu_custom_call.1} parent=1 // pred_check
      _
    $region67: #{tpu_custom_call.1} parent=1 // pred_check_branch
      %57 = sbr.rel (0) target = $region69
    $region68: #{tpu_custom_call.1} parent=1 // pred_region
      _
    $region69: #{tpu_custom_call.1} parent=1 // pred_fallthru
      _
    // Predicated region
    $region70: #{tpu_custom_call.1} parent=1 // pred_check
      _
    $region71: #{tpu_custom_call.1} parent=1 // pred_check_branch
      %59 = sbr.rel (0) target = $region73
    $region72: #{tpu_custom_call.1} parent=1 // pred_region
      _
    $region73: #{tpu_custom_call.1} parent=1 // pred_fallthru
      _
    %v61 = vld [vmem:[%s0] sm:$0xff]
    %v62 = vld [vmem:[%s0 + $0x8] sm:$0xff]
    %v63 = vld [vmem:[%s0 + $0x10] sm:$0xf]
    %v64 = vld [vmem:[%s1] sm:$0xff]
    %v65 = vld [vmem:[%s1 + $0x8] sm:$0xff]
    %v66 = vld [vmem:[%s1 + $0x10] sm:$0xff]
    %v67 = vld [vmem:[%s1 + $0x18] sm:$0xff]
    %v68 = vld [vmem:[%s1 + $0x20] sm:$0xf]
    %v69 = vld [vmem:[%s1 + $0x28] sm:$0xf]
    %v70 = vld [vmem:[%s2] sm:$0xff]
    %v71 = vld [vmem:[%s2 + $0x8] sm:$0xff]
    %v72 = vld [vmem:[%s2 + $0x10] sm:$0xff]
    %v73 = vld [vmem:[%s2 + $0x18] sm:$0xff]
    %v74 = vld [vmem:[%s2 + $0x20] sm:$0xff]
    %v75 = vld [vmem:[%s2 + $0x28] sm:$0xff]
    %v76 = vld [vmem:[%s2 + $0x30] sm:$0xff]
    %v77 = vld [vmem:[%s2 + $0x38] sm:$0xff]
    %v78 = vld [vmem:[%s2 + $0x40] sm:$0xff]
    %v79 = vld [vmem:[%s2 + $0x48] sm:$0xff]
    %v80 = vld [vmem:[%s2 + $0x50] sm:$0xff]
    %v81 = vld [vmem:[%s2 + $0x58] sm:$0xff]
    %v82 = vld [vmem:[%s2 + $0x60] sm:$0xff]
    %v83 = vld [vmem:[%s2 + $0x68] sm:$0xff]
    %v84 = vld [vmem:[%s2 + $0x70] sm:$0xff]
    %v85 = vld [vmem:[%s2 + $0x78] sm:$0xff]
    %v86 = vld [vmem:[%s2 + $0x80] sm:$0xff]
    %v87 = vld [vmem:[%s2 + $0x88] sm:$0xff]
    %v88 = vld [vmem:[%s2 + $0x90] sm:$0xff]
    %v89 = vld [vmem:[%s2 + $0x98] sm:$0xff]
    %v90 = vld [vmem:[%s2 + $0xa0] sm:$0xff]
    %v91 = vld [vmem:[%s2 + $0xa8] sm:$0xff]
    %v92 = vld [vmem:[%s2 + $0xb0] sm:$0xff]
    %v93 = vld [vmem:[%s2 + $0xb8] sm:$0xff]
    %v94 = vld [vmem:[%s2 + $0xc0] sm:$0x3]
    %vm95 = vcmask 539648
    %v97 = vsel %vm95, %v65, 0
    %v100 = vsel %vm95, %v67, 0
    %v103 = vsel %vm95, %v69, 0
    %vm105 = vcmask 1041408
    %v107 = vsel %vm105, %v94, 0
    %109 = vmatprep.subr.mxu0 0.0
    %110 = vmatpush1.msra.mxu0 %v85
    %111 = vmatprep.subr.mxu0 0.0
    %112 = vmatpush1.msra.mxu0 %v84
    %113 = vmatprep.subr.mxu0 0.0
    %114 = vmatpush1.msra.mxu0 %v83
    %115 = vmatprep.subr.mxu0 0.0
    %116 = vmatpush1.msra.mxu0 %v82
    %117 = vmatprep.subr.mxu0 0.0
    %118 = vmatpush1.msra.mxu0 %v81
    %119 = vmatprep.subr.mxu0 0.0
    %120 = vmatpush1.msra.mxu0 %v80
    %121 = vmatprep.subr.mxu0 0.0
    %122 = vmatpush1.msra.mxu0 %v79
    %123 = vmatprep.subr.mxu0 0.0
    %124 = vmatpush1.msra.mxu0 %v78
    %125 = vmatprep.subr.mxu0 0.0
    %126 = vmatpush1.msra.mxu0 %v77
    %127 = vmatprep.subr.mxu0 0.0
    %128 = vmatpush1.msra.mxu0 %v76
    %129 = vmatprep.subr.mxu0 0.0
    %130 = vmatpush1.msra.mxu0 %v75
    %131 = vmatprep.subr.mxu0 0.0
    %132 = vmatpush1.msra.mxu0 %v74
    %133 = vmatprep.subr.mxu0 0.0
    %134 = vmatpush1.msra.mxu0 %v73
    %135 = vmatprep.subr.mxu0 0.0
    %136 = vmatpush1.msra.mxu0 %v72
    %137 = vmatprep.subr.mxu0 0.0
    %138 = vmatpush1.msra.mxu0 %v71
    %139 = vmatprep.subr.mxu0 0.0
    %140 = vmatpush1.msra.mxu0 %v70
    %141 = vmatprep.subr.mxu0 0.0
    %142 = vmatpush2.msra.mxu0 0.0
    %143 = vmatprep.subr.mxu0 0.0
    %144 = vmatpush2.msra.mxu0 0.0
    %145 = vmatprep.subr.mxu0 0.0
    %146 = vmatpush2.msra.mxu0 0.0
    %147 = vmatprep.subr.mxu0 0.0
    %148 = vmatpush2.msra.mxu0 0.0
    %149 = vmatprep.subr.mxu0 0.0
    %150 = vmatpush2.msra.mxu0 0.0
    %151 = vmatprep.subr.mxu0 0.0
    %152 = vmatpush2.msra.mxu0 0.0
    %153 = vmatprep.subr.mxu0 0.0
    %154 = vmatpush2.msra.mxu0 0.0
    %155 = vmatprep.subr.mxu0 0.0
    %156 = vmatpush2.msra.mxu0 %v107
    %157 = vmatprep.subr.mxu0 0.0
    %158 = vmatpush2.msra.mxu0 %v93
    %159 = vmatprep.subr.mxu0 0.0
    %160 = vmatpush2.msra.mxu0 %v92
    %161 = vmatprep.subr.mxu0 0.0
    %162 = vmatpush2.msra.mxu0 %v91
    %163 = vmatprep.subr.mxu0 0.0
    %164 = vmatpush2.msra.mxu0 %v90
    %165 = vmatprep.subr.mxu0 0.0
    %166 = vmatpush2.msra.mxu0 %v89
    %167 = vmatprep.subr.mxu0 0.0
    %168 = vmatpush2.msra.mxu0 %v88
    %169 = vmatprep.subr.mxu0 0.0
    %170 = vmatpush2.msra.mxu0 %v87
    %171 = vmatprep.subr.mxu0 0.0
    %172 = vmatpush2.msra.mxu0 %v86
    %173 = vmatprep.mubr.f32.mxu0 %v97
    %174 = vmatmul.mubr.f32.gmra.mxu0 %v64
    %v175 = vpop.f32.mrf.mxu0
    %v176 = vadd.f32 0.0, %v175
    %v177 = vpop.f32.mrf.mxu0
    %178 = vmatprep.mubr.f32.mxu0 %v100
    %179 = vmatmul.mubr.f32.gmra.mxu0 %v66
    %v180 = vpop.f32.mrf.mxu0
    %v181 = vadd.f32 0.0, %v180
    %v182 = vpop.f32.mrf.mxu0
    %183 = vmatprep.mubr.f32.mxu0 %v103
    %184 = vmatmul.mubr.f32.gmra.mxu0 %v68
    %v185 = vpop.f32.mrf.mxu0
    %v186 = vadd.f32 0.0, %v185
    %v187 = vpop.f32.mrf.mxu0
    %188 = vdwg.mxu0
    %v189 = vadd.f32 %v61, %v176
    %v190 = vadd.f32 %v62, %v181
    %v191 = vadd.f32 %v63, %v186
    %v192 = vld [vmem:[%s3] sm:$0x1]
    %v194 = vlaneseq
    %v195 = vshrl.u32 %v194, 7
    %v196 = vsub.s32 0, %v195
    %v197 = vrot.slane %v192, %v196
    %v199 = vadd.f32 %v189, %v197
    %v200 = vadd.f32 %v190, %v197
    %v201 = vadd.f32 %v191, %v197
    %v202 = vld [vmem:[%s4] sm:$0xff]
    %v203 = vld [vmem:[%s4 + $0x8] sm:$0xff]
    %v204 = vld [vmem:[%s4 + $0x10] sm:$0xf]
    %vm205 = vcmask 261120
    %v206 = vsel %vm205, %v199, 0.0
    %207 = vadd.xlane.f32.xlu0 %v206
    %v208 = vpop.xlane.xlu0 %207
    %v209 = vsel %vm205, %v200, 0.0
    %210 = vadd.xlane.f32.xlu0 %v209
    %v211 = vpop.xlane.xlu0 %210
    %vm212 = vcmask 257024
    %v213 = vsel %vm212, %v201, 0.0
    %214 = vadd.xlane.f32.xlu0 %v213
    %v215 = vpop.xlane.xlu0 %214
    %v216 = vrcp.pop 32.0
    %v217 = vmul.f32 %v208, %v216
    %v218 = vmul.f32 %v211, %v216
    %v219 = vmul.f32 %v215, %v216
    %v220 = vsub.f32 %v199, %v217
    %v221 = vsub.f32 %v200, %v218
    %v222 = vsub.f32 %v201, %v219
    %v223 = vmul.f32 %v220, %v220
    %v224 = vmul.f32 %v221, %v221
    %v225 = vmul.f32 %v222, %v222
    %v226 = vsel %vm205, %v223, 0.0
    %227 = vadd.xlane.f32.xlu0 %v226
    %v228 = vpop.xlane.xlu0 %227
    %v229 = vsel %vm205, %v224, 0.0
    %230 = vadd.xlane.f32.xlu0 %v229
    %v231 = vpop.xlane.xlu0 %230
    %v232 = vsel %vm212, %v225, 0.0
    %233 = vadd.xlane.f32.xlu0 %v232
    %v234 = vpop.xlane.xlu0 %233
    %v235 = vmul.f32 %v228, %v216
    %v236 = vmul.f32 %v231, %v216
    %v237 = vmul.f32 %v234, %v216
    %v238 = vadd.f32 %v235, 1e-05
    %v239 = vadd.f32 %v236, 1e-05
    %v240 = vadd.f32 %v237, 1e-05
    %v241 = vrsqrt.pop %v238
    %v242 = vrsqrt.pop %v239
    %v243 = vrsqrt.pop %v240
    %v244 = vmul.f32 %v220, %v241
    %v245 = vmul.f32 %v221, %v242
    %v246 = vmul.f32 %v222, %v243
    %v247 = vld [vmem:[%s6] sm:$0x1]
    %v249 = vlaneseq
    %v250 = vshrl.u32 %v249, 7
    %v251 = vsub.s32 0, %v250
    %v252 = vrot.slane %v247, %v251
    %v254 = vmul.f32 %v244, %v252
    %v255 = vmul.f32 %v245, %v252
    %v256 = vmul.f32 %v246, %v252
    %v257 = vld [vmem:[%s7] sm:$0x1]
    %v259 = vlaneseq
    %v260 = vshrl.u32 %v259, 7
    %v261 = vsub.s32 0, %v260
    %v262 = vrot.slane %v257, %v261
    %v264 = vadd.f32 %v254, %v262
    %v265 = vadd.f32 %v255, %v262
    %v266 = vadd.f32 %v256, %v262
    %v267 = vpack.c.bf16 %v265, %v264
    %v268 = vpack.c.bf16 %v266, %v266
    %v269 = vld [vmem:[%s8] sm:$0xf]
    %v270 = vld [vmem:[%s8 + $0x4] sm:$0xf]
    %v271 = vld [vmem:[%s8 + $0x8] sm:$0xf]
    %v272 = vld [vmem:[%s8 + $0xc] sm:$0xf]
    %v273 = vld [vmem:[%s9] sm:$0x1]
    %v275 = vlaneseq
    %v276 = vshrl.u32 %v275, 7
    %v277 = vsub.s32 0, %v276
    %v278 = vrot.slane %v273, %v277
    %v284 = vunpack.c.l.b16 %v269
    %v285 = vunpack.c.l.b16 %v270
    %v286 = vunpack.c.l.b16 %v271
    %v287 = vunpack.c.l.b16 %v272
    %v288 = vpack.c.b16 %v285, %v284
    %v289 = vpack.c.b16 %v287, %v286
    %v293 = vsel %vm205, %v267, 0
    %v296 = vsel %vm205, %v268, 0
    %298 = vmatprep.subr.bf16.mxu0 0
    %299 = vmatpush1.bf16.msra.mxu0 0
    %300 = vmatprep.subr.bf16.mxu0 0
    %301 = vmatpush1.bf16.msra.mxu0 0
    %302 = vmatprep.subr.bf16.mxu0 0
    %303 = vmatpush1.bf16.msra.mxu0 0
    %304 = vmatprep.subr.bf16.mxu0 0
    %305 = vmatpush1.bf16.msra.mxu0 0
    %306 = vmatprep.subr.bf16.mxu0 0
    %307 = vmatpush1.bf16.msra.mxu0 0
    %308 = vmatprep.subr.bf16.mxu0 0
    %309 = vmatpush1.bf16.msra.mxu0 0
    %310 = vmatprep.subr.bf16.mxu0 0
    %311 = vmatpush1.bf16.msra.mxu0 %v289
    %312 = vmatprep.subr.bf16.mxu0 0
    %313 = vmatpush1.bf16.msra.mxu0 %v288
    %314 = vmatprep.subr.bf16.mxu0 0
    %315 = vmatpush2.bf16.msra.mxu0 0
    %316 = vmatprep.subr.bf16.mxu0 0
    %317 = vmatpush2.bf16.msra.mxu0 0
    %318 = vmatprep.subr.bf16.mxu0 0
    %319 = vmatpush2.bf16.msra.mxu0 0
    %320 = vmatprep.subr.bf16.mxu0 0
    %321 = vmatpush2.bf16.msra.mxu0 0
    %322 = vmatprep.subr.bf16.mxu0 0
    %323 = vmatpush2.bf16.msra.mxu0 0
    %324 = vmatprep.subr.bf16.mxu0 0
    %325 = vmatpush2.bf16.msra.mxu0 0
    %326 = vmatprep.subr.bf16.mxu0 0
    %327 = vmatpush2.bf16.msra.mxu0 0
    %328 = vmatprep.subr.bf16.mxu0 0
    %329 = vmatpush2.bf16.msra.mxu0 0
    %330 = vmatprep.mubr.bf16.mxu0 0
    %331 = vmatmul.mubr.bf16.gmra.mxu0 %v293
    %v332 = vpop.f32.mrf.mxu0
    %v333 = vadd.f32 %v278, %v332
    %v334 = vpop.f32.mrf.mxu0
    %v335 = vpop.f32.mrf.mxu0
    %v336 = vadd.f32 %v278, %v335
    %v337 = vpop.f32.mrf.mxu0
    %338 = vmatprep.mubr.bf16.mxu0 0
    %339 = vmatmul.mubr.bf16.gmra.mxu0 %v296
    %v340 = vpop.f32.mrf.mxu0
    %v341 = vadd.f32 %v278, %v340
    %v342 = vpop.f32.mrf.mxu0
    %v343 = vpop.f32.mrf.mxu0
    %v344 = vpop.f32.mrf.mxu0
    %345 = vdwg.mxu0
    %v346 = vpack.c.bf16 %v336, %v333
    %v347 = vpack.c.bf16 %v341, %v341
    %350 = vrot.lane.b32.xlu0 %v346, 96
    %v351 = vpop.permute.xlu0 %350
    %352 = vrot.lane.b32.xlu0 %v347, 96
    %v353 = vpop.permute.xlu0 %352
    %vm354 = vcmask 64512
    %v356 = vsel %vm354, %v346, 0
    %v359 = vsel %vm354, %v347, 0
    %v362 = vsel %vm354, %v351, 0
    %v365 = vsel %vm354, %v353, 0
    %367 = vmatprep.subr.bf16.mxu0 0
    %368 = vmatpush1.bf16.xpose.msra.mxu0 0
    %369 = vmatprep.subr.bf16.mxu0 0
    %370 = vmatpush1.bf16.xpose.msra.mxu0 0
    %371 = vmatprep.subr.bf16.mxu0 0
    %372 = vmatpush1.bf16.xpose.msra.mxu0 0
    %373 = vmatprep.subr.bf16.mxu0 0
    %374 = vmatpush1.bf16.xpose.msra.mxu0 0
    %375 = vmatprep.subr.bf16.mxu0 0
    %376 = vmatpush1.bf16.xpose.msra.mxu0 0
    %377 = vmatprep.subr.bf16.mxu0 0
    %378 = vmatpush1.bf16.xpose.msra.mxu0 0
    %379 = vmatprep.subr.bf16.mxu0 0
    %380 = vmatpush1.bf16.xpose.msra.mxu0 %v365
    %381 = vmatprep.subr.bf16.mxu0 0
    %382 = vmatpush1.bf16.xpose.msra.mxu0 %v362
    %383 = vmatprep.subr.bf16.mxu0 0
    %384 = vmatpush2.bf16.xpose.msra.mxu0 0
    %385 = vmatprep.subr.bf16.mxu0 0
    %386 = vmatpush2.bf16.xpose.msra.mxu0 0
    %387 = vmatprep.subr.bf16.mxu0 0
    %388 = vmatpush2.bf16.xpose.msra.mxu0 0
    %389 = vmatprep.subr.bf16.mxu0 0
    %390 = vmatpush2.bf16.xpose.msra.mxu0 0
    %391 = vmatprep.subr.bf16.mxu0 0
    %392 = vmatpush2.bf16.xpose.msra.mxu0 0
    %393 = vmatprep.subr.bf16.mxu0 0
    %394 = vmatpush2.bf16.xpose.msra.mxu0 0
    %395 = vmatprep.subr.bf16.mxu0 0
    %396 = vmatpush2.bf16.xpose.msra.mxu0 0
    %397 = vmatprep.subr.bf16.mxu0 0
    %398 = vmatpush2.bf16.xpose.msra.mxu0 0
    %399 = vmatprep.mubr.bf16.mxu0 0
    %400 = vmatmul.mubr.bf16.gmra.mxu0 %v356
    %v401 = vpop.f32.mrf.mxu0
    %v402 = vadd.f32 %v202, %v401
    %v403 = vpop.f32.mrf.mxu0
    %v404 = vpop.f32.mrf.mxu0
    %v405 = vadd.f32 %v203, %v404
    %v406 = vpop.f32.mrf.mxu0
    %407 = vmatprep.mubr.bf16.mxu0 0
    %408 = vmatmul.mubr.bf16.gmra.mxu0 %v359
    %v409 = vpop.f32.mrf.mxu0
    %v410 = vadd.f32 %v204, %v409
    %v411 = vpop.f32.mrf.mxu0
    %v412 = vpop.f32.mrf.mxu0
    %v413 = vpop.f32.mrf.mxu0
    %414 = vdwg.mxu0
    %vm415 = vcmask 162816
    %v416 = vsel %vm415, %v402, -inf
    %417 = vmax.xlane.f32.xlu0 %v416
    %v418 = vpop.xlane.xlu0 %417
    %v419 = vsel %vm415, %v405, -inf
    %420 = vmax.xlane.f32.xlu0 %v419
    %v421 = vpop.xlane.xlu0 %420
    %vm422 = vcmask 158720
    %v423 = vsel %vm422, %v410, -inf
    %424 = vmax.xlane.f32.xlu0 %v423
    %v425 = vpop.xlane.xlu0 %424
    %v426 = vsub.f32 %v402, %v418
    %v427 = vsub.f32 %v405, %v421
    %v428 = vsub.f32 %v410, %v425
    %v429 = vmul.f32 %v426, 1.442695
    %v430 = vpow.pop %v429
    %v431 = vmul.f32 %v427, 1.442695
    %v432 = vpow.pop %v431
    %v433 = vmul.f32 %v428, 1.442695
    %v434 = vpow.pop %v433
    %v435 = vld [vmem:[%s5] sm:$0xff]
    %v436 = vld [vmem:[%s5 + $0x8] sm:$0xff]
    %v437 = vld [vmem:[%s5 + $0x10] sm:$0xf]
    %v438 = vmul.f32 %v430, %v435
    %v439 = vmul.f32 %v432, %v436
    %v440 = vmul.f32 %v434, %v437
    %v441 = vsel %vm415, %v438, 0.0
    %442 = vadd.xlane.f32.xlu0 %v441
    %v443 = vpop.xlane.xlu0 %442
    %v444 = vsel %vm415, %v439, 0.0
    %445 = vadd.xlane.f32.xlu0 %v444
    %v446 = vpop.xlane.xlu0 %445
    %v447 = vsel %vm422, %v440, 0.0
    %448 = vadd.xlane.f32.xlu0 %v447
    %v449 = vpop.xlane.xlu0 %448
    %v450 = vrcp.pop %v443
    %v451 = vrcp.pop %v446
    %v452 = vrcp.pop %v449
    %v453 = vmul.f32 %v438, %v450
    %v454 = vmul.f32 %v439, %v451
    %v455 = vmul.f32 %v440, %v452
    %v456 = vpack.c.bf16 %v454, %v453
    %v457 = vpack.c.bf16 %v455, %v455
    %458 = vrot.lane.b32.xlu0 %v346, 64
    %v459 = vpop.permute.xlu0 %458
    %460 = vrot.lane.b32.xlu0 %v347, 64
    %v461 = vpop.permute.xlu0 %460
    %v464 = vsel %vm415, %v456, 0
    %v467 = vsel %vm415, %v457, 0
    %v470 = vsel %vm105, %v461, 0
    %472 = vmatprep.subr.bf16.mxu0 0
    %473 = vmatpush1.bf16.msra.mxu0 0
    %474 = vmatprep.subr.bf16.mxu0 0
    %475 = vmatpush1.bf16.msra.mxu0 0
    %476 = vmatprep.subr.bf16.mxu0 0
    %477 = vmatpush1.bf16.msra.mxu0 0
    %478 = vmatprep.subr.bf16.mxu0 0
    %479 = vmatpush1.bf16.msra.mxu0 0
    %480 = vmatprep.subr.bf16.mxu0 0
    %481 = vmatpush1.bf16.msra.mxu0 0
    %482 = vmatprep.subr.bf16.mxu0 0
    %483 = vmatpush1.bf16.msra.mxu0 0
    %484 = vmatprep.subr.bf16.mxu0 0
    %485 = vmatpush1.bf16.msra.mxu0 %v470
    %486 = vmatprep.subr.bf16.mxu0 0
    %487 = vmatpush1.bf16.msra.mxu0 %v459
    %488 = vmatprep.subr.bf16.mxu0 0
    %489 = vmatpush2.bf16.msra.mxu0 0
    %490 = vmatprep.subr.bf16.mxu0 0
    %491 = vmatpush2.bf16.msra.mxu0 0
    %492 = vmatprep.subr.bf16.mxu0 0
    %493 = vmatpush2.bf16.msra.mxu0 0
    %494 = vmatprep.subr.bf16.mxu0 0
    %495 = vmatpush2.bf16.msra.mxu0 0
    %496 = vmatprep.subr.bf16.mxu0 0
    %497 = vmatpush2.bf16.msra.mxu0 0
    %498 = vmatprep.subr.bf16.mxu0 0
    %499 = vmatpush2.bf16.msra.mxu0 0
    %500 = vmatprep.subr.bf16.mxu0 0
    %501 = vmatpush2.bf16.msra.mxu0 0
    %502 = vmatprep.subr.bf16.mxu0 0
    %503 = vmatpush2.bf16.msra.mxu0 0
    %504 = vmatprep.mubr.bf16.mxu0 0
    %505 = vmatmul.mubr.bf16.gmra.mxu0 %v464
    %v506 = vpop.f32.mrf.mxu0
    %v507 = vadd.f32 0.0, %v506
    %v508 = vpop.f32.mrf.mxu0
    %v509 = vpop.f32.mrf.mxu0
    %v510 = vadd.f32 0.0, %v509
    %v511 = vpop.f32.mrf.mxu0
    %512 = vmatprep.mubr.bf16.mxu0 0
    %513 = vmatmul.mubr.bf16.gmra.mxu0 %v467
    %v514 = vpop.f32.mrf.mxu0
    %v515 = vadd.f32 0.0, %v514
    %v516 = vpop.f32.mrf.mxu0
    %v517 = vpop.f32.mrf.mxu0
    %v518 = vpop.f32.mrf.mxu0
    %519 = vdwg.mxu0
    %520 = vrot.lane.b32.xlu0 %v346, 120
    %v521 = vpop.permute.xlu0 %520
    %522 = vrot.lane.b32.xlu0 %v347, 120
    %v523 = vpop.permute.xlu0 %522
    %524 = vrot.lane.b32.xlu0 %v346, 88
    %v525 = vpop.permute.xlu0 %524
    %526 = vrot.lane.b32.xlu0 %v347, 88
    %v527 = vpop.permute.xlu0 %526
    %v529 = vsel %vm354, %v521, 0
    %v532 = vsel %vm354, %v523, 0
    %v535 = vsel %vm354, %v525, 0
    %v538 = vsel %vm354, %v527, 0
    %540 = vmatprep.subr.bf16.mxu0 0
    %541 = vmatpush1.bf16.xpose.msra.mxu0 0
    %542 = vmatprep.subr.bf16.mxu0 0
    %543 = vmatpush1.bf16.xpose.msra.mxu0 0
    %544 = vmatprep.subr.bf16.mxu0 0
    %545 = vmatpush1.bf16.xpose.msra.mxu0 0
    %546 = vmatprep.subr.bf16.mxu0 0
    %547 = vmatpush1.bf16.xpose.msra.mxu0 0
    %548 = vmatprep.subr.bf16.mxu0 0
    %549 = vmatpush1.bf16.xpose.msra.mxu0 0
    %550 = vmatprep.subr.bf16.mxu0 0
    %551 = vmatpush1.bf16.xpose.msra.mxu0 0
    %552 = vmatprep.subr.bf16.mxu0 0
    %553 = vmatpush1.bf16.xpose.msra.mxu0 %v538
    %554 = vmatprep.subr.bf16.mxu0 0
    %555 = vmatpush1.bf16.xpose.msra.mxu0 %v535
    %556 = vmatprep.subr.bf16.mxu0 0
    %557 = vmatpush2.bf16.xpose.msra.mxu0 0
    %558 = vmatprep.subr.bf16.mxu0 0
    %559 = vmatpush2.bf16.xpose.msra.mxu0 0
    %560 = vmatprep.subr.bf16.mxu0 0
    %561 = vmatpush2.bf16.xpose.msra.mxu0 0
    %562 = vmatprep.subr.bf16.mxu0 0
    %563 = vmatpush2.bf16.xpose.msra.mxu0 0
    %564 = vmatprep.subr.bf16.mxu0 0
    %565 = vmatpush2.bf16.xpose.msra.mxu0 0
    %566 = vmatprep.subr.bf16.mxu0 0
    %567 = vmatpush2.bf16.xpose.msra.mxu0 0
    %568 = vmatprep.subr.bf16.mxu0 0
    %569 = vmatpush2.bf16.xpose.msra.mxu0 0
    %570 = vmatprep.subr.bf16.mxu0 0
    %571 = vmatpush2.bf16.xpose.msra.mxu0 0
    %572 = vmatprep.mubr.bf16.mxu0 0
    %573 = vmatmul.mubr.bf16.gmra.mxu0 %v529
    %v574 = vpop.f32.mrf.mxu0
    %v575 = vadd.f32 %v202, %v574
    %v576 = vpop.f32.mrf.mxu0
    %v577 = vpop.f32.mrf.mxu0
    %v578 = vadd.f32 %v203, %v577
    %v579 = vpop.f32.mrf.mxu0
    %580 = vmatprep.mubr.bf16.mxu0 0
    %581 = vmatmul.mubr.bf16.gmra.mxu0 %v532
    %v582 = vpop.f32.mrf.mxu0
    %v583 = vadd.f32 %v204, %v582
    %v584 = vpop.f32.mrf.mxu0
    %v585 = vpop.f32.mrf.mxu0
    %v586 = vpop.f32.mrf.mxu0
    %587 = vdwg.mxu0
    %v588 = vsel %vm415, %v575, -inf
    %589 = vmax.xlane.f32.xlu0 %v588
    %v590 = vpop.xlane.xlu0 %589
    %v591 = vsel %vm415, %v578, -inf
    %592 = vmax.xlane.f32.xlu0 %v591
    %v593 = vpop.xlane.xlu0 %592
    %v594 = vsel %vm422, %v583, -inf
    %595 = vmax.xlane.f32.xlu0 %v594
    %v596 = vpop.xlane.xlu0 %595
    %v597 = vsub.f32 %v575, %v590
    %v598 = vsub.f32 %v578, %v593
    %v599 = vsub.f32 %v583, %v596
    %v600 = vmul.f32 %v597, 1.442695
    %v601 = vpow.pop %v600
    %v602 = vmul.f32 %v598, 1.442695
    %v603 = vpow.pop %v602
    %v604 = vmul.f32 %v599, 1.442695
    %v605 = vpow.pop %v604
    %s606 = scalar_lea.vmem %s5, 24
    %v607 = vld [vmem:[%s606] sm:$0xff]
    %v608 = vld [vmem:[%s606 + $0x8] sm:$0xff]
    %v609 = vld [vmem:[%s606 + $0x10] sm:$0xf]
    %v610 = vmul.f32 %v601, %v607
    %v611 = vmul.f32 %v603, %v608
    %v612 = vmul.f32 %v605, %v609
    %v613 = vsel %vm415, %v610, 0.0
    %614 = vadd.xlane.f32.xlu0 %v613
    %v615 = vpop.xlane.xlu0 %614
    %v616 = vsel %vm415, %v611, 0.0
    %617 = vadd.xlane.f32.xlu0 %v616
    %v618 = vpop.xlane.xlu0 %617
    %v619 = vsel %vm422, %v612, 0.0
    %620 = vadd.xlane.f32.xlu0 %v619
    %v621 = vpop.xlane.xlu0 %620
    %v622 = vrcp.pop %v615
    %v623 = vrcp.pop %v618
    %v624 = vrcp.pop %v621
    %v625 = vmul.f32 %v610, %v622
    %v626 = vmul.f32 %v611, %v623
    %v627 = vmul.f32 %v612, %v624
    %v628 = vpack.c.bf16 %v626, %v625
    %v629 = vpack.c.bf16 %v627, %v627
    %630 = vrot.lane.b32.xlu0 %v346, 56
    %v631 = vpop.permute.xlu0 %630
    %632 = vrot.lane.b32.xlu0 %v347, 56
    %v633 = vpop.permute.xlu0 %632
    %v636 = vsel %vm415, %v628, 0
    %v639 = vsel %vm415, %v629, 0
    %v642 = vsel %vm105, %v633, 0
    %644 = vmatprep.subr.bf16.mxu0 0
    %645 = vmatpush1.bf16.msra.mxu0 0
    %646 = vmatprep.subr.bf16.mxu0 0
    %647 = vmatpush1.bf16.msra.mxu0 0
    %648 = vmatprep.subr.bf16.mxu0 0
    %649 = vmatpush1.bf16.msra.mxu0 0
    %650 = vmatprep.subr.bf16.mxu0 0
    %651 = vmatpush1.bf16.msra.mxu0 0
    %652 = vmatprep.subr.bf16.mxu0 0
    %653 = vmatpush1.bf16.msra.mxu0 0
    %654 = vmatprep.subr.bf16.mxu0 0
    %655 = vmatpush1.bf16.msra.mxu0 0
    %656 = vmatprep.subr.bf16.mxu0 0
    %657 = vmatpush1.bf16.msra.mxu0 %v642
    %658 = vmatprep.subr.bf16.mxu0 0
    %659 = vmatpush1.bf16.msra.mxu0 %v631
    %660 = vmatprep.subr.bf16.mxu0 0
    %661 = vmatpush2.bf16.msra.mxu0 0
    %662 = vmatprep.subr.bf16.mxu0 0
    %663 = vmatpush2.bf16.msra.mxu0 0
    %664 = vmatprep.subr.bf16.mxu0 0
    %665 = vmatpush2.bf16.msra.mxu0 0
    %666 = vmatprep.subr.bf16.mxu0 0
    %667 = vmatpush2.bf16.msra.mxu0 0
    %668 = vmatprep.subr.bf16.mxu0 0
    %669 = vmatpush2.bf16.msra.mxu0 0
    %670 = vmatprep.subr.bf16.mxu0 0
    %671 = vmatpush2.bf16.msra.mxu0 0
    %672 = vmatprep.subr.bf16.mxu0 0
    %673 = vmatpush2.bf16.msra.mxu0 0
    %674 = vmatprep.subr.bf16.mxu0 0
    %675 = vmatpush2.bf16.msra.mxu0 0
    %676 = vmatprep.mubr.bf16.mxu0 0
    %677 = vmatmul.mubr.bf16.gmra.mxu0 %v636
    %v678 = vpop.f32.mrf.mxu0
    %v679 = vadd.f32 0.0, %v678
    %v680 = vpop.f32.mrf.mxu0
    %v681 = vpop.f32.mrf.mxu0
    %v682 = vadd.f32 0.0, %v681
    %v683 = vpop.f32.mrf.mxu0
    %684 = vmatprep.mubr.bf16.mxu0 0
    %685 = vmatmul.mubr.bf16.gmra.mxu0 %v639
    %v686 = vpop.f32.mrf.mxu0
    %v687 = vadd.f32 0.0, %v686
    %v688 = vpop.f32.mrf.mxu0
    %v689 = vpop.f32.mrf.mxu0
    %v690 = vpop.f32.mrf.mxu0
    %691 = vdwg.mxu0
    %692 = vrot.lane.b32.xlu0 %v346, 112
    %v693 = vpop.permute.xlu0 %692
    %694 = vrot.lane.b32.xlu0 %v347, 112
    %v695 = vpop.permute.xlu0 %694
    %696 = vrot.lane.b32.xlu0 %v346, 80
    %v697 = vpop.permute.xlu0 %696
    %698 = vrot.lane.b32.xlu0 %v347, 80
    %v699 = vpop.permute.xlu0 %698
    %v701 = vsel %vm354, %v693, 0
    %v704 = vsel %vm354, %v695, 0
    %v707 = vsel %vm354, %v697, 0
    %v710 = vsel %vm354, %v699, 0
    %712 = vmatprep.subr.bf16.mxu0 0
    %713 = vmatpush1.bf16.xpose.msra.mxu0 0
    %714 = vmatprep.subr.bf16.mxu0 0
    %715 = vmatpush1.bf16.xpose.msra.mxu0 0
    %716 = vmatprep.subr.bf16.mxu0 0
    %717 = vmatpush1.bf16.xpose.msra.mxu0 0
    %718 = vmatprep.subr.bf16.mxu0 0
    %719 = vmatpush1.bf16.xpose.msra.mxu0 0
    %720 = vmatprep.subr.bf16.mxu0 0
    %721 = vmatpush1.bf16.xpose.msra.mxu0 0
    %722 = vmatprep.subr.bf16.mxu0 0
    %723 = vmatpush1.bf16.xpose.msra.mxu0 0
    %724 = vmatprep.subr.bf16.mxu0 0
    %725 = vmatpush1.bf16.xpose.msra.mxu0 %v710
    %726 = vmatprep.subr.bf16.mxu0 0
    %727 = vmatpush1.bf16.xpose.msra.mxu0 %v707
    %728 = vmatprep.subr.bf16.mxu0 0
    %729 = vmatpush2.bf16.xpose.msra.mxu0 0
    %730 = vmatprep.subr.bf16.mxu0 0
    %731 = vmatpush2.bf16.xpose.msra.mxu0 0
    %732 = vmatprep.subr.bf16.mxu0 0
    %733 = vmatpush2.bf16.xpose.msra.mxu0 0
    %734 = vmatprep.subr.bf16.mxu0 0
    %735 = vmatpush2.bf16.xpose.msra.mxu0 0
    %736 = vmatprep.subr.bf16.mxu0 0
    %737 = vmatpush2.bf16.xpose.msra.mxu0 0
    %738 = vmatprep.subr.bf16.mxu0 0
    %739 = vmatpush2.bf16.xpose.msra.mxu0 0
    %740 = vmatprep.subr.bf16.mxu0 0
    %741 = vmatpush2.bf16.xpose.msra.mxu0 0
    %742 = vmatprep.subr.bf16.mxu0 0
    %743 = vmatpush2.bf16.xpose.msra.mxu0 0
    %744 = vmatprep.mubr.bf16.mxu0 0
    %745 = vmatmul.mubr.bf16.gmra.mxu0 %v701
    %v746 = vpop.f32.mrf.mxu0
    %v747 = vadd.f32 %v202, %v746
    %v748 = vpop.f32.mrf.mxu0
    %v749 = vpop.f32.mrf.mxu0
    %v750 = vadd.f32 %v203, %v749
    %v751 = vpop.f32.mrf.mxu0
    %752 = vmatprep.mubr.bf16.mxu0 0
    %753 = vmatmul.mubr.bf16.gmra.mxu0 %v704
    %v754 = vpop.f32.mrf.mxu0
    %v755 = vadd.f32 %v204, %v754
    %v756 = vpop.f32.mrf.mxu0
    %v757 = vpop.f32.mrf.mxu0
    %v758 = vpop.f32.mrf.mxu0
    %759 = vdwg.mxu0
    %v760 = vsel %vm415, %v747, -inf
    %761 = vmax.xlane.f32.xlu0 %v760
    %v762 = vpop.xlane.xlu0 %761
    %v763 = vsel %vm415, %v750, -inf
    %764 = vmax.xlane.f32.xlu0 %v763
    %v765 = vpop.xlane.xlu0 %764
    %v766 = vsel %vm422, %v755, -inf
    %767 = vmax.xlane.f32.xlu0 %v766
    %v768 = vpop.xlane.xlu0 %767
    %v769 = vsub.f32 %v747, %v762
    %v770 = vsub.f32 %v750, %v765
    %v771 = vsub.f32 %v755, %v768
    %v772 = vmul.f32 %v769, 1.442695
    %v773 = vpow.pop %v772
    %v774 = vmul.f32 %v770, 1.442695
    %v775 = vpow.pop %v774
    %v776 = vmul.f32 %v771, 1.442695
    %v777 = vpow.pop %v776
    %s778 = scalar_lea.vmem %s5, 48
    %v779 = vld [vmem:[%s778] sm:$0xff]
    %v780 = vld [vmem:[%s778 + $0x8] sm:$0xff]
    %v781 = vld [vmem:[%s778 + $0x10] sm:$0xf]
    %v782 = vmul.f32 %v773, %v779
    %v783 = vmul.f32 %v775, %v780
    %v784 = vmul.f32 %v777, %v781
    %v785 = vsel %vm415, %v782, 0.0
    %786 = vadd.xlane.f32.xlu0 %v785
    %v787 = vpop.xlane.xlu0 %786
    %v788 = vsel %vm415, %v783, 0.0
    %789 = vadd.xlane.f32.xlu0 %v788
    %v790 = vpop.xlane.xlu0 %789
    %v791 = vsel %vm422, %v784, 0.0
    %792 = vadd.xlane.f32.xlu0 %v791
    %v793 = vpop.xlane.xlu0 %792
    %v794 = vrcp.pop %v787
    %v795 = vrcp.pop %v790
    %v796 = vrcp.pop %v793
    %v797 = vmul.f32 %v782, %v794
    %v798 = vmul.f32 %v783, %v795
    %v799 = vmul.f32 %v784, %v796
    %v800 = vpack.c.bf16 %v798, %v797
    %v801 = vpack.c.bf16 %v799, %v799
    %802 = vrot.lane.b32.xlu0 %v346, 48
    %v803 = vpop.permute.xlu0 %802
    %804 = vrot.lane.b32.xlu0 %v347, 48
    %v805 = vpop.permute.xlu0 %804
    %v808 = vsel %vm415, %v800, 0
    %v811 = vsel %vm415, %v801, 0
    %v814 = vsel %vm105, %v805, 0
    %816 = vmatprep.subr.bf16.mxu0 0
    %817 = vmatpush1.bf16.msra.mxu0 0
    %818 = vmatprep.subr.bf16.mxu0 0
    %819 = vmatpush1.bf16.msra.mxu0 0
    %820 = vmatprep.subr.bf16.mxu0 0
    %821 = vmatpush1.bf16.msra.mxu0 0
    %822 = vmatprep.subr.bf16.mxu0 0
    %823 = vmatpush1.bf16.msra.mxu0 0
    %824 = vmatprep.subr.bf16.mxu0 0
    %825 = vmatpush1.bf16.msra.mxu0 0
    %826 = vmatprep.subr.bf16.mxu0 0
    %827 = vmatpush1.bf16.msra.mxu0 0
    %828 = vmatprep.subr.bf16.mxu0 0
    %829 = vmatpush1.bf16.msra.mxu0 %v814
    %830 = vmatprep.subr.bf16.mxu0 0
    %831 = vmatpush1.bf16.msra.mxu0 %v803
    %832 = vmatprep.subr.bf16.mxu0 0
    %833 = vmatpush2.bf16.msra.mxu0 0
    %834 = vmatprep.subr.bf16.mxu0 0
    %835 = vmatpush2.bf16.msra.mxu0 0
    %836 = vmatprep.subr.bf16.mxu0 0
    %837 = vmatpush2.bf16.msra.mxu0 0
    %838 = vmatprep.subr.bf16.mxu0 0
    %839 = vmatpush2.bf16.msra.mxu0 0
    %840 = vmatprep.subr.bf16.mxu0 0
    %841 = vmatpush2.bf16.msra.mxu0 0
    %842 = vmatprep.subr.bf16.mxu0 0
    %843 = vmatpush2.bf16.msra.mxu0 0
    %844 = vmatprep.subr.bf16.mxu0 0
    %845 = vmatpush2.bf16.msra.mxu0 0
    %846 = vmatprep.subr.bf16.mxu0 0
    %847 = vmatpush2.bf16.msra.mxu0 0
    %848 = vmatprep.mubr.bf16.mxu0 0
    %849 = vmatmul.mubr.bf16.gmra.mxu0 %v808
    %v850 = vpop.f32.mrf.mxu0
    %v851 = vadd.f32 0.0, %v850
    %v852 = vpop.f32.mrf.mxu0
    %v853 = vpop.f32.mrf.mxu0
    %v854 = vadd.f32 0.0, %v853
    %v855 = vpop.f32.mrf.mxu0
    %856 = vmatprep.mubr.bf16.mxu0 0
    %857 = vmatmul.mubr.bf16.gmra.mxu0 %v811
    %v858 = vpop.f32.mrf.mxu0
    %v859 = vadd.f32 0.0, %v858
    %v860 = vpop.f32.mrf.mxu0
    %v861 = vpop.f32.mrf.mxu0
    %v862 = vpop.f32.mrf.mxu0
    %863 = vdwg.mxu0
    %864 = vrot.lane.b32.xlu0 %v346, 104
    %v865 = vpop.permute.xlu0 %864
    %866 = vrot.lane.b32.xlu0 %v347, 104
    %v867 = vpop.permute.xlu0 %866
    %868 = vrot.lane.b32.xlu0 %v346, 72
    %v869 = vpop.permute.xlu0 %868
    %870 = vrot.lane.b32.xlu0 %v347, 72
    %v871 = vpop.permute.xlu0 %870
    %v873 = vsel %vm354, %v865, 0
    %v876 = vsel %vm354, %v867, 0
    %v879 = vsel %vm354, %v869, 0
    %v882 = vsel %vm354, %v871, 0
    %884 = vmatprep.subr.bf16.mxu0 0
    %885 = vmatpush1.bf16.xpose.msra.mxu0 0
    %886 = vmatprep.subr.bf16.mxu0 0
    %887 = vmatpush1.bf16.xpose.msra.mxu0 0
    %888 = vmatprep.subr.bf16.mxu0 0
    %889 = vmatpush1.bf16.xpose.msra.mxu0 0
    %890 = vmatprep.subr.bf16.mxu0 0
    %891 = vmatpush1.bf16.xpose.msra.mxu0 0
    %892 = vmatprep.subr.bf16.mxu0 0
    %893 = vmatpush1.bf16.xpose.msra.mxu0 0
    %894 = vmatprep.subr.bf16.mxu0 0
    %895 = vmatpush1.bf16.xpose.msra.mxu0 0
    %896 = vmatprep.subr.bf16.mxu0 0
    %897 = vmatpush1.bf16.xpose.msra.mxu0 %v882
    %898 = vmatprep.subr.bf16.mxu0 0
    %899 = vmatpush1.bf16.xpose.msra.mxu0 %v879
    %900 = vmatprep.subr.bf16.mxu0 0
    %901 = vmatpush2.bf16.xpose.msra.mxu0 0
    %902 = vmatprep.subr.bf16.mxu0 0
    %903 = vmatpush2.bf16.xpose.msra.mxu0 0
    %904 = vmatprep.subr.bf16.mxu0 0
    %905 = vmatpush2.bf16.xpose.msra.mxu0 0
    %906 = vmatprep.subr.bf16.mxu0 0
    %907 = vmatpush2.bf16.xpose.msra.mxu0 0
    %908 = vmatprep.subr.bf16.mxu0 0
    %909 = vmatpush2.bf16.xpose.msra.mxu0 0
    %910 = vmatprep.subr.bf16.mxu0 0
    %911 = vmatpush2.bf16.xpose.msra.mxu0 0
    %912 = vmatprep.subr.bf16.mxu0 0
    %913 = vmatpush2.bf16.xpose.msra.mxu0 0
    %914 = vmatprep.subr.bf16.mxu0 0
    %915 = vmatpush2.bf16.xpose.msra.mxu0 0
    %916 = vmatprep.mubr.bf16.mxu0 0
    %917 = vmatmul.mubr.bf16.gmra.mxu0 %v873
    %v918 = vpop.f32.mrf.mxu0
    %v919 = vadd.f32 %v202, %v918
    %v920 = vpop.f32.mrf.mxu0
    %v921 = vpop.f32.mrf.mxu0
    %v922 = vadd.f32 %v203, %v921
    %v923 = vpop.f32.mrf.mxu0
    %924 = vmatprep.mubr.bf16.mxu0 0
    %925 = vmatmul.mubr.bf16.gmra.mxu0 %v876
    %v926 = vpop.f32.mrf.mxu0
    %v927 = vadd.f32 %v204, %v926
    %v928 = vpop.f32.mrf.mxu0
    %v929 = vpop.f32.mrf.mxu0
    %v930 = vpop.f32.mrf.mxu0
    %931 = vdwg.mxu0
    %v932 = vsel %vm415, %v919, -inf
    %933 = vmax.xlane.f32.xlu0 %v932
    %v934 = vpop.xlane.xlu0 %933
    %v935 = vsel %vm415, %v922, -inf
    %936 = vmax.xlane.f32.xlu0 %v935
    %v937 = vpop.xlane.xlu0 %936
    %v938 = vsel %vm422, %v927, -inf
    %939 = vmax.xlane.f32.xlu0 %v938
    %v940 = vpop.xlane.xlu0 %939
    %v941 = vsub.f32 %v919, %v934
    %v942 = vsub.f32 %v922, %v937
    %v943 = vsub.f32 %v927, %v940
    %v944 = vmul.f32 %v941, 1.442695
    %v945 = vpow.pop %v944
    %v946 = vmul.f32 %v942, 1.442695
    %v947 = vpow.pop %v946
    %v948 = vmul.f32 %v943, 1.442695
    %v949 = vpow.pop %v948
    %s950 = scalar_lea.vmem %s5, 72
    %v951 = vld [vmem:[%s950] sm:$0xff]
    %v952 = vld [vmem:[%s950 + $0x8] sm:$0xff]
    %v953 = vld [vmem:[%s950 + $0x10] sm:$0xf]
    %v954 = vmul.f32 %v945, %v951
    %v955 = vmul.f32 %v947, %v952
    %v956 = vmul.f32 %v949, %v953
    %v957 = vsel %vm415, %v954, 0.0
    %958 = vadd.xlane.f32.xlu0 %v957
    %v959 = vpop.xlane.xlu0 %958
    %v960 = vsel %vm415, %v955, 0.0
    %961 = vadd.xlane.f32.xlu0 %v960
    %v962 = vpop.xlane.xlu0 %961
    %v963 = vsel %vm422, %v956, 0.0
    %964 = vadd.xlane.f32.xlu0 %v963
    %v965 = vpop.xlane.xlu0 %964
    %v966 = vrcp.pop %v959
    %v967 = vrcp.pop %v962
    %v968 = vrcp.pop %v965
    %v969 = vmul.f32 %v954, %v966
    %v970 = vmul.f32 %v955, %v967
    %v971 = vmul.f32 %v956, %v968
    %v972 = vpack.c.bf16 %v970, %v969
    %v973 = vpack.c.bf16 %v971, %v971
    %974 = vrot.lane.b32.xlu0 %v346, 40
    %v975 = vpop.permute.xlu0 %974
    %976 = vrot.lane.b32.xlu0 %v347, 40
    %v977 = vpop.permute.xlu0 %976
    %v980 = vsel %vm415, %v972, 0
    %v983 = vsel %vm415, %v973, 0
    %v986 = vsel %vm105, %v977, 0
    %988 = vmatprep.subr.bf16.mxu0 0
    %989 = vmatpush1.bf16.msra.mxu0 0
    %990 = vmatprep.subr.bf16.mxu0 0
    %991 = vmatpush1.bf16.msra.mxu0 0
    %992 = vmatprep.subr.bf16.mxu0 0
    %993 = vmatpush1.bf16.msra.mxu0 0
    %994 = vmatprep.subr.bf16.mxu0 0
    %995 = vmatpush1.bf16.msra.mxu0 0
    %996 = vmatprep.subr.bf16.mxu0 0
    %997 = vmatpush1.bf16.msra.mxu0 0
    %998 = vmatprep.subr.bf16.mxu0 0
    %999 = vmatpush1.bf16.msra.mxu0 0
    %1000 = vmatprep.subr.bf16.mxu0 0
    %1001 = vmatpush1.bf16.msra.mxu0 %v986
    %1002 = vmatprep.subr.bf16.mxu0 0
    %1003 = vmatpush1.bf16.msra.mxu0 %v975
    %1004 = vmatprep.subr.bf16.mxu0 0
    %1005 = vmatpush2.bf16.msra.mxu0 0
    %1006 = vmatprep.subr.bf16.mxu0 0
    %1007 = vmatpush2.bf16.msra.mxu0 0
    %1008 = vmatprep.subr.bf16.mxu0 0
    %1009 = vmatpush2.bf16.msra.mxu0 0
    %1010 = vmatprep.subr.bf16.mxu0 0
    %1011 = vmatpush2.bf16.msra.mxu0 0
    %1012 = vmatprep.subr.bf16.mxu0 0
    %1013 = vmatpush2.bf16.msra.mxu0 0
    %1014 = vmatprep.subr.bf16.mxu0 0
    %1015 = vmatpush2.bf16.msra.mxu0 0
    %1016 = vmatprep.subr.bf16.mxu0 0
    %1017 = vmatpush2.bf16.msra.mxu0 0
    %1018 = vmatprep.subr.bf16.mxu0 0
    %1019 = vmatpush2.bf16.msra.mxu0 0
    %1020 = vmatprep.mubr.bf16.mxu0 0
    %1021 = vmatmul.mubr.bf16.gmra.mxu0 %v980
    %v1022 = vpop.f32.mrf.mxu0
    %v1023 = vadd.f32 0.0, %v1022
    %v1024 = vpop.f32.mrf.mxu0
    %v1025 = vpop.f32.mrf.mxu0
    %v1026 = vadd.f32 0.0, %v1025
    %v1027 = vpop.f32.mrf.mxu0
    %1028 = vmatprep.mubr.bf16.mxu0 0
    %1029 = vmatmul.mubr.bf16.gmra.mxu0 %v983
    %v1030 = vpop.f32.mrf.mxu0
    %v1031 = vadd.f32 0.0, %v1030
    %v1032 = vpop.f32.mrf.mxu0
    %v1033 = vpop.f32.mrf.mxu0
    %v1034 = vpop.f32.mrf.mxu0
    %1035 = vdwg.mxu0
    %1039 = vrot.lane.b32.xlu0 %v679, 8
    %v1040 = vpop.permute.xlu0 %1039
    %1041 = vrot.lane.b32.xlu0 %v682, 8
    %v1042 = vpop.permute.xlu0 %1041
    %1043 = vrot.lane.b32.xlu0 %v687, 8
    %v1044 = vpop.permute.xlu0 %1043
    %1051 = vrot.lane.b32.xlu0 %v851, 16
    %v1052 = vpop.permute.xlu0 %1051
    %1053 = vrot.lane.b32.xlu0 %v854, 16
    %v1054 = vpop.permute.xlu0 %1053
    %1055 = vrot.lane.b32.xlu0 %v859, 16
    %v1056 = vpop.permute.xlu0 %1055
    %1063 = vrot.lane.b32.xlu0 %v1023, 24
    %v1064 = vpop.permute.xlu0 %1063
    %1065 = vrot.lane.b32.xlu0 %v1026, 24
    %v1066 = vpop.permute.xlu0 %1065
    %1067 = vrot.lane.b32.xlu0 %v1031, 24
    %v1068 = vpop.permute.xlu0 %1067
    %v1072 = vsel %vm354, %v507, %v1040
    %v1073 = vsel %vm354, %v510, %v1042
    %v1074 = vsel %vm354, %v515, %v1044
    %vm1075 = vcmask 130048
    %v1076 = vsel %vm1075, %v1072, %v1052
    %v1077 = vsel %vm1075, %v1073, %v1054
    %v1078 = vsel %vm1075, %v1074, %v1056
    %vm1079 = vcmask 195584
    %v1080 = vsel %vm1079, %v1076, %v1064
    %v1081 = vsel %vm1079, %v1077, %v1066
    %v1082 = vsel %vm1079, %v1078, %v1068
    %v1083 = vpack.c.bf16 %v1081, %v1080
    %v1084 = vpack.c.bf16 %v1082, %v1082
    %v1085 = vld [vmem:[%s10] sm:$0xf]
    %v1086 = vld [vmem:[%s10 + $0x4] sm:$0xf]
    %v1087 = vld [vmem:[%s10 + $0x8] sm:$0xf]
    %v1088 = vld [vmem:[%s10 + $0xc] sm:$0xf]
    %v1089 = vld [vmem:[%s11] sm:$0x1]
    %v1091 = vlaneseq
    %v1092 = vshrl.u32 %v1091, 7
    %v1093 = vsub.s32 0, %v1092
    %v1094 = vrot.slane %v1089, %v1093
    %v1100 = vunpack.c.l.b16 %v1085
    %v1101 = vunpack.c.l.b16 %v1086
    %v1102 = vunpack.c.l.b16 %v1087
    %v1103 = vunpack.c.l.b16 %v1088
    %v1104 = vpack.c.b16 %v1101, %v1100
    %v1105 = vpack.c.b16 %v1103, %v1102
    %v1109 = vsel %vm205, %v1083, 0
    %v1112 = vsel %vm205, %v1084, 0
    %1114 = vmatprep.subr.bf16.mxu0 0
    %1115 = vmatpush1.bf16.msra.mxu0 0
    %1116 = vmatprep.subr.bf16.mxu0 0
    %1117 = vmatpush1.bf16.msra.mxu0 0
    %1118 = vmatprep.subr.bf16.mxu0 0
    %1119 = vmatpush1.bf16.msra.mxu0 0
    %1120 = vmatprep.subr.bf16.mxu0 0
    %1121 = vmatpush1.bf16.msra.mxu0 0
    %1122 = vmatprep.subr.bf16.mxu0 0
    %1123 = vmatpush1.bf16.msra.mxu0 0
    %1124 = vmatprep.subr.bf16.mxu0 0
    %1125 = vmatpush1.bf16.msra.mxu0 0
    %1126 = vmatprep.subr.bf16.mxu0 0
    %1127 = vmatpush1.bf16.msra.mxu0 %v1105
    %1128 = vmatprep.subr.bf16.mxu0 0
    %1129 = vmatpush1.bf16.msra.mxu0 %v1104
    %1130 = vmatprep.subr.bf16.mxu0 0
    %1131 = vmatpush2.bf16.msra.mxu0 0
    %1132 = vmatprep.subr.bf16.mxu0 0
    %1133 = vmatpush2.bf16.msra.mxu0 0
    %1134 = vmatprep.subr.bf16.mxu0 0
    %1135 = vmatpush2.bf16.msra.mxu0 0
    %1136 = vmatprep.subr.bf16.mxu0 0
    %1137 = vmatpush2.bf16.msra.mxu0 0
    %1138 = vmatprep.subr.bf16.mxu0 0
    %1139 = vmatpush2.bf16.msra.mxu0 0
    %1140 = vmatprep.subr.bf16.mxu0 0
    %1141 = vmatpush2.bf16.msra.mxu0 0
    %1142 = vmatprep.subr.bf16.mxu0 0
    %1143 = vmatpush2.bf16.msra.mxu0 0
    %1144 = vmatprep.subr.bf16.mxu0 0
    %1145 = vmatpush2.bf16.msra.mxu0 0
    %1146 = vmatprep.mubr.bf16.mxu0 0
    %1147 = vmatmul.mubr.bf16.gmra.mxu0 %v1109
    %v1148 = vpop.f32.mrf.mxu0
    %v1149 = vadd.f32 %v1094, %v1148
    %v1150 = vpop.f32.mrf.mxu0
    %v1151 = vpop.f32.mrf.mxu0
    %v1152 = vadd.f32 %v1094, %v1151
    %v1153 = vpop.f32.mrf.mxu0
    %1154 = vmatprep.mubr.bf16.mxu0 0
    %1155 = vmatmul.mubr.bf16.gmra.mxu0 %v1112
    %v1156 = vpop.f32.mrf.mxu0
    %v1157 = vadd.f32 %v1094, %v1156
    %v1158 = vpop.f32.mrf.mxu0
    %v1159 = vpop.f32.mrf.mxu0
    %v1160 = vpop.f32.mrf.mxu0
    %1161 = vdwg.mxu0
    %v1162 = vadd.f32 %v199, %v1149
    %v1163 = vadd.f32 %v200, %v1152
    %v1164 = vadd.f32 %v201, %v1157
    %v1165 = vsel %vm205, %v1162, 0.0
    %1166 = vadd.xlane.f32.xlu0 %v1165
    %v1167 = vpop.xlane.xlu0 %1166
    %v1168 = vsel %vm205, %v1163, 0.0
    %1169 = vadd.xlane.f32.xlu0 %v1168
    %v1170 = vpop.xlane.xlu0 %1169
    %v1171 = vsel %vm212, %v1164, 0.0
    %1172 = vadd.xlane.f32.xlu0 %v1171
    %v1173 = vpop.xlane.xlu0 %1172
    %v1174 = vmul.f32 %v1167, %v216
    %v1175 = vmul.f32 %v1170, %v216
    %v1176 = vmul.f32 %v1173, %v216
    %v1177 = vsub.f32 %v1162, %v1174
    %v1178 = vsub.f32 %v1163, %v1175
    %v1179 = vsub.f32 %v1164, %v1176
    %v1180 = vmul.f32 %v1177, %v1177
    %v1181 = vmul.f32 %v1178, %v1178
    %v1182 = vmul.f32 %v1179, %v1179
    %v1183 = vsel %vm205, %v1180, 0.0
    %1184 = vadd.xlane.f32.xlu0 %v1183
    %v1185 = vpop.xlane.xlu0 %1184
    %v1186 = vsel %vm205, %v1181, 0.0
    %1187 = vadd.xlane.f32.xlu0 %v1186
    %v1188 = vpop.xlane.xlu0 %1187
    %v1189 = vsel %vm212, %v1182, 0.0
    %1190 = vadd.xlane.f32.xlu0 %v1189
    %v1191 = vpop.xlane.xlu0 %1190
    %v1192 = vmul.f32 %v1185, %v216
    %v1193 = vmul.f32 %v1188, %v216
    %v1194 = vmul.f32 %v1191, %v216
    %v1195 = vadd.f32 %v1192, 1e-05
    %v1196 = vadd.f32 %v1193, 1e-05
    %v1197 = vadd.f32 %v1194, 1e-05
    %v1198 = vrsqrt.pop %v1195
    %v1199 = vrsqrt.pop %v1196
    %v1200 = vrsqrt.pop %v1197
    %v1201 = vmul.f32 %v1177, %v1198
    %v1202 = vmul.f32 %v1178, %v1199
    %v1203 = vmul.f32 %v1179, %v1200
    %v1204 = vld [vmem:[%s12] sm:$0x1]
    %v1206 = vlaneseq
    %v1207 = vshrl.u32 %v1206, 7
    %v1208 = vsub.s32 0, %v1207
    %v1209 = vrot.slane %v1204, %v1208
    %v1211 = vmul.f32 %v1201, %v1209
    %v1212 = vmul.f32 %v1202, %v1209
    %v1213 = vmul.f32 %v1203, %v1209
    %v1214 = vld [vmem:[%s13] sm:$0x1]
    %v1216 = vlaneseq
    %v1217 = vshrl.u32 %v1216, 7
    %v1218 = vsub.s32 0, %v1217
    %v1219 = vrot.slane %v1214, %v1218
    %v1221 = vadd.f32 %v1211, %v1219
    %v1222 = vadd.f32 %v1212, %v1219
    %v1223 = vadd.f32 %v1213, %v1219
    %v1224 = vld [vmem:[%s14] sm:$0xff]
    %v1225 = vld [vmem:[%s14 + $0x8] sm:$0xff]
    %v1226 = vld [vmem:[%s14 + $0x10] sm:$0xff]
    %v1227 = vld [vmem:[%s14 + $0x18] sm:$0xff]
    %v1228 = vld [vmem:[%s15] sm:$0x1]
    %v1230 = vlaneseq
    %v1231 = vshrl.u32 %v1230, 7
    %v1232 = vsub.s32 0, %v1231
    %v1233 = vrot.slane %v1228, %v1232
    %v1236 = vsel %vm205, %v1221, 0
    %v1239 = vsel %vm205, %v1222, 0
    %v1242 = vsel %vm205, %v1223, 0
    %1244 = vmatprep.subr.mxu0 0.0
    %1245 = vmatpush1.msra.mxu0 0.0
    %1246 = vmatprep.subr.mxu0 0.0
    %1247 = vmatpush1.msra.mxu0 0.0
    %1248 = vmatprep.subr.mxu0 0.0
    %1249 = vmatpush1.msra.mxu0 0.0
    %1250 = vmatprep.subr.mxu0 0.0
    %1251 = vmatpush1.msra.mxu0 0.0
    %1252 = vmatprep.subr.mxu0 0.0
    %1253 = vmatpush1.msra.mxu0 0.0
    %1254 = vmatprep.subr.mxu0 0.0
    %1255 = vmatpush1.msra.mxu0 0.0
    %1256 = vmatprep.subr.mxu0 0.0
    %1257 = vmatpush1.msra.mxu0 0.0
    %1258 = vmatprep.subr.mxu0 0.0
    %1259 = vmatpush1.msra.mxu0 0.0
    %1260 = vmatprep.subr.mxu0 0.0
    %1261 = vmatpush1.msra.mxu0 0.0
    %1262 = vmatprep.subr.mxu0 0.0
    %1263 = vmatpush1.msra.mxu0 0.0
    %1264 = vmatprep.subr.mxu0 0.0
    %1265 = vmatpush1.msra.mxu0 0.0
    %1266 = vmatprep.subr.mxu0 0.0
    %1267 = vmatpush1.msra.mxu0 0.0
    %1268 = vmatprep.subr.mxu0 0.0
    %1269 = vmatpush1.msra.mxu0 %v1227
    %1270 = vmatprep.subr.mxu0 0.0
    %1271 = vmatpush1.msra.mxu0 %v1226
    %1272 = vmatprep.subr.mxu0 0.0
    %1273 = vmatpush1.msra.mxu0 %v1225
    %1274 = vmatprep.subr.mxu0 0.0
    %1275 = vmatpush1.msra.mxu0 %v1224
    %1276 = vmatprep.subr.mxu0 0.0
    %1277 = vmatpush2.msra.mxu0 0.0
    %1278 = vmatprep.subr.mxu0 0.0
    %1279 = vmatpush2.msra.mxu0 0.0
    %1280 = vmatprep.subr.mxu0 0.0
    %1281 = vmatpush2.msra.mxu0 0.0
    %1282 = vmatprep.subr.mxu0 0.0
    %1283 = vmatpush2.msra.mxu0 0.0
    %1284 = vmatprep.subr.mxu0 0.0
    %1285 = vmatpush2.msra.mxu0 0.0
    %1286 = vmatprep.subr.mxu0 0.0
    %1287 = vmatpush2.msra.mxu0 0.0
    %1288 = vmatprep.subr.mxu0 0.0
    %1289 = vmatpush2.msra.mxu0 0.0
    %1290 = vmatprep.subr.mxu0 0.0
    %1291 = vmatpush2.msra.mxu0 0.0
    %1292 = vmatprep.subr.mxu0 0.0
    %1293 = vmatpush2.msra.mxu0 0.0
    %1294 = vmatprep.subr.mxu0 0.0
    %1295 = vmatpush2.msra.mxu0 0.0
    %1296 = vmatprep.subr.mxu0 0.0
    %1297 = vmatpush2.msra.mxu0 0.0
    %1298 = vmatprep.subr.mxu0 0.0
    %1299 = vmatpush2.msra.mxu0 0.0
    %1300 = vmatprep.subr.mxu0 0.0
    %1301 = vmatpush2.msra.mxu0 0.0
    %1302 = vmatprep.subr.mxu0 0.0
    %1303 = vmatpush2.msra.mxu0 0.0
    %1304 = vmatprep.subr.mxu0 0.0
    %1305 = vmatpush2.msra.mxu0 0.0
    %1306 = vmatprep.subr.mxu0 0.0
    %1307 = vmatpush2.msra.mxu0 0.0
    %1308 = vmatprep.mubr.f32.mxu0 0.0
    %1309 = vmatmul.mubr.f32.gmra.mxu0 %v1236
    %v1310 = vpop.f32.mrf.mxu0
    %v1311 = vadd.f32 %v1233, %v1310
    %v1312 = vpop.f32.mrf.mxu0
    %1313 = vmatprep.mubr.f32.mxu0 0.0
    %1314 = vmatmul.mubr.f32.gmra.mxu0 %v1239
    %v1315 = vpop.f32.mrf.mxu0
    %v1316 = vadd.f32 %v1233, %v1315
    %v1317 = vpop.f32.mrf.mxu0
    %1318 = vmatprep.mubr.f32.mxu0 0.0
    %1319 = vmatmul.mubr.f32.gmra.mxu0 %v1242
    %v1320 = vpop.f32.mrf.mxu0
    %v1321 = vadd.f32 %v1233, %v1320
    %v1322 = vpop.f32.mrf.mxu0
    %1323 = vdwg.mxu0
    %v1324 = vmul.f32 %v1311, 0.5
    %v1325 = vmul.f32 %v1316, 0.5
    %v1326 = vmul.f32 %v1321, 0.5
    %v1327 = vmul.f32 %v1311, 0.044715
    %v1328 = vmul.f32 %v1316, 0.044715
    %v1329 = vmul.f32 %v1321, 0.044715
    %v1330 = vmul.f32 %v1327, %v1311
    %v1331 = vmul.f32 %v1328, %v1316
    %v1332 = vmul.f32 %v1329, %v1321
    %v1333 = vmul.f32 %v1330, %v1311
    %v1334 = vmul.f32 %v1331, %v1316
    %v1335 = vmul.f32 %v1332, %v1321
    %v1336 = vadd.f32 %v1311, %v1333
    %v1337 = vadd.f32 %v1316, %v1334
    %v1338 = vadd.f32 %v1321, %v1335
    %v1339 = vmul.f32 %v1336, 0.7978846
    %v1340 = vmul.f32 %v1337, 0.7978846
    %v1341 = vmul.f32 %v1338, 0.7978846
    %v1342 = vtanh.pop %v1339
    %v1343 = vtanh.pop %v1340
    %v1344 = vtanh.pop %v1341
    %v1345 = vadd.f32 %v1342, 1.0
    %v1346 = vadd.f32 %v1343, 1.0
    %v1347 = vadd.f32 %v1344, 1.0
    %v1348 = vmul.f32 %v1324, %v1345
    %v1349 = vmul.f32 %v1325, %v1346
    %v1350 = vmul.f32 %v1326, %v1347
    %v1351 = vld [vmem:[%s16] sm:$0xff]
    %v1352 = vld [vmem:[%s16 + $0x8] sm:$0xff]
    %v1353 = vld [vmem:[%s16 + $0x10] sm:$0xff]
    %v1354 = vld [vmem:[%s16 + $0x18] sm:$0xff]
    %v1355 = vld [vmem:[%s16 + $0x20] sm:$0xff]
    %v1356 = vld [vmem:[%s16 + $0x28] sm:$0xff]
    %v1357 = vld [vmem:[%s16 + $0x30] sm:$0xff]
    %v1358 = vld [vmem:[%s16 + $0x38] sm:$0xff]
    %v1359 = vld [vmem:[%s16 + $0x40] sm:$0xff]
    %v1360 = vld [vmem:[%s16 + $0x48] sm:$0xff]
    %v1361 = vld [vmem:[%s16 + $0x50] sm:$0xff]
    %v1362 = vld [vmem:[%s16 + $0x58] sm:$0xff]
    %v1363 = vld [vmem:[%s16 + $0x60] sm:$0xff]
    %v1364 = vld [vmem:[%s16 + $0x68] sm:$0xff]
    %v1365 = vld [vmem:[%s16 + $0x70] sm:$0xff]
    %v1366 = vld [vmem:[%s16 + $0x78] sm:$0xff]
    %v1367 = vld [vmem:[%s17] sm:$0x1]
    %v1369 = vlaneseq
    %v1370 = vshrl.u32 %v1369, 7
    %v1371 = vsub.s32 0, %v1370
    %v1372 = vrot.slane %v1367, %v1371
    %1374 = vmatprep.subr.mxu0 0.0
    %1375 = vmatpush1.msra.mxu0 %v1366
    %1376 = vmatprep.subr.mxu0 0.0
    %1377 = vmatpush1.msra.mxu0 %v1365
    %1378 = vmatprep.subr.mxu0 0.0
    %1379 = vmatpush1.msra.mxu0 %v1364
    %1380 = vmatprep.subr.mxu0 0.0
    %1381 = vmatpush1.msra.mxu0 %v1363
    %1382 = vmatprep.subr.mxu0 0.0
    %1383 = vmatpush1.msra.mxu0 %v1362
    %1384 = vmatprep.subr.mxu0 0.0
    %1385 = vmatpush1.msra.mxu0 %v1361
    %1386 = vmatprep.subr.mxu0 0.0
    %1387 = vmatpush1.msra.mxu0 %v1360
    %1388 = vmatprep.subr.mxu0 0.0
    %1389 = vmatpush1.msra.mxu0 %v1359
    %1390 = vmatprep.subr.mxu0 0.0
    %1391 = vmatpush1.msra.mxu0 %v1358
    %1392 = vmatprep.subr.mxu0 0.0
    %1393 = vmatpush1.msra.mxu0 %v1357
    %1394 = vmatprep.subr.mxu0 0.0
    %1395 = vmatpush1.msra.mxu0 %v1356
    %1396 = vmatprep.subr.mxu0 0.0
    %1397 = vmatpush1.msra.mxu0 %v1355
    %1398 = vmatprep.subr.mxu0 0.0
    %1399 = vmatpush1.msra.mxu0 %v1354
    %1400 = vmatprep.subr.mxu0 0.0
    %1401 = vmatpush1.msra.mxu0 %v1353
    %1402 = vmatprep.subr.mxu0 0.0
    %1403 = vmatpush1.msra.mxu0 %v1352
    %1404 = vmatprep.subr.mxu0 0.0
    %1405 = vmatpush1.msra.mxu0 %v1351
    %1406 = vmatprep.subr.mxu0 0.0
    %1407 = vmatpush2.msra.mxu0 0.0
    %1408 = vmatprep.subr.mxu0 0.0
    %1409 = vmatpush2.msra.mxu0 0.0
    %1410 = vmatprep.subr.mxu0 0.0
    %1411 = vmatpush2.msra.mxu0 0.0
    %1412 = vmatprep.subr.mxu0 0.0
    %1413 = vmatpush2.msra.mxu0 0.0
    %1414 = vmatprep.subr.mxu0 0.0
    %1415 = vmatpush2.msra.mxu0 0.0
    %1416 = vmatprep.subr.mxu0 0.0
    %1417 = vmatpush2.msra.mxu0 0.0
    %1418 = vmatprep.subr.mxu0 0.0
    %1419 = vmatpush2.msra.mxu0 0.0
    %1420 = vmatprep.subr.mxu0 0.0
    %1421 = vmatpush2.msra.mxu0 0.0
    %1422 = vmatprep.subr.mxu0 0.0
    %1423 = vmatpush2.msra.mxu0 0.0
    %1424 = vmatprep.subr.mxu0 0.0
    %1425 = vmatpush2.msra.mxu0 0.0
    %1426 = vmatprep.subr.mxu0 0.0
    %1427 = vmatpush2.msra.mxu0 0.0
    %1428 = vmatprep.subr.mxu0 0.0
    %1429 = vmatpush2.msra.mxu0 0.0
    %1430 = vmatprep.subr.mxu0 0.0
    %1431 = vmatpush2.msra.mxu0 0.0
    %1432 = vmatprep.subr.mxu0 0.0
    %1433 = vmatpush2.msra.mxu0 0.0
    %1434 = vmatprep.subr.mxu0 0.0
    %1435 = vmatpush2.msra.mxu0 0.0
    %1436 = vmatprep.subr.mxu0 0.0
    %1437 = vmatpush2.msra.mxu0 0.0
    %1438 = vmatprep.mubr.f32.mxu0 0.0
    %1439 = vmatmul.mubr.f32.gmra.mxu0 %v1348
    %v1440 = vpop.f32.mrf.mxu0
    %v1441 = vadd.f32 %v1372, %v1440
    %v1442 = vpop.f32.mrf.mxu0
    %1443 = vmatprep.mubr.f32.mxu0 0.0
    %1444 = vmatmul.mubr.f32.gmra.mxu0 %v1349
    %v1445 = vpop.f32.mrf.mxu0
    %v1446 = vadd.f32 %v1372, %v1445
    %v1447 = vpop.f32.mrf.mxu0
    %1448 = vmatprep.mubr.f32.mxu0 0.0
    %1449 = vmatmul.mubr.f32.gmra.mxu0 %v1350
    %v1450 = vpop.f32.mrf.mxu0
    %v1451 = vadd.f32 %v1372, %v1450
    %v1452 = vpop.f32.mrf.mxu0
    %1453 = vdwg.mxu0
    %v1454 = vadd.f32 %v1162, %v1441
    %v1455 = vadd.f32 %v1163, %v1446
    %v1456 = vadd.f32 %v1164, %v1451
    %v1457 = vsel %vm205, %v1454, 0.0
    %1458 = vadd.xlane.f32.xlu0 %v1457
    %v1459 = vpop.xlane.xlu0 %1458
    %v1460 = vsel %vm205, %v1455, 0.0
    %1461 = vadd.xlane.f32.xlu0 %v1460
    %v1462 = vpop.xlane.xlu0 %1461
    %v1463 = vsel %vm212, %v1456, 0.0
    %1464 = vadd.xlane.f32.xlu0 %v1463
    %v1465 = vpop.xlane.xlu0 %1464
    %v1466 = vmul.f32 %v1459, %v216
    %v1467 = vmul.f32 %v1462, %v216
    %v1468 = vmul.f32 %v1465, %v216
    %v1469 = vsub.f32 %v1454, %v1466
    %v1470 = vsub.f32 %v1455, %v1467
    %v1471 = vsub.f32 %v1456, %v1468
    %v1472 = vmul.f32 %v1469, %v1469
    %v1473 = vmul.f32 %v1470, %v1470
    %v1474 = vmul.f32 %v1471, %v1471
    %v1475 = vsel %vm205, %v1472, 0.0
    %1476 = vadd.xlane.f32.xlu0 %v1475
    %v1477 = vpop.xlane.xlu0 %1476
    %v1478 = vsel %vm205, %v1473, 0.0
    %1479 = vadd.xlane.f32.xlu0 %v1478
    %v1480 = vpop.xlane.xlu0 %1479
    %v1481 = vsel %vm212, %v1474, 0.0
    %1482 = vadd.xlane.f32.xlu0 %v1481
    %v1483 = vpop.xlane.xlu0 %1482
    %v1484 = vmul.f32 %v1477, %v216
    %v1485 = vmul.f32 %v1480, %v216
    %v1486 = vmul.f32 %v1483, %v216
    %v1487 = vadd.f32 %v1484, 1e-05
    %v1488 = vadd.f32 %v1485, 1e-05
    %v1489 = vadd.f32 %v1486, 1e-05
    %v1490 = vrsqrt.pop %v1487
    %v1491 = vrsqrt.pop %v1488
    %v1492 = vrsqrt.pop %v1489
    %v1493 = vmul.f32 %v1469, %v1490
    %v1494 = vmul.f32 %v1470, %v1491
    %v1495 = vmul.f32 %v1471, %v1492
    %s1496 = scalar_lea.vmem %s6, 1
    %v1497 = vld [vmem:[%s1496] sm:$0x1]
    %v1499 = vlaneseq
    %v1500 = vshrl.u32 %v1499, 7
    %v1501 = vsub.s32 0, %v1500
    %v1502 = vrot.slane %v1497, %v1501
    %v1504 = vmul.f32 %v1493, %v1502
    %v1505 = vmul.f32 %v1494, %v1502
    %v1506 = vmul.f32 %v1495, %v1502
    %s1507 = scalar_lea.vmem %s7, 1
    %v1508 = vld [vmem:[%s1507] sm:$0x1]
    %v1510 = vlaneseq
    %v1511 = vshrl.u32 %v1510, 7
    %v1512 = vsub.s32 0, %v1511
    %v1513 = vrot.slane %v1508, %v1512
    %v1515 = vadd.f32 %v1504, %v1513
    %v1516 = vadd.f32 %v1505, %v1513
    %v1517 = vadd.f32 %v1506, %v1513
    %v1518 = vpack.c.bf16 %v1516, %v1515
    %v1519 = vpack.c.bf16 %v1517, %v1517
    %s1520 = scalar_lea.vmem %s8, 16
    %v1521 = vld [vmem:[%s1520] sm:$0xf]
    %v1522 = vld [vmem:[%s1520 + $0x4] sm:$0xf]
    %v1523 = vld [vmem:[%s1520 + $0x8] sm:$0xf]
    %v1524 = vld [vmem:[%s1520 + $0xc] sm:$0xf]
    %s1525 = scalar_lea.vmem %s9, 1
    %v1526 = vld [vmem:[%s1525] sm:$0x1]
    %v1528 = vlaneseq
    %v1529 = vshrl.u32 %v1528, 7
    %v1530 = vsub.s32 0, %v1529
    %v1531 = vrot.slane %v1526, %v1530
    %v1537 = vunpack.c.l.b16 %v1521
    %v1538 = vunpack.c.l.b16 %v1522
    %v1539 = vunpack.c.l.b16 %v1523
    %v1540 = vunpack.c.l.b16 %v1524
    %v1541 = vpack.c.b16 %v1538, %v1537
    %v1542 = vpack.c.b16 %v1540, %v1539
    %v1546 = vsel %vm205, %v1518, 0
    %v1549 = vsel %vm205, %v1519, 0
    %1551 = vmatprep.subr.bf16.mxu0 0
    %1552 = vmatpush1.bf16.msra.mxu0 0
    %1553 = vmatprep.subr.bf16.mxu0 0
    %1554 = vmatpush1.bf16.msra.mxu0 0
    %1555 = vmatprep.subr.bf16.mxu0 0
    %1556 = vmatpush1.bf16.msra.mxu0 0
    %1557 = vmatprep.subr.bf16.mxu0 0
    %1558 = vmatpush1.bf16.msra.mxu0 0
    %1559 = vmatprep.subr.bf16.mxu0 0
    %1560 = vmatpush1.bf16.msra.mxu0 0
    %1561 = vmatprep.subr.bf16.mxu0 0
    %1562 = vmatpush1.bf16.msra.mxu0 0
    %1563 = vmatprep.subr.bf16.mxu0 0
    %1564 = vmatpush1.bf16.msra.mxu0 %v1542
    %1565 = vmatprep.subr.bf16.mxu0 0
    %1566 = vmatpush1.bf16.msra.mxu0 %v1541
    %1567 = vmatprep.subr.bf16.mxu0 0
    %1568 = vmatpush2.bf16.msra.mxu0 0
    %1569 = vmatprep.subr.bf16.mxu0 0
    %1570 = vmatpush2.bf16.msra.mxu0 0
    %1571 = vmatprep.subr.bf16.mxu0 0
    %1572 = vmatpush2.bf16.msra.mxu0 0
    %1573 = vmatprep.subr.bf16.mxu0 0
    %1574 = vmatpush2.bf16.msra.mxu0 0
    %1575 = vmatprep.subr.bf16.mxu0 0
    %1576 = vmatpush2.bf16.msra.mxu0 0
    %1577 = vmatprep.subr.bf16.mxu0 0
    %1578 = vmatpush2.bf16.msra.mxu0 0
    %1579 = vmatprep.subr.bf16.mxu0 0
    %1580 = vmatpush2.bf16.msra.mxu0 0
    %1581 = vmatprep.subr.bf16.mxu0 0
    %1582 = vmatpush2.bf16.msra.mxu0 0
    %1583 = vmatprep.mubr.bf16.mxu0 0
    %1584 = vmatmul.mubr.bf16.gmra.mxu0 %v1546
    %v1585 = vpop.f32.mrf.mxu0
    %v1586 = vadd.f32 %v1531, %v1585
    %v1587 = vpop.f32.mrf.mxu0
    %v1588 = vpop.f32.mrf.mxu0
    %v1589 = vadd.f32 %v1531, %v1588
    %v1590 = vpop.f32.mrf.mxu0
    %1591 = vmatprep.mubr.bf16.mxu0 0
    %1592 = vmatmul.mubr.bf16.gmra.mxu0 %v1549
    %v1593 = vpop.f32.mrf.mxu0
    %v1594 = vadd.f32 %v1531, %v1593
    %v1595 = vpop.f32.mrf.mxu0
    %v1596 = vpop.f32.mrf.mxu0
    %v1597 = vpop.f32.mrf.mxu0
    %1598 = vdwg.mxu0
    %v1599 = vpack.c.bf16 %v1589, %v1586
    %v1600 = vpack.c.bf16 %v1594, %v1594
    %1603 = vrot.lane.b32.xlu0 %v1599, 96
    %v1604 = vpop.permute.xlu0 %1603
    %1605 = vrot.lane.b32.xlu0 %v1600, 96
    %v1606 = vpop.permute.xlu0 %1605
    %v1608 = vsel %vm354, %v1599, 0
    %v1611 = vsel %vm354, %v1600, 0
    %v1614 = vsel %vm354, %v1604, 0
    %v1617 = vsel %vm354, %v1606, 0
    %1619 = vmatprep.subr.bf16.mxu0 0
    %1620 = vmatpush1.bf16.xpose.msra.mxu0 0
    %1621 = vmatprep.subr.bf16.mxu0 0
    %1622 = vmatpush1.bf16.xpose.msra.mxu0 0
    %1623 = vmatprep.subr.bf16.mxu0 0
    %1624 = vmatpush1.bf16.xpose.msra.mxu0 0
    %1625 = vmatprep.subr.bf16.mxu0 0
    %1626 = vmatpush1.bf16.xpose.msra.mxu0 0
    %1627 = vmatprep.subr.bf16.mxu0 0
    %1628 = vmatpush1.bf16.xpose.msra.mxu0 0
    %1629 = vmatprep.subr.bf16.mxu0 0
    %1630 = vmatpush1.bf16.xpose.msra.mxu0 0
    %1631 = vmatprep.subr.bf16.mxu0 0
    %1632 = vmatpush1.bf16.xpose.msra.mxu0 %v1617
    %1633 = vmatprep.subr.bf16.mxu0 0
    %1634 = vmatpush1.bf16.xpose.msra.mxu0 %v1614
    %1635 = vmatprep.subr.bf16.mxu0 0
    %1636 = vmatpush2.bf16.xpose.msra.mxu0 0
    %1637 = vmatprep.subr.bf16.mxu0 0
    %1638 = vmatpush2.bf16.xpose.msra.mxu0 0
    %1639 = vmatprep.subr.bf16.mxu0 0
    %1640 = vmatpush2.bf16.xpose.msra.mxu0 0
    %1641 = vmatprep.subr.bf16.mxu0 0
    %1642 = vmatpush2.bf16.xpose.msra.mxu0 0
    %1643 = vmatprep.subr.bf16.mxu0 0
    %1644 = vmatpush2.bf16.xpose.msra.mxu0 0
    %1645 = vmatprep.subr.bf16.mxu0 0
    %1646 = vmatpush2.bf16.xpose.msra.mxu0 0
    %1647 = vmatprep.subr.bf16.mxu0 0
    %1648 = vmatpush2.bf16.xpose.msra.mxu0 0
    %1649 = vmatprep.subr.bf16.mxu0 0
    %1650 = vmatpush2.bf16.xpose.msra.mxu0 0
    %1651 = vmatprep.mubr.bf16.mxu0 0
    %1652 = vmatmul.mubr.bf16.gmra.mxu0 %v1608
    %v1653 = vpop.f32.mrf.mxu0
    %v1654 = vadd.f32 %v202, %v1653
    %v1655 = vpop.f32.mrf.mxu0
    %v1656 = vpop.f32.mrf.mxu0
    %v1657 = vadd.f32 %v203, %v1656
    %v1658 = vpop.f32.mrf.mxu0
    %1659 = vmatprep.mubr.bf16.mxu0 0
    %1660 = vmatmul.mubr.bf16.gmra.mxu0 %v1611
    %v1661 = vpop.f32.mrf.mxu0
    %v1662 = vadd.f32 %v204, %v1661
    %v1663 = vpop.f32.mrf.mxu0
    %v1664 = vpop.f32.mrf.mxu0
    %v1665 = vpop.f32.mrf.mxu0
    %1666 = vdwg.mxu0
    %v1667 = vsel %vm415, %v1654, -inf
    %1668 = vmax.xlane.f32.xlu0 %v1667
    %v1669 = vpop.xlane.xlu0 %1668
    %v1670 = vsel %vm415, %v1657, -inf
    %1671 = vmax.xlane.f32.xlu0 %v1670
    %v1672 = vpop.xlane.xlu0 %1671
    %v1673 = vsel %vm422, %v1662, -inf
    %1674 = vmax.xlane.f32.xlu0 %v1673
    %v1675 = vpop.xlane.xlu0 %1674
    %v1676 = vsub.f32 %v1654, %v1669
    %v1677 = vsub.f32 %v1657, %v1672
    %v1678 = vsub.f32 %v1662, %v1675
    %v1679 = vmul.f32 %v1676, 1.442695
    %v1680 = vpow.pop %v1679
    %v1681 = vmul.f32 %v1677, 1.442695
    %v1682 = vpow.pop %v1681
    %v1683 = vmul.f32 %v1678, 1.442695
    %v1684 = vpow.pop %v1683
    %v1685 = vmul.f32 %v1680, %v435
    %v1686 = vmul.f32 %v1682, %v436
    %v1687 = vmul.f32 %v1684, %v437
    %v1688 = vsel %vm415, %v1685, 0.0
    %1689 = vadd.xlane.f32.xlu0 %v1688
    %v1690 = vpop.xlane.xlu0 %1689
    %v1691 = vsel %vm415, %v1686, 0.0
    %1692 = vadd.xlane.f32.xlu0 %v1691
    %v1693 = vpop.xlane.xlu0 %1692
    %v1694 = vsel %vm422, %v1687, 0.0
    %1695 = vadd.xlane.f32.xlu0 %v1694
    %v1696 = vpop.xlane.xlu0 %1695
    %v1697 = vrcp.pop %v1690
    %v1698 = vrcp.pop %v1693
    %v1699 = vrcp.pop %v1696
    %v1700 = vmul.f32 %v1685, %v1697
    %v1701 = vmul.f32 %v1686, %v1698
    %v1702 = vmul.f32 %v1687, %v1699
    %v1703 = vpack.c.bf16 %v1701, %v1700
    %v1704 = vpack.c.bf16 %v1702, %v1702
    %1705 = vrot.lane.b32.xlu0 %v1599, 64
    %v1706 = vpop.permute.xlu0 %1705
    %1707 = vrot.lane.b32.xlu0 %v1600, 64
    %v1708 = vpop.permute.xlu0 %1707
    %v1711 = vsel %vm415, %v1703, 0
    %v1714 = vsel %vm415, %v1704, 0
    %v1717 = vsel %vm105, %v1708, 0
    %1719 = vmatprep.subr.bf16.mxu0 0
    %1720 = vmatpush1.bf16.msra.mxu0 0
    %1721 = vmatprep.subr.bf16.mxu0 0
    %1722 = vmatpush1.bf16.msra.mxu0 0
    %1723 = vmatprep.subr.bf16.mxu0 0
    %1724 = vmatpush1.bf16.msra.mxu0 0
    %1725 = vmatprep.subr.bf16.mxu0 0
    %1726 = vmatpush1.bf16.msra.mxu0 0
    %1727 = vmatprep.subr.bf16.mxu0 0
    %1728 = vmatpush1.bf16.msra.mxu0 0
    %1729 = vmatprep.subr.bf16.mxu0 0
    %1730 = vmatpush1.bf16.msra.mxu0 0
    %1731 = vmatprep.subr.bf16.mxu0 0
    %1732 = vmatpush1.bf16.msra.mxu0 %v1717
    %1733 = vmatprep.subr.bf16.mxu0 0
    %1734 = vmatpush1.bf16.msra.mxu0 %v1706
    %1735 = vmatprep.subr.bf16.mxu0 0
    %1736 = vmatpush2.bf16.msra.mxu0 0
    %1737 = vmatprep.subr.bf16.mxu0 0
    %1738 = vmatpush2.bf16.msra.mxu0 0
    %1739 = vmatprep.subr.bf16.mxu0 0
    %1740 = vmatpush2.bf16.msra.mxu0 0
    %1741 = vmatprep.subr.bf16.mxu0 0
    %1742 = vmatpush2.bf16.msra.mxu0 0
    %1743 = vmatprep.subr.bf16.mxu0 0
    %1744 = vmatpush2.bf16.msra.mxu0 0
    %1745 = vmatprep.subr.bf16.mxu0 0
    %1746 = vmatpush2.bf16.msra.mxu0 0
    %1747 = vmatprep.subr.bf16.mxu0 0
    %1748 = vmatpush2.bf16.msra.mxu0 0
    %1749 = vmatprep.subr.bf16.mxu0 0
    %1750 = vmatpush2.bf16.msra.mxu0 0
    %1751 = vmatprep.mubr.bf16.mxu0 0
    %1752 = vmatmul.mubr.bf16.gmra.mxu0 %v1711
    %v1753 = vpop.f32.mrf.mxu0
    %v1754 = vadd.f32 0.0, %v1753
    %v1755 = vpop.f32.mrf.mxu0
    %v1756 = vpop.f32.mrf.mxu0
    %v1757 = vadd.f32 0.0, %v1756
    %v1758 = vpop.f32.mrf.mxu0
    %1759 = vmatprep.mubr.bf16.mxu0 0
    %1760 = vmatmul.mubr.bf16.gmra.mxu0 %v1714
    %v1761 = vpop.f32.mrf.mxu0
    %v1762 = vadd.f32 0.0, %v1761
    %v1763 = vpop.f32.mrf.mxu0
    %v1764 = vpop.f32.mrf.mxu0
    %v1765 = vpop.f32.mrf.mxu0
    %1766 = vdwg.mxu0
    %1767 = vrot.lane.b32.xlu0 %v1599, 120
    %v1768 = vpop.permute.xlu0 %1767
    %1769 = vrot.lane.b32.xlu0 %v1600, 120
    %v1770 = vpop.permute.xlu0 %1769
    %1771 = vrot.lane.b32.xlu0 %v1599, 88
    %v1772 = vpop.permute.xlu0 %1771
    %1773 = vrot.lane.b32.xlu0 %v1600, 88
    %v1774 = vpop.permute.xlu0 %1773
    %v1776 = vsel %vm354, %v1768, 0
    %v1779 = vsel %vm354, %v1770, 0
    %v1782 = vsel %vm354, %v1772, 0
    %v1785 = vsel %vm354, %v1774, 0
    %1787 = vmatprep.subr.bf16.mxu0 0
    %1788 = vmatpush1.bf16.xpose.msra.mxu0 0
    %1789 = vmatprep.subr.bf16.mxu0 0
    %1790 = vmatpush1.bf16.xpose.msra.mxu0 0
    %1791 = vmatprep.subr.bf16.mxu0 0
    %1792 = vmatpush1.bf16.xpose.msra.mxu0 0
    %1793 = vmatprep.subr.bf16.mxu0 0
    %1794 = vmatpush1.bf16.xpose.msra.mxu0 0
    %1795 = vmatprep.subr.bf16.mxu0 0
    %1796 = vmatpush1.bf16.xpose.msra.mxu0 0
    %1797 = vmatprep.subr.bf16.mxu0 0
    %1798 = vmatpush1.bf16.xpose.msra.mxu0 0
    %1799 = vmatprep.subr.bf16.mxu0 0
    %1800 = vmatpush1.bf16.xpose.msra.mxu0 %v1785
    %1801 = vmatprep.subr.bf16.mxu0 0
    %1802 = vmatpush1.bf16.xpose.msra.mxu0 %v1782
    %1803 = vmatprep.subr.bf16.mxu0 0
    %1804 = vmatpush2.bf16.xpose.msra.mxu0 0
    %1805 = vmatprep.subr.bf16.mxu0 0
    %1806 = vmatpush2.bf16.xpose.msra.mxu0 0
    %1807 = vmatprep.subr.bf16.mxu0 0
    %1808 = vmatpush2.bf16.xpose.msra.mxu0 0
    %1809 = vmatprep.subr.bf16.mxu0 0
    %1810 = vmatpush2.bf16.xpose.msra.mxu0 0
    %1811 = vmatprep.subr.bf16.mxu0 0
    %1812 = vmatpush2.bf16.xpose.msra.mxu0 0
    %1813 = vmatprep.subr.bf16.mxu0 0
    %1814 = vmatpush2.bf16.xpose.msra.mxu0 0
    %1815 = vmatprep.subr.bf16.mxu0 0
    %1816 = vmatpush2.bf16.xpose.msra.mxu0 0
    %1817 = vmatprep.subr.bf16.mxu0 0
    %1818 = vmatpush2.bf16.xpose.msra.mxu0 0
    %1819 = vmatprep.mubr.bf16.mxu0 0
    %1820 = vmatmul.mubr.bf16.gmra.mxu0 %v1776
    %v1821 = vpop.f32.mrf.mxu0
    %v1822 = vadd.f32 %v202, %v1821
    %v1823 = vpop.f32.mrf.mxu0
    %v1824 = vpop.f32.mrf.mxu0
    %v1825 = vadd.f32 %v203, %v1824
    %v1826 = vpop.f32.mrf.mxu0
    %1827 = vmatprep.mubr.bf16.mxu0 0
    %1828 = vmatmul.mubr.bf16.gmra.mxu0 %v1779
    %v1829 = vpop.f32.mrf.mxu0
    %v1830 = vadd.f32 %v204, %v1829
    %v1831 = vpop.f32.mrf.mxu0
    %v1832 = vpop.f32.mrf.mxu0
    %v1833 = vpop.f32.mrf.mxu0
    %1834 = vdwg.mxu0
    %v1835 = vsel %vm415, %v1822, -inf
    %1836 = vmax.xlane.f32.xlu0 %v1835
    %v1837 = vpop.xlane.xlu0 %1836
    %v1838 = vsel %vm415, %v1825, -inf
    %1839 = vmax.xlane.f32.xlu0 %v1838
    %v1840 = vpop.xlane.xlu0 %1839
    %v1841 = vsel %vm422, %v1830, -inf
    %1842 = vmax.xlane.f32.xlu0 %v1841
    %v1843 = vpop.xlane.xlu0 %1842
    %v1844 = vsub.f32 %v1822, %v1837
    %v1845 = vsub.f32 %v1825, %v1840
    %v1846 = vsub.f32 %v1830, %v1843
    %v1847 = vmul.f32 %v1844, 1.442695
    %v1848 = vpow.pop %v1847
    %v1849 = vmul.f32 %v1845, 1.442695
    %v1850 = vpow.pop %v1849
    %v1851 = vmul.f32 %v1846, 1.442695
    %v1852 = vpow.pop %v1851
    %v1853 = vmul.f32 %v1848, %v607
    %v1854 = vmul.f32 %v1850, %v608
    %v1855 = vmul.f32 %v1852, %v609
    %v1856 = vsel %vm415, %v1853, 0.0
    %1857 = vadd.xlane.f32.xlu0 %v1856
    %v1858 = vpop.xlane.xlu0 %1857
    %v1859 = vsel %vm415, %v1854, 0.0
    %1860 = vadd.xlane.f32.xlu0 %v1859
    %v1861 = vpop.xlane.xlu0 %1860
    %v1862 = vsel %vm422, %v1855, 0.0
    %1863 = vadd.xlane.f32.xlu0 %v1862
    %v1864 = vpop.xlane.xlu0 %1863
    %v1865 = vrcp.pop %v1858
    %v1866 = vrcp.pop %v1861
    %v1867 = vrcp.pop %v1864
    %v1868 = vmul.f32 %v1853, %v1865
    %v1869 = vmul.f32 %v1854, %v1866
    %v1870 = vmul.f32 %v1855, %v1867
    %v1871 = vpack.c.bf16 %v1869, %v1868
    %v1872 = vpack.c.bf16 %v1870, %v1870
    %1873 = vrot.lane.b32.xlu0 %v1599, 56
    %v1874 = vpop.permute.xlu0 %1873
    %1875 = vrot.lane.b32.xlu0 %v1600, 56
    %v1876 = vpop.permute.xlu0 %1875
    %v1879 = vsel %vm415, %v1871, 0
    %v1882 = vsel %vm415, %v1872, 0
    %v1885 = vsel %vm105, %v1876, 0
    %1887 = vmatprep.subr.bf16.mxu0 0
    %1888 = vmatpush1.bf16.msra.mxu0 0
    %1889 = vmatprep.subr.bf16.mxu0 0
    %1890 = vmatpush1.bf16.msra.mxu0 0
    %1891 = vmatprep.subr.bf16.mxu0 0
    %1892 = vmatpush1.bf16.msra.mxu0 0
    %1893 = vmatprep.subr.bf16.mxu0 0
    %1894 = vmatpush1.bf16.msra.mxu0 0
    %1895 = vmatprep.subr.bf16.mxu0 0
    %1896 = vmatpush1.bf16.msra.mxu0 0
    %1897 = vmatprep.subr.bf16.mxu0 0
    %1898 = vmatpush1.bf16.msra.mxu0 0
    %1899 = vmatprep.subr.bf16.mxu0 0
    %1900 = vmatpush1.bf16.msra.mxu0 %v1885
    %1901 = vmatprep.subr.bf16.mxu0 0
    %1902 = vmatpush1.bf16.msra.mxu0 %v1874
    %1903 = vmatprep.subr.bf16.mxu0 0
    %1904 = vmatpush2.bf16.msra.mxu0 0
    %1905 = vmatprep.subr.bf16.mxu0 0
    %1906 = vmatpush2.bf16.msra.mxu0 0
    %1907 = vmatprep.subr.bf16.mxu0 0
    %1908 = vmatpush2.bf16.msra.mxu0 0
    %1909 = vmatprep.subr.bf16.mxu0 0
    %1910 = vmatpush2.bf16.msra.mxu0 0
    %1911 = vmatprep.subr.bf16.mxu0 0
    %1912 = vmatpush2.bf16.msra.mxu0 0
    %1913 = vmatprep.subr.bf16.mxu0 0
    %1914 = vmatpush2.bf16.msra.mxu0 0
    %1915 = vmatprep.subr.bf16.mxu0 0
    %1916 = vmatpush2.bf16.msra.mxu0 0
    %1917 = vmatprep.subr.bf16.mxu0 0
    %1918 = vmatpush2.bf16.msra.mxu0 0
    %1919 = vmatprep.mubr.bf16.mxu0 0
    %1920 = vmatmul.mubr.bf16.gmra.mxu0 %v1879
    %v1921 = vpop.f32.mrf.mxu0
    %v1922 = vadd.f32 0.0, %v1921
    %v1923 = vpop.f32.mrf.mxu0
    %v1924 = vpop.f32.mrf.mxu0
    %v1925 = vadd.f32 0.0, %v1924
    %v1926 = vpop.f32.mrf.mxu0
    %1927 = vmatprep.mubr.bf16.mxu0 0
    %1928 = vmatmul.mubr.bf16.gmra.mxu0 %v1882
    %v1929 = vpop.f32.mrf.mxu0
    %v1930 = vadd.f32 0.0, %v1929
    %v1931 = vpop.f32.mrf.mxu0
    %v1932 = vpop.f32.mrf.mxu0
    %v1933 = vpop.f32.mrf.mxu0
    %1934 = vdwg.mxu0
    %1935 = vrot.lane.b32.xlu0 %v1599, 112
    %v1936 = vpop.permute.xlu0 %1935
    %1937 = vrot.lane.b32.xlu0 %v1600, 112
    %v1938 = vpop.permute.xlu0 %1937
    %1939 = vrot.lane.b32.xlu0 %v1599, 80
    %v1940 = vpop.permute.xlu0 %1939
    %1941 = vrot.lane.b32.xlu0 %v1600, 80
    %v1942 = vpop.permute.xlu0 %1941
    %v1944 = vsel %vm354, %v1936, 0
    %v1947 = vsel %vm354, %v1938, 0
    %v1950 = vsel %vm354, %v1940, 0
    %v1953 = vsel %vm354, %v1942, 0
    %1955 = vmatprep.subr.bf16.mxu0 0
    %1956 = vmatpush1.bf16.xpose.msra.mxu0 0
    %1957 = vmatprep.subr.bf16.mxu0 0
    %1958 = vmatpush1.bf16.xpose.msra.mxu0 0
    %1959 = vmatprep.subr.bf16.mxu0 0
    %1960 = vmatpush1.bf16.xpose.msra.mxu0 0
    %1961 = vmatprep.subr.bf16.mxu0 0
    %1962 = vmatpush1.bf16.xpose.msra.mxu0 0
    %1963 = vmatprep.subr.bf16.mxu0 0
    %1964 = vmatpush1.bf16.xpose.msra.mxu0 0
    %1965 = vmatprep.subr.bf16.mxu0 0
    %1966 = vmatpush1.bf16.xpose.msra.mxu0 0
    %1967 = vmatprep.subr.bf16.mxu0 0
    %1968 = vmatpush1.bf16.xpose.msra.mxu0 %v1953
    %1969 = vmatprep.subr.bf16.mxu0 0
    %1970 = vmatpush1.bf16.xpose.msra.mxu0 %v1950
    %1971 = vmatprep.subr.bf16.mxu0 0
    %1972 = vmatpush2.bf16.xpose.msra.mxu0 0
    %1973 = vmatprep.subr.bf16.mxu0 0
    %1974 = vmatpush2.bf16.xpose.msra.mxu0 0
    %1975 = vmatprep.subr.bf16.mxu0 0
    %1976 = vmatpush2.bf16.xpose.msra.mxu0 0
    %1977 = vmatprep.subr.bf16.mxu0 0
    %1978 = vmatpush2.bf16.xpose.msra.mxu0 0
    %1979 = vmatprep.subr.bf16.mxu0 0
    %1980 = vmatpush2.bf16.xpose.msra.mxu0 0
    %1981 = vmatprep.subr.bf16.mxu0 0
    %1982 = vmatpush2.bf16.xpose.msra.mxu0 0
    %1983 = vmatprep.subr.bf16.mxu0 0
    %1984 = vmatpush2.bf16.xpose.msra.mxu0 0
    %1985 = vmatprep.subr.bf16.mxu0 0
    %1986 = vmatpush2.bf16.xpose.msra.mxu0 0
    %1987 = vmatprep.mubr.bf16.mxu0 0
    %1988 = vmatmul.mubr.bf16.gmra.mxu0 %v1944
    %v1989 = vpop.f32.mrf.mxu0
    %v1990 = vadd.f32 %v202, %v1989
    %v1991 = vpop.f32.mrf.mxu0
    %v1992 = vpop.f32.mrf.mxu0
    %v1993 = vadd.f32 %v203, %v1992
    %v1994 = vpop.f32.mrf.mxu0
    %1995 = vmatprep.mubr.bf16.mxu0 0
    %1996 = vmatmul.mubr.bf16.gmra.mxu0 %v1947
    %v1997 = vpop.f32.mrf.mxu0
    %v1998 = vadd.f32 %v204, %v1997
    %v1999 = vpop.f32.mrf.mxu0
    %v2000 = vpop.f32.mrf.mxu0
    %v2001 = vpop.f32.mrf.mxu0
    %2002 = vdwg.mxu0
    %v2003 = vsel %vm415, %v1990, -inf
    %2004 = vmax.xlane.f32.xlu0 %v2003
    %v2005 = vpop.xlane.xlu0 %2004
    %v2006 = vsel %vm415, %v1993, -inf
    %2007 = vmax.xlane.f32.xlu0 %v2006
    %v2008 = vpop.xlane.xlu0 %2007
    %v2009 = vsel %vm422, %v1998, -inf
    %2010 = vmax.xlane.f32.xlu0 %v2009
    %v2011 = vpop.xlane.xlu0 %2010
    %v2012 = vsub.f32 %v1990, %v2005
    %v2013 = vsub.f32 %v1993, %v2008
    %v2014 = vsub.f32 %v1998, %v2011
    %v2015 = vmul.f32 %v2012, 1.442695
    %v2016 = vpow.pop %v2015
    %v2017 = vmul.f32 %v2013, 1.442695
    %v2018 = vpow.pop %v2017
    %v2019 = vmul.f32 %v2014, 1.442695
    %v2020 = vpow.pop %v2019
    %v2021 = vmul.f32 %v2016, %v779
    %v2022 = vmul.f32 %v2018, %v780
    %v2023 = vmul.f32 %v2020, %v781
    %v2024 = vsel %vm415, %v2021, 0.0
    %2025 = vadd.xlane.f32.xlu0 %v2024
    %v2026 = vpop.xlane.xlu0 %2025
    %v2027 = vsel %vm415, %v2022, 0.0
    %2028 = vadd.xlane.f32.xlu0 %v2027
    %v2029 = vpop.xlane.xlu0 %2028
    %v2030 = vsel %vm422, %v2023, 0.0
    %2031 = vadd.xlane.f32.xlu0 %v2030
    %v2032 = vpop.xlane.xlu0 %2031
    %v2033 = vrcp.pop %v2026
    %v2034 = vrcp.pop %v2029
    %v2035 = vrcp.pop %v2032
    %v2036 = vmul.f32 %v2021, %v2033
    %v2037 = vmul.f32 %v2022, %v2034
    %v2038 = vmul.f32 %v2023, %v2035
    %v2039 = vpack.c.bf16 %v2037, %v2036
    %v2040 = vpack.c.bf16 %v2038, %v2038
    %2041 = vrot.lane.b32.xlu0 %v1599, 48
    %v2042 = vpop.permute.xlu0 %2041
    %2043 = vrot.lane.b32.xlu0 %v1600, 48
    %v2044 = vpop.permute.xlu0 %2043
    %v2047 = vsel %vm415, %v2039, 0
    %v2050 = vsel %vm415, %v2040, 0
    %v2053 = vsel %vm105, %v2044, 0
    %2055 = vmatprep.subr.bf16.mxu0 0
    %2056 = vmatpush1.bf16.msra.mxu0 0
    %2057 = vmatprep.subr.bf16.mxu0 0
    %2058 = vmatpush1.bf16.msra.mxu0 0
    %2059 = vmatprep.subr.bf16.mxu0 0
    %2060 = vmatpush1.bf16.msra.mxu0 0
    %2061 = vmatprep.subr.bf16.mxu0 0
    %2062 = vmatpush1.bf16.msra.mxu0 0
    %2063 = vmatprep.subr.bf16.mxu0 0
    %2064 = vmatpush1.bf16.msra.mxu0 0
    %2065 = vmatprep.subr.bf16.mxu0 0
    %2066 = vmatpush1.bf16.msra.mxu0 0
    %2067 = vmatprep.subr.bf16.mxu0 0
    %2068 = vmatpush1.bf16.msra.mxu0 %v2053
    %2069 = vmatprep.subr.bf16.mxu0 0
    %2070 = vmatpush1.bf16.msra.mxu0 %v2042
    %2071 = vmatprep.subr.bf16.mxu0 0
    %2072 = vmatpush2.bf16.msra.mxu0 0
    %2073 = vmatprep.subr.bf16.mxu0 0
    %2074 = vmatpush2.bf16.msra.mxu0 0
    %2075 = vmatprep.subr.bf16.mxu0 0
    %2076 = vmatpush2.bf16.msra.mxu0 0
    %2077 = vmatprep.subr.bf16.mxu0 0
    %2078 = vmatpush2.bf16.msra.mxu0 0
    %2079 = vmatprep.subr.bf16.mxu0 0
    %2080 = vmatpush2.bf16.msra.mxu0 0
    %2081 = vmatprep.subr.bf16.mxu0 0
    %2082 = vmatpush2.bf16.msra.mxu0 0
    %2083 = vmatprep.subr.bf16.mxu0 0
    %2084 = vmatpush2.bf16.msra.mxu0 0
    %2085 = vmatprep.subr.bf16.mxu0 0
    %2086 = vmatpush2.bf16.msra.mxu0 0
    %2087 = vmatprep.mubr.bf16.mxu0 0
    %2088 = vmatmul.mubr.bf16.gmra.mxu0 %v2047
    %v2089 = vpop.f32.mrf.mxu0
    %v2090 = vadd.f32 0.0, %v2089
    %v2091 = vpop.f32.mrf.mxu0
    %v2092 = vpop.f32.mrf.mxu0
    %v2093 = vadd.f32 0.0, %v2092
    %v2094 = vpop.f32.mrf.mxu0
    %2095 = vmatprep.mubr.bf16.mxu0 0
    %2096 = vmatmul.mubr.bf16.gmra.mxu0 %v2050
    %v2097 = vpop.f32.mrf.mxu0
    %v2098 = vadd.f32 0.0, %v2097
    %v2099 = vpop.f32.mrf.mxu0
    %v2100 = vpop.f32.mrf.mxu0
    %v2101 = vpop.f32.mrf.mxu0
    %2102 = vdwg.mxu0
    %2103 = vrot.lane.b32.xlu0 %v1599, 104
    %v2104 = vpop.permute.xlu0 %2103
    %2105 = vrot.lane.b32.xlu0 %v1600, 104
    %v2106 = vpop.permute.xlu0 %2105
    %2107 = vrot.lane.b32.xlu0 %v1599, 72
    %v2108 = vpop.permute.xlu0 %2107
    %2109 = vrot.lane.b32.xlu0 %v1600, 72
    %v2110 = vpop.permute.xlu0 %2109
    %v2112 = vsel %vm354, %v2104, 0
    %v2115 = vsel %vm354, %v2106, 0
    %v2118 = vsel %vm354, %v2108, 0
    %v2121 = vsel %vm354, %v2110, 0
    %2123 = vmatprep.subr.bf16.mxu0 0
    %2124 = vmatpush1.bf16.xpose.msra.mxu0 0
    %2125 = vmatprep.subr.bf16.mxu0 0
    %2126 = vmatpush1.bf16.xpose.msra.mxu0 0
    %2127 = vmatprep.subr.bf16.mxu0 0
    %2128 = vmatpush1.bf16.xpose.msra.mxu0 0
    %2129 = vmatprep.subr.bf16.mxu0 0
    %2130 = vmatpush1.bf16.xpose.msra.mxu0 0
    %2131 = vmatprep.subr.bf16.mxu0 0
    %2132 = vmatpush1.bf16.xpose.msra.mxu0 0
    %2133 = vmatprep.subr.bf16.mxu0 0
    %2134 = vmatpush1.bf16.xpose.msra.mxu0 0
    %2135 = vmatprep.subr.bf16.mxu0 0
    %2136 = vmatpush1.bf16.xpose.msra.mxu0 %v2121
    %2137 = vmatprep.subr.bf16.mxu0 0
    %2138 = vmatpush1.bf16.xpose.msra.mxu0 %v2118
    %2139 = vmatprep.subr.bf16.mxu0 0
    %2140 = vmatpush2.bf16.xpose.msra.mxu0 0
    %2141 = vmatprep.subr.bf16.mxu0 0
    %2142 = vmatpush2.bf16.xpose.msra.mxu0 0
    %2143 = vmatprep.subr.bf16.mxu0 0
    %2144 = vmatpush2.bf16.xpose.msra.mxu0 0
    %2145 = vmatprep.subr.bf16.mxu0 0
    %2146 = vmatpush2.bf16.xpose.msra.mxu0 0
    %2147 = vmatprep.subr.bf16.mxu0 0
    %2148 = vmatpush2.bf16.xpose.msra.mxu0 0
    %2149 = vmatprep.subr.bf16.mxu0 0
    %2150 = vmatpush2.bf16.xpose.msra.mxu0 0
    %2151 = vmatprep.subr.bf16.mxu0 0
    %2152 = vmatpush2.bf16.xpose.msra.mxu0 0
    %2153 = vmatprep.subr.bf16.mxu0 0
    %2154 = vmatpush2.bf16.xpose.msra.mxu0 0
    %2155 = vmatprep.mubr.bf16.mxu0 0
    %2156 = vmatmul.mubr.bf16.gmra.mxu0 %v2112
    %v2157 = vpop.f32.mrf.mxu0
    %v2158 = vadd.f32 %v202, %v2157
    %v2159 = vpop.f32.mrf.mxu0
    %v2160 = vpop.f32.mrf.mxu0
    %v2161 = vadd.f32 %v203, %v2160
    %v2162 = vpop.f32.mrf.mxu0
    %2163 = vmatprep.mubr.bf16.mxu0 0
    %2164 = vmatmul.mubr.bf16.gmra.mxu0 %v2115
    %v2165 = vpop.f32.mrf.mxu0
    %v2166 = vadd.f32 %v204, %v2165
    %v2167 = vpop.f32.mrf.mxu0
    %v2168 = vpop.f32.mrf.mxu0
    %v2169 = vpop.f32.mrf.mxu0
    %2170 = vdwg.mxu0
    %v2171 = vsel %vm415, %v2158, -inf
    %2172 = vmax.xlane.f32.xlu0 %v2171
    %v2173 = vpop.xlane.xlu0 %2172
    %v2174 = vsel %vm415, %v2161, -inf
    %2175 = vmax.xlane.f32.xlu0 %v2174
    %v2176 = vpop.xlane.xlu0 %2175
    %v2177 = vsel %vm422, %v2166, -inf
    %2178 = vmax.xlane.f32.xlu0 %v2177
    %v2179 = vpop.xlane.xlu0 %2178
    %v2180 = vsub.f32 %v2158, %v2173
    %v2181 = vsub.f32 %v2161, %v2176
    %v2182 = vsub.f32 %v2166, %v2179
    %v2183 = vmul.f32 %v2180, 1.442695
    %v2184 = vpow.pop %v2183
    %v2185 = vmul.f32 %v2181, 1.442695
    %v2186 = vpow.pop %v2185
    %v2187 = vmul.f32 %v2182, 1.442695
    %v2188 = vpow.pop %v2187
    %v2189 = vmul.f32 %v2184, %v951
    %v2190 = vmul.f32 %v2186, %v952
    %v2191 = vmul.f32 %v2188, %v953
    %v2192 = vsel %vm415, %v2189, 0.0
    %2193 = vadd.xlane.f32.xlu0 %v2192
    %v2194 = vpop.xlane.xlu0 %2193
    %v2195 = vsel %vm415, %v2190, 0.0
    %2196 = vadd.xlane.f32.xlu0 %v2195
    %v2197 = vpop.xlane.xlu0 %2196
    %v2198 = vsel %vm422, %v2191, 0.0
    %2199 = vadd.xlane.f32.xlu0 %v2198
    %v2200 = vpop.xlane.xlu0 %2199
    %v2201 = vrcp.pop %v2194
    %v2202 = vrcp.pop %v2197
    %v2203 = vrcp.pop %v2200
    %v2204 = vmul.f32 %v2189, %v2201
    %v2205 = vmul.f32 %v2190, %v2202
    %v2206 = vmul.f32 %v2191, %v2203
    %v2207 = vpack.c.bf16 %v2205, %v2204
    %v2208 = vpack.c.bf16 %v2206, %v2206
    %2209 = vrot.lane.b32.xlu0 %v1599, 40
    %v2210 = vpop.permute.xlu0 %2209
    %2211 = vrot.lane.b32.xlu0 %v1600, 40
    %v2212 = vpop.permute.xlu0 %2211
    %v2215 = vsel %vm415, %v2207, 0
    %v2218 = vsel %vm415, %v2208, 0
    %v2221 = vsel %vm105, %v2212, 0
    %2223 = vmatprep.subr.bf16.mxu0 0
    %2224 = vmatpush1.bf16.msra.mxu0 0
    %2225 = vmatprep.subr.bf16.mxu0 0
    %2226 = vmatpush1.bf16.msra.mxu0 0
    %2227 = vmatprep.subr.bf16.mxu0 0
    %2228 = vmatpush1.bf16.msra.mxu0 0
    %2229 = vmatprep.subr.bf16.mxu0 0
    %2230 = vmatpush1.bf16.msra.mxu0 0
    %2231 = vmatprep.subr.bf16.mxu0 0
    %2232 = vmatpush1.bf16.msra.mxu0 0
    %2233 = vmatprep.subr.bf16.mxu0 0
    %2234 = vmatpush1.bf16.msra.mxu0 0
    %2235 = vmatprep.subr.bf16.mxu0 0
    %2236 = vmatpush1.bf16.msra.mxu0 %v2221
    %2237 = vmatprep.subr.bf16.mxu0 0
    %2238 = vmatpush1.bf16.msra.mxu0 %v2210
    %2239 = vmatprep.subr.bf16.mxu0 0
    %2240 = vmatpush2.bf16.msra.mxu0 0
    %2241 = vmatprep.subr.bf16.mxu0 0
    %2242 = vmatpush2.bf16.msra.mxu0 0
    %2243 = vmatprep.subr.bf16.mxu0 0
    %2244 = vmatpush2.bf16.msra.mxu0 0
    %2245 = vmatprep.subr.bf16.mxu0 0
    %2246 = vmatpush2.bf16.msra.mxu0 0
    %2247 = vmatprep.subr.bf16.mxu0 0
    %2248 = vmatpush2.bf16.msra.mxu0 0
    %2249 = vmatprep.subr.bf16.mxu0 0
    %2250 = vmatpush2.bf16.msra.mxu0 0
    %2251 = vmatprep.subr.bf16.mxu0 0
    %2252 = vmatpush2.bf16.msra.mxu0 0
    %2253 = vmatprep.subr.bf16.mxu0 0
    %2254 = vmatpush2.bf16.msra.mxu0 0
    %2255 = vmatprep.mubr.bf16.mxu0 0
    %2256 = vmatmul.mubr.bf16.gmra.mxu0 %v2215
    %v2257 = vpop.f32.mrf.mxu0
    %v2258 = vadd.f32 0.0, %v2257
    %v2259 = vpop.f32.mrf.mxu0
    %v2260 = vpop.f32.mrf.mxu0
    %v2261 = vadd.f32 0.0, %v2260
    %v2262 = vpop.f32.mrf.mxu0
    %2263 = vmatprep.mubr.bf16.mxu0 0
    %2264 = vmatmul.mubr.bf16.gmra.mxu0 %v2218
    %v2265 = vpop.f32.mrf.mxu0
    %v2266 = vadd.f32 0.0, %v2265
    %v2267 = vpop.f32.mrf.mxu0
    %v2268 = vpop.f32.mrf.mxu0
    %v2269 = vpop.f32.mrf.mxu0
    %2270 = vdwg.mxu0
    %2274 = vrot.lane.b32.xlu0 %v1922, 8
    %v2275 = vpop.permute.xlu0 %2274
    %2276 = vrot.lane.b32.xlu0 %v1925, 8
    %v2277 = vpop.permute.xlu0 %2276
    %2278 = vrot.lane.b32.xlu0 %v1930, 8
    %v2279 = vpop.permute.xlu0 %2278
    %2286 = vrot.lane.b32.xlu0 %v2090, 16
    %v2287 = vpop.permute.xlu0 %2286
    %2288 = vrot.lane.b32.xlu0 %v2093, 16
    %v2289 = vpop.permute.xlu0 %2288
    %2290 = vrot.lane.b32.xlu0 %v2098, 16
    %v2291 = vpop.permute.xlu0 %2290
    %2298 = vrot.lane.b32.xlu0 %v2258, 24
    %v2299 = vpop.permute.xlu0 %2298
    %2300 = vrot.lane.b32.xlu0 %v2261, 24
    %v2301 = vpop.permute.xlu0 %2300
    %2302 = vrot.lane.b32.xlu0 %v2266, 24
    %v2303 = vpop.permute.xlu0 %2302
    %v2307 = vsel %vm354, %v1754, %v2275
    %v2308 = vsel %vm354, %v1757, %v2277
    %v2309 = vsel %vm354, %v1762, %v2279
    %v2310 = vsel %vm1075, %v2307, %v2287
    %v2311 = vsel %vm1075, %v2308, %v2289
    %v2312 = vsel %vm1075, %v2309, %v2291
    %v2313 = vsel %vm1079, %v2310, %v2299
    %v2314 = vsel %vm1079, %v2311, %v2301
    %v2315 = vsel %vm1079, %v2312, %v2303
    %v2316 = vpack.c.bf16 %v2314, %v2313
    %v2317 = vpack.c.bf16 %v2315, %v2315
    %s2318 = scalar_lea.vmem %s10, 16
    %v2319 = vld [vmem:[%s2318] sm:$0xf]
    %v2320 = vld [vmem:[%s2318 + $0x4] sm:$0xf]
    %v2321 = vld [vmem:[%s2318 + $0x8] sm:$0xf]
    %v2322 = vld [vmem:[%s2318 + $0xc] sm:$0xf]
    %s2323 = scalar_lea.vmem %s11, 1
    %v2324 = vld [vmem:[%s2323] sm:$0x1]
    %v2326 = vlaneseq
    %v2327 = vshrl.u32 %v2326, 7
    %v2328 = vsub.s32 0, %v2327
    %v2329 = vrot.slane %v2324, %v2328
    %v2335 = vunpack.c.l.b16 %v2319
    %v2336 = vunpack.c.l.b16 %v2320
    %v2337 = vunpack.c.l.b16 %v2321
    %v2338 = vunpack.c.l.b16 %v2322
    %v2339 = vpack.c.b16 %v2336, %v2335
    %v2340 = vpack.c.b16 %v2338, %v2337
    %v2344 = vsel %vm205, %v2316, 0
    %v2347 = vsel %vm205, %v2317, 0
    %2349 = vmatprep.subr.bf16.mxu0 0
    %2350 = vmatpush1.bf16.msra.mxu0 0
    %2351 = vmatprep.subr.bf16.mxu0 0
    %2352 = vmatpush1.bf16.msra.mxu0 0
    %2353 = vmatprep.subr.bf16.mxu0 0
    %2354 = vmatpush1.bf16.msra.mxu0 0
    %2355 = vmatprep.subr.bf16.mxu0 0
    %2356 = vmatpush1.bf16.msra.mxu0 0
    %2357 = vmatprep.subr.bf16.mxu0 0
    %2358 = vmatpush1.bf16.msra.mxu0 0
    %2359 = vmatprep.subr.bf16.mxu0 0
    %2360 = vmatpush1.bf16.msra.mxu0 0
    %2361 = vmatprep.subr.bf16.mxu0 0
    %2362 = vmatpush1.bf16.msra.mxu0 %v2340
    %2363 = vmatprep.subr.bf16.mxu0 0
    %2364 = vmatpush1.bf16.msra.mxu0 %v2339
    %2365 = vmatprep.subr.bf16.mxu0 0
    %2366 = vmatpush2.bf16.msra.mxu0 0
    %2367 = vmatprep.subr.bf16.mxu0 0
    %2368 = vmatpush2.bf16.msra.mxu0 0
    %2369 = vmatprep.subr.bf16.mxu0 0
    %2370 = vmatpush2.bf16.msra.mxu0 0
    %2371 = vmatprep.subr.bf16.mxu0 0
    %2372 = vmatpush2.bf16.msra.mxu0 0
    %2373 = vmatprep.subr.bf16.mxu0 0
    %2374 = vmatpush2.bf16.msra.mxu0 0
    %2375 = vmatprep.subr.bf16.mxu0 0
    %2376 = vmatpush2.bf16.msra.mxu0 0
    %2377 = vmatprep.subr.bf16.mxu0 0
    %2378 = vmatpush2.bf16.msra.mxu0 0
    %2379 = vmatprep.subr.bf16.mxu0 0
    %2380 = vmatpush2.bf16.msra.mxu0 0
    %2381 = vmatprep.mubr.bf16.mxu0 0
    %2382 = vmatmul.mubr.bf16.gmra.mxu0 %v2344
    %v2383 = vpop.f32.mrf.mxu0
    %v2384 = vadd.f32 %v2329, %v2383
    %v2385 = vpop.f32.mrf.mxu0
    %v2386 = vpop.f32.mrf.mxu0
    %v2387 = vadd.f32 %v2329, %v2386
    %v2388 = vpop.f32.mrf.mxu0
    %2389 = vmatprep.mubr.bf16.mxu0 0
    %2390 = vmatmul.mubr.bf16.gmra.mxu0 %v2347
    %v2391 = vpop.f32.mrf.mxu0
    %v2392 = vadd.f32 %v2329, %v2391
    %v2393 = vpop.f32.mrf.mxu0
    %v2394 = vpop.f32.mrf.mxu0
    %v2395 = vpop.f32.mrf.mxu0
    %2396 = vdwg.mxu0
    %v2397 = vadd.f32 %v1454, %v2384
    %v2398 = vadd.f32 %v1455, %v2387
    %v2399 = vadd.f32 %v1456, %v2392
    %v2400 = vsel %vm205, %v2397, 0.0
    %2401 = vadd.xlane.f32.xlu0 %v2400
    %v2402 = vpop.xlane.xlu0 %2401
    %v2403 = vsel %vm205, %v2398, 0.0
    %2404 = vadd.xlane.f32.xlu0 %v2403
    %v2405 = vpop.xlane.xlu0 %2404
    %v2406 = vsel %vm212, %v2399, 0.0
    %2407 = vadd.xlane.f32.xlu0 %v2406
    %v2408 = vpop.xlane.xlu0 %2407
    %v2409 = vmul.f32 %v2402, %v216
    %v2410 = vmul.f32 %v2405, %v216
    %v2411 = vmul.f32 %v2408, %v216
    %v2412 = vsub.f32 %v2397, %v2409
    %v2413 = vsub.f32 %v2398, %v2410
    %v2414 = vsub.f32 %v2399, %v2411
    %v2415 = vmul.f32 %v2412, %v2412
    %v2416 = vmul.f32 %v2413, %v2413
    %v2417 = vmul.f32 %v2414, %v2414
    %v2418 = vsel %vm205, %v2415, 0.0
    %2419 = vadd.xlane.f32.xlu0 %v2418
    %v2420 = vpop.xlane.xlu0 %2419
    %v2421 = vsel %vm205, %v2416, 0.0
    %2422 = vadd.xlane.f32.xlu0 %v2421
    %v2423 = vpop.xlane.xlu0 %2422
    %v2424 = vsel %vm212, %v2417, 0.0
    %2425 = vadd.xlane.f32.xlu0 %v2424
    %v2426 = vpop.xlane.xlu0 %2425
    %v2427 = vmul.f32 %v2420, %v216
    %v2428 = vmul.f32 %v2423, %v216
    %v2429 = vmul.f32 %v2426, %v216
    %v2430 = vadd.f32 %v2427, 1e-05
    %v2431 = vadd.f32 %v2428, 1e-05
    %v2432 = vadd.f32 %v2429, 1e-05
    %v2433 = vrsqrt.pop %v2430
    %v2434 = vrsqrt.pop %v2431
    %v2435 = vrsqrt.pop %v2432
    %v2436 = vmul.f32 %v2412, %v2433
    %v2437 = vmul.f32 %v2413, %v2434
    %v2438 = vmul.f32 %v2414, %v2435
    %s2439 = scalar_lea.vmem %s12, 1
    %v2440 = vld [vmem:[%s2439] sm:$0x1]
    %v2442 = vlaneseq
    %v2443 = vshrl.u32 %v2442, 7
    %v2444 = vsub.s32 0, %v2443
    %v2445 = vrot.slane %v2440, %v2444
    %v2447 = vmul.f32 %v2436, %v2445
    %v2448 = vmul.f32 %v2437, %v2445
    %v2449 = vmul.f32 %v2438, %v2445
    %s2450 = scalar_lea.vmem %s13, 1
    %v2451 = vld [vmem:[%s2450] sm:$0x1]
    %v2453 = vlaneseq
    %v2454 = vshrl.u32 %v2453, 7
    %v2455 = vsub.s32 0, %v2454
    %v2456 = vrot.slane %v2451, %v2455
    %v2458 = vadd.f32 %v2447, %v2456
    %v2459 = vadd.f32 %v2448, %v2456
    %v2460 = vadd.f32 %v2449, %v2456
    %s2461 = scalar_lea.vmem %s14, 32
    %v2462 = vld [vmem:[%s2461] sm:$0xff]
    %v2463 = vld [vmem:[%s2461 + $0x8] sm:$0xff]
    %v2464 = vld [vmem:[%s2461 + $0x10] sm:$0xff]
    %v2465 = vld [vmem:[%s2461 + $0x18] sm:$0xff]
    %s2466 = scalar_lea.vmem %s15, 1
    %v2467 = vld [vmem:[%s2466] sm:$0x1]
    %v2469 = vlaneseq
    %v2470 = vshrl.u32 %v2469, 7
    %v2471 = vsub.s32 0, %v2470
    %v2472 = vrot.slane %v2467, %v2471
    %v2475 = vsel %vm205, %v2458, 0
    %v2478 = vsel %vm205, %v2459, 0
    %v2481 = vsel %vm205, %v2460, 0
    %2483 = vmatprep.subr.mxu0 0.0
    %2484 = vmatpush1.msra.mxu0 0.0
    %2485 = vmatprep.subr.mxu0 0.0
    %2486 = vmatpush1.msra.mxu0 0.0
    %2487 = vmatprep.subr.mxu0 0.0
    %2488 = vmatpush1.msra.mxu0 0.0
    %2489 = vmatprep.subr.mxu0 0.0
    %2490 = vmatpush1.msra.mxu0 0.0
    %2491 = vmatprep.subr.mxu0 0.0
    %2492 = vmatpush1.msra.mxu0 0.0
    %2493 = vmatprep.subr.mxu0 0.0
    %2494 = vmatpush1.msra.mxu0 0.0
    %2495 = vmatprep.subr.mxu0 0.0
    %2496 = vmatpush1.msra.mxu0 0.0
    %2497 = vmatprep.subr.mxu0 0.0
    %2498 = vmatpush1.msra.mxu0 0.0
    %2499 = vmatprep.subr.mxu0 0.0
    %2500 = vmatpush1.msra.mxu0 0.0
    %2501 = vmatprep.subr.mxu0 0.0
    %2502 = vmatpush1.msra.mxu0 0.0
    %2503 = vmatprep.subr.mxu0 0.0
    %2504 = vmatpush1.msra.mxu0 0.0
    %2505 = vmatprep.subr.mxu0 0.0
    %2506 = vmatpush1.msra.mxu0 0.0
    %2507 = vmatprep.subr.mxu0 0.0
    %2508 = vmatpush1.msra.mxu0 %v2465
    %2509 = vmatprep.subr.mxu0 0.0
    %2510 = vmatpush1.msra.mxu0 %v2464
    %2511 = vmatprep.subr.mxu0 0.0
    %2512 = vmatpush1.msra.mxu0 %v2463
    %2513 = vmatprep.subr.mxu0 0.0
    %2514 = vmatpush1.msra.mxu0 %v2462
    %2515 = vmatprep.subr.mxu0 0.0
    %2516 = vmatpush2.msra.mxu0 0.0
    %2517 = vmatprep.subr.mxu0 0.0
    %2518 = vmatpush2.msra.mxu0 0.0
    %2519 = vmatprep.subr.mxu0 0.0
    %2520 = vmatpush2.msra.mxu0 0.0
    %2521 = vmatprep.subr.mxu0 0.0
    %2522 = vmatpush2.msra.mxu0 0.0
    %2523 = vmatprep.subr.mxu0 0.0
    %2524 = vmatpush2.msra.mxu0 0.0
    %2525 = vmatprep.subr.mxu0 0.0
    %2526 = vmatpush2.msra.mxu0 0.0
    %2527 = vmatprep.subr.mxu0 0.0
    %2528 = vmatpush2.msra.mxu0 0.0
    %2529 = vmatprep.subr.mxu0 0.0
    %2530 = vmatpush2.msra.mxu0 0.0
    %2531 = vmatprep.subr.mxu0 0.0
    %2532 = vmatpush2.msra.mxu0 0.0
    %2533 = vmatprep.subr.mxu0 0.0
    %2534 = vmatpush2.msra.mxu0 0.0
    %2535 = vmatprep.subr.mxu0 0.0
    %2536 = vmatpush2.msra.mxu0 0.0
    %2537 = vmatprep.subr.mxu0 0.0
    %2538 = vmatpush2.msra.mxu0 0.0
    %2539 = vmatprep.subr.mxu0 0.0
    %2540 = vmatpush2.msra.mxu0 0.0
    %2541 = vmatprep.subr.mxu0 0.0
    %2542 = vmatpush2.msra.mxu0 0.0
    %2543 = vmatprep.subr.mxu0 0.0
    %2544 = vmatpush2.msra.mxu0 0.0
    %2545 = vmatprep.subr.mxu0 0.0
    %2546 = vmatpush2.msra.mxu0 0.0
    %2547 = vmatprep.mubr.f32.mxu0 0.0
    %2548 = vmatmul.mubr.f32.gmra.mxu0 %v2475
    %v2549 = vpop.f32.mrf.mxu0
    %v2550 = vadd.f32 %v2472, %v2549
    %v2551 = vpop.f32.mrf.mxu0
    %2552 = vmatprep.mubr.f32.mxu0 0.0
    %2553 = vmatmul.mubr.f32.gmra.mxu0 %v2478
    %v2554 = vpop.f32.mrf.mxu0
    %v2555 = vadd.f32 %v2472, %v2554
    %v2556 = vpop.f32.mrf.mxu0
    %2557 = vmatprep.mubr.f32.mxu0 0.0
    %2558 = vmatmul.mubr.f32.gmra.mxu0 %v2481
    %v2559 = vpop.f32.mrf.mxu0
    %v2560 = vadd.f32 %v2472, %v2559
    %v2561 = vpop.f32.mrf.mxu0
    %2562 = vdwg.mxu0
    %v2563 = vmul.f32 %v2550, 0.5
    %v2564 = vmul.f32 %v2555, 0.5
    %v2565 = vmul.f32 %v2560, 0.5
    %v2566 = vmul.f32 %v2550, 0.044715
    %v2567 = vmul.f32 %v2555, 0.044715
    %v2568 = vmul.f32 %v2560, 0.044715
    %v2569 = vmul.f32 %v2566, %v2550
    %v2570 = vmul.f32 %v2567, %v2555
    %v2571 = vmul.f32 %v2568, %v2560
    %v2572 = vmul.f32 %v2569, %v2550
    %v2573 = vmul.f32 %v2570, %v2555
    %v2574 = vmul.f32 %v2571, %v2560
    %v2575 = vadd.f32 %v2550, %v2572
    %v2576 = vadd.f32 %v2555, %v2573
    %v2577 = vadd.f32 %v2560, %v2574
    %v2578 = vmul.f32 %v2575, 0.7978846
    %v2579 = vmul.f32 %v2576, 0.7978846
    %v2580 = vmul.f32 %v2577, 0.7978846
    %v2581 = vtanh.pop %v2578
    %v2582 = vtanh.pop %v2579
    %v2583 = vtanh.pop %v2580
    %v2584 = vadd.f32 %v2581, 1.0
    %v2585 = vadd.f32 %v2582, 1.0
    %v2586 = vadd.f32 %v2583, 1.0
    %v2587 = vmul.f32 %v2563, %v2584
    %v2588 = vmul.f32 %v2564, %v2585
    %v2589 = vmul.f32 %v2565, %v2586
    %s2590 = scalar_lea.vmem %s16, 128
    %v2591 = vld [vmem:[%s2590] sm:$0xff]
    %v2592 = vld [vmem:[%s2590 + $0x8] sm:$0xff]
    %v2593 = vld [vmem:[%s2590 + $0x10] sm:$0xff]
    %v2594 = vld [vmem:[%s2590 + $0x18] sm:$0xff]
    %v2595 = vld [vmem:[%s2590 + $0x20] sm:$0xff]
    %v2596 = vld [vmem:[%s2590 + $0x28] sm:$0xff]
    %v2597 = vld [vmem:[%s2590 + $0x30] sm:$0xff]
    %v2598 = vld [vmem:[%s2590 + $0x38] sm:$0xff]
    %v2599 = vld [vmem:[%s2590 + $0x40] sm:$0xff]
    %v2600 = vld [vmem:[%s2590 + $0x48] sm:$0xff]
    %v2601 = vld [vmem:[%s2590 + $0x50] sm:$0xff]
    %v2602 = vld [vmem:[%s2590 + $0x58] sm:$0xff]
    %v2603 = vld [vmem:[%s2590 + $0x60] sm:$0xff]
    %v2604 = vld [vmem:[%s2590 + $0x68] sm:$0xff]
    %v2605 = vld [vmem:[%s2590 + $0x70] sm:$0xff]
    %v2606 = vld [vmem:[%s2590 + $0x78] sm:$0xff]
    %s2607 = scalar_lea.vmem %s17, 1
    %v2608 = vld [vmem:[%s2607] sm:$0x1]
    %v2610 = vlaneseq
    %v2611 = vshrl.u32 %v2610, 7
    %v2612 = vsub.s32 0, %v2611
    %v2613 = vrot.slane %v2608, %v2612
    %2615 = vmatprep.subr.mxu0 0.0
    %2616 = vmatpush1.msra.mxu0 %v2606
    %2617 = vmatprep.subr.mxu0 0.0
    %2618 = vmatpush1.msra.mxu0 %v2605
    %2619 = vmatprep.subr.mxu0 0.0
    %2620 = vmatpush1.msra.mxu0 %v2604
    %2621 = vmatprep.subr.mxu0 0.0
    %2622 = vmatpush1.msra.mxu0 %v2603
    %2623 = vmatprep.subr.mxu0 0.0
    %2624 = vmatpush1.msra.mxu0 %v2602
    %2625 = vmatprep.subr.mxu0 0.0
    %2626 = vmatpush1.msra.mxu0 %v2601
    %2627 = vmatprep.subr.mxu0 0.0
    %2628 = vmatpush1.msra.mxu0 %v2600
    %2629 = vmatprep.subr.mxu0 0.0
    %2630 = vmatpush1.msra.mxu0 %v2599
    %2631 = vmatprep.subr.mxu0 0.0
    %2632 = vmatpush1.msra.mxu0 %v2598
    %2633 = vmatprep.subr.mxu0 0.0
    %2634 = vmatpush1.msra.mxu0 %v2597
    %2635 = vmatprep.subr.mxu0 0.0
    %2636 = vmatpush1.msra.mxu0 %v2596
    %2637 = vmatprep.subr.mxu0 0.0
    %2638 = vmatpush1.msra.mxu0 %v2595
    %2639 = vmatprep.subr.mxu0 0.0
    %2640 = vmatpush1.msra.mxu0 %v2594
    %2641 = vmatprep.subr.mxu0 0.0
    %2642 = vmatpush1.msra.mxu0 %v2593
    %2643 = vmatprep.subr.mxu0 0.0
    %2644 = vmatpush1.msra.mxu0 %v2592
    %2645 = vmatprep.subr.mxu0 0.0
    %2646 = vmatpush1.msra.mxu0 %v2591
    %2647 = vmatprep.subr.mxu0 0.0
    %2648 = vmatpush2.msra.mxu0 0.0
    %2649 = vmatprep.subr.mxu0 0.0
    %2650 = vmatpush2.msra.mxu0 0.0
    %2651 = vmatprep.subr.mxu0 0.0
    %2652 = vmatpush2.msra.mxu0 0.0
    %2653 = vmatprep.subr.mxu0 0.0
    %2654 = vmatpush2.msra.mxu0 0.0
    %2655 = vmatprep.subr.mxu0 0.0
    %2656 = vmatpush2.msra.mxu0 0.0
    %2657 = vmatprep.subr.mxu0 0.0
    %2658 = vmatpush2.msra.mxu0 0.0
    %2659 = vmatprep.subr.mxu0 0.0
    %2660 = vmatpush2.msra.mxu0 0.0
    %2661 = vmatprep.subr.mxu0 0.0
    %2662 = vmatpush2.msra.mxu0 0.0
    %2663 = vmatprep.subr.mxu0 0.0
    %2664 = vmatpush2.msra.mxu0 0.0
    %2665 = vmatprep.subr.mxu0 0.0
    %2666 = vmatpush2.msra.mxu0 0.0
    %2667 = vmatprep.subr.mxu0 0.0
    %2668 = vmatpush2.msra.mxu0 0.0
    %2669 = vmatprep.subr.mxu0 0.0
    %2670 = vmatpush2.msra.mxu0 0.0
    %2671 = vmatprep.subr.mxu0 0.0
    %2672 = vmatpush2.msra.mxu0 0.0
    %2673 = vmatprep.subr.mxu0 0.0
    %2674 = vmatpush2.msra.mxu0 0.0
    %2675 = vmatprep.subr.mxu0 0.0
    %2676 = vmatpush2.msra.mxu0 0.0
    %2677 = vmatprep.subr.mxu0 0.0
    %2678 = vmatpush2.msra.mxu0 0.0
    %2679 = vmatprep.mubr.f32.mxu0 0.0
    %2680 = vmatmul.mubr.f32.gmra.mxu0 %v2587
    %v2681 = vpop.f32.mrf.mxu0
    %v2682 = vadd.f32 %v2613, %v2681
    %v2683 = vpop.f32.mrf.mxu0
    %2684 = vmatprep.mubr.f32.mxu0 0.0
    %2685 = vmatmul.mubr.f32.gmra.mxu0 %v2588
    %v2686 = vpop.f32.mrf.mxu0
    %v2687 = vadd.f32 %v2613, %v2686
    %v2688 = vpop.f32.mrf.mxu0
    %2689 = vmatprep.mubr.f32.mxu0 0.0
    %2690 = vmatmul.mubr.f32.gmra.mxu0 %v2589
    %v2691 = vpop.f32.mrf.mxu0
    %v2692 = vadd.f32 %v2613, %v2691
    %v2693 = vpop.f32.mrf.mxu0
    %2694 = vdwg.mxu0
    %v2695 = vadd.f32 %v2397, %v2682
    %v2696 = vadd.f32 %v2398, %v2687
    %v2697 = vadd.f32 %v2399, %v2692
    %2698 = vst.msk [vmem:[#allocation2] sm:$0xff] %vm205, %v2695
    %2699 = vst.msk [vmem:[#allocation2 + $0x8] sm:$0xff] %vm205, %v2696
    %2700 = vst.msk [vmem:[#allocation2 + $0x10] sm:$0xf] %vm212, %v2697
    // Predicated region
    $region74: #{tpu_custom_call.1} parent=1 // pred_check
      _
    $region75: #{tpu_custom_call.1} parent=1 // pred_check_branch
      %2702 = sbr.rel (0) target = $region77
    $region76: #{tpu_custom_call.1} parent=1 // pred_region
      %s2704 = ssub.s32 384, 384
      %2705 = vsyncadd [#allocation3], %s2704
      %s2706 = sshll.u32 [#allocation2], 4
      %s2707 = int_to_ptr.vmem [resolvable:$true] %s2706
      %2712 = dma.vmem_to_hbm [thread:$0]  %s2707, 384, %s18, [#allocation3], 128, 128, 8
    $region77: #{tpu_custom_call.1} parent=1 // pred_fallthru
      _
    // Predicated region
    $region78: #{tpu_custom_call.1} parent=1 // pred_check
      _
    $region79: #{tpu_custom_call.1} parent=1 // pred_check_branch
      %2714 = sbr.rel (0) target = $region81
    $region80: #{tpu_custom_call.1} parent=1 // pred_region
      %2715 = dma.done [#allocation3], 384
    $region81: #{tpu_custom_call.1} parent=1 // pred_fallthru
      _
    %2716 = vsyncpa [#allocation3], 1

</llo_original>
